<compile_context>
chip_gen: v5e
topology: v5e:2x2
jax: 0.10.0
libtpu: 0.0.40
codegen_flags: <defaults>
</compile_context>

<pallas_src>
import functools

import jax
import jax.numpy as jnp
from jax.experimental import pallas as pl
from jax.experimental.pallas import tpu as pltpu

LN_EPS = 1e-5                    # PyTorch TransformerEncoderLayer default layer_norm_eps
MATMUL_DTYPE = jnp.bfloat16      # MXU operand dtype; accumulation is always f32
NEG_INF = -1e30                  # finite key-padding bias (uniform softmax instead of
                                 # NaN in the degenerate all-padding-row case)
_PAD_MULTIPLE = 128              # lane padding granularity (use 256 on v6e/v7x at will)
_VMEM_FIT_BUDGET = 40 * 1024 * 1024   # per-step estimate target (safe inside v7x 64 MiB)


def _round_up(v, m):
    return ((v + m - 1) // m) * m


def _layer_norm(x, gamma, beta, d_real):
    """LayerNorm over a zero-padded last dim, normalizing by the REAL width d_real.

    E[x^2] - E[x]^2 form: zero-padded lanes contribute nothing, so no mask is needed;
    gamma/beta are zero on padded lanes, so padded lanes stay exactly zero.
    """
    inv_d = 1.0 / float(d_real)
    mu = jnp.sum(x, axis=-1, keepdims=True) * inv_d
    var = jnp.maximum(jnp.sum(x * x, axis=-1, keepdims=True) * inv_d - mu * mu, 0.0)
    return (x - mu) * jax.lax.rsqrt(var + LN_EPS) * gamma + beta


def sasrec_encoder_kernel(num_heads, num_layers, d_real,
                          x_ref, bias_ref,
                          wqkv_ref, bqkv_ref, wo_ref, bo_ref,
                          w1_ref, b1_ref, w2_ref, b2_ref, ln_ref,
                          o_ref):
    """Full num_layers-deep post-norm TransformerEncoder for one batch block.

    x_ref:    (Bblk, S, Dp)   activations (zero-padded to Dp lanes)
    bias_ref: (Bblk, 1, S)    additive key-padding bias (0 or NEG_INF)
    weights (layer-stacked slabs, resident in VMEM for the whole kernel):
        wqkv (L, Dp, 3*H*hdp)  bqkv (L, 1, 3*H*hdp)   [1/sqrt(hd) folded into Q part]
        wo   (L, H*hdp, Dp)    bo   (L, 1, Dp)
        w1   (L, Dp, Fp)       b1   (L, 1, Fp)
        w2   (L, Fp, Dp)       b2   (L, 1, Dp)
        ln   (L, 4, Dp)        rows: g1, be1, g2, be2
    """
    Bblk, S, Dp = x_ref.shape
    H = num_heads
    A = wqkv_ref.shape[-1] // 3            # H * hdp (padded attention inner width)
    hdp = A // H
    M = Bblk * S
    cdt = wqkv_ref.dtype                   # MXU operand dtype (bf16)

    # Fold batch into the matmul row dimension (cheap: minor dim unchanged).
    x = x_ref[...].reshape(M, Dp).astype(jnp.float32)          # [M, Dp] f32

    # Hoisted key-padding bias: materialize ONCE, reused (shape-exact) by every add.
    kb = jnp.broadcast_to(bias_ref[...], (Bblk, S, S))          # [Bblk, S, S] f32

    for l in range(num_layers):                                 # static, fully unrolled
        ln = ln_ref[l]                                          # [4, Dp] f32

        # ---- fused QKV projection: one [M, 3*H*hdp] MXU matmul (f32 accum) ----
        qkv = (jnp.dot(x.astype(cdt), wqkv_ref[l],
                       preferred_element_type=jnp.float32)
               + bqkv_ref[l]).astype(cdt)                       # [M, 3A] bf16

        # ---- attention: 128-lane-aligned per-head slabs, single-batch-dim einsums ----
        heads = []
        for h in range(H):                                      # static, tiny head count
            qh = qkv[:, h * hdp:(h + 1) * hdp].reshape(Bblk, S, hdp)
            kh = qkv[:, (H + h) * hdp:(H + h + 1) * hdp].reshape(Bblk, S, hdp)
            vh = qkv[:, (2 * H + h) * hdp:(2 * H + h + 1) * hdp].reshape(Bblk, S, hdp)

            s = jnp.einsum('bqd,bkd->bqk', qh, kh,
                           preferred_element_type=jnp.float32) + kb
            s = s - jnp.max(s, axis=-1, keepdims=True)
            p = jnp.exp(s)
            p = p * pl.reciprocal(jnp.sum(p, axis=-1, keepdims=True), approx=True)

            ho = jnp.einsum('bqk,bkd->bqd', p.astype(cdt), vh,
                            preferred_element_type=jnp.float32)   # [Bblk, S, hdp]
            heads.append(ho.reshape(M, hdp).astype(cdt))

        ho_cat = heads[0] if H == 1 else jnp.concatenate(heads, axis=-1)  # [M, A] bf16

        # ---- single output projection over all heads (K = H*hdp, lane-aligned) ----
        attn = jnp.dot(ho_cat, wo_ref[l],
                       preferred_element_type=jnp.float32) + bo_ref[l]    # [M, Dp] f32

        # ---- residual + LayerNorm 1 (post-norm) ----
        x = _layer_norm(x + attn, ln[0:1], ln[1:2], d_real)

        # ---- feed-forward: linear -> ReLU (kept bf16) -> linear ----
        h1 = jnp.maximum(
            jnp.dot(x.astype(cdt), w1_ref[l],
                    preferred_element_type=jnp.float32) + b1_ref[l], 0.0).astype(cdt)
        ff = jnp.dot(h1, w2_ref[l], preferred_element_type=jnp.float32) + b2_ref[l]

        # ---- residual + LayerNorm 2 ----
        x = _layer_norm(x + ff, ln[2:3], ln[3:4], d_real)

    o_ref[...] = x.reshape(Bblk, S, Dp).astype(o_ref.dtype)     # lane-dense store


def run_encoder(x, kbias, w, num_heads, num_layers, d_real,
                num_batch_blocks, vmem_limit_bytes, single_buffer_weights):
    B, S, Dp = x.shape
    assert B % num_batch_blocks == 0
    Bblk = B // num_batch_blocks

    weights = [w["wqkv"], w["bqkv"], w["wo"], w["bo"],
               w["w1"], w["b1"], w["w2"], w["b2"], w["ln"]]

    def const_spec(arr):
        nd = arr.ndim
        idx = lambda b, _nd=nd: (0,) * _nd
        if single_buffer_weights and hasattr(pl, "Buffered"):
            # Constant index_map -> one buffer is enough; halves weight-slab VMEM.
            return pl.BlockSpec(arr.shape, idx, pipeline_mode=pl.Buffered(1))
        return pl.BlockSpec(arr.shape, idx)

    in_specs = ([pl.BlockSpec((Bblk, S, Dp), lambda b: (b, 0, 0)),   # activations
                 pl.BlockSpec((Bblk, 1, S), lambda b: (b, 0, 0))]    # key-padding bias
                + [const_spec(a) for a in weights])

    kernel = functools.partial(sasrec_encoder_kernel, num_heads, num_layers, d_real)
    return pl.pallas_call(
        kernel,
        out_shape=jax.ShapeDtypeStruct((B, S, Dp), jnp.float32),
        grid_spec=pltpu.PrefetchScalarGridSpec(
            num_scalar_prefetch=0,
            grid=(num_batch_blocks,),
            in_specs=in_specs,
            out_specs=pl.BlockSpec((Bblk, S, Dp), lambda b: (b, 0, 0)),
        ),
        compiler_params=pltpu.CompilerParams(
            dimension_semantics=("parallel",),
            vmem_limit_bytes=int(vmem_limit_bytes),
        ),
    )(x, kbias, *weights)


def pack_layer_params(layers, num_heads, compute_dtype):
    """Stack per-layer params into few padded slabs; matmul weights in compute_dtype.

    D -> Dp, F -> Fp, head_dim -> hdp (all 128-lane multiples); 1/sqrt(head_dim) is
    folded into the Q columns/bias. All padding is with zeros.
    """
    D = layers[0]["wq"].shape[0]
    F = layers[0]["w1"].shape[1]
    H = num_heads
    assert D % H == 0
    hd = D // H
    Dp = _round_up(D, _PAD_MULTIPLE)
    Fp = _round_up(F, _PAD_MULTIPLE)
    hdp = _round_up(hd, _PAD_MULTIPLE)
    scale = 1.0 / float(hd) ** 0.5

    def pad2(w, r, c):
        return jnp.pad(w, ((0, r - w.shape[0]), (0, c - w.shape[1])))

    def pad_head_cols(w, s=1.0):            # [D, H*hd] -> [Dp, H*hdp]
        w = (w * s).reshape(D, H, hd)
        w = jnp.pad(w, ((0, Dp - D), (0, 0), (0, hdp - hd)))
        return w.reshape(Dp, H * hdp)

    def pad_head_bias(b, s=1.0):            # [1, H*hd] -> [1, H*hdp]
        b = (b * s).reshape(1, H, hd)
        b = jnp.pad(b, ((0, 0), (0, 0), (0, hdp - hd)))
        return b.reshape(1, H * hdp)

    def pad_wo(w):                          # [H*hd, D] -> [H*hdp, Dp]
        w = w.reshape(H, hd, D)
        w = jnp.pad(w, ((0, 0), (0, hdp - hd), (0, Dp - D)))
        return w.reshape(H * hdp, Dp)

    packed = {
        "wqkv": jnp.stack([jnp.concatenate([pad_head_cols(p["wq"], scale),
                                            pad_head_cols(p["wk"]),
                                            pad_head_cols(p["wv"])], axis=1)
                           for p in layers]).astype(compute_dtype),
        "bqkv": jnp.stack([jnp.concatenate([pad_head_bias(p["bq"], scale),
                                            pad_head_bias(p["bk"]),
                                            pad_head_bias(p["bv"])], axis=1)
                           for p in layers]).astype(jnp.float32),
        "wo": jnp.stack([pad_wo(p["wo"]) for p in layers]).astype(compute_dtype),
        "bo": jnp.stack([pad2(p["bo"], 1, Dp) for p in layers]).astype(jnp.float32),
        "w1": jnp.stack([pad2(p["w1"], Dp, Fp) for p in layers]).astype(compute_dtype),
        "b1": jnp.stack([pad2(p["b1"], 1, Fp) for p in layers]).astype(jnp.float32),
        "w2": jnp.stack([pad2(p["w2"], Fp, Dp) for p in layers]).astype(compute_dtype),
        "b2": jnp.stack([pad2(p["b2"], 1, Dp) for p in layers]).astype(jnp.float32),
        "ln": jnp.stack([jnp.stack([jnp.pad(p[k], (0, Dp - D))
                                    for k in ("g1", "be1", "g2", "be2")])
                         for p in layers]).astype(jnp.float32),
    }
    dims = {"D": D, "Dp": Dp, "F": F, "Fp": Fp, "hd": hd, "hdp": hdp, "A": H * hdp}
    return packed, dims


def _vmem_step_bytes(Bblk, S, Dp, Fp, A, weights, weight_buffers):
    """Generous per-grid-step VMEM estimate: slabs + pipelined blocks + intermediates."""
    wbytes = sum(int(a.size) * a.dtype.itemsize for a in weights) * weight_buffers
    act = Bblk * S * Dp * 4 * 2 * 2           # in + out activation blocks, 2 buffers each
    bias = Bblk * S * 4 * 2
    M = Bblk * S
    inter = (M * 3 * A * (4 + 2)              # qkv f32 accumulator + bf16 copy
             + Bblk * S * S * 4 * 3           # bias slab + scores + probs (f32)
             + M * A * 2                      # concatenated head outputs (bf16)
             + M * Fp * (4 + 2)               # FF hidden f32 accumulator + bf16 copy
             + M * Dp * 4 * 4)                # x / attn / ff / LN temporaries (f32)
    return wbytes + act + bias + inter


def _choose_batch_blocks(batch, seq_len, step_bytes_fn):
    """~4 pipelined grid steps per TensorCore, >=512 rows per step, VMEM-bounded."""
    try:
        cores = int(getattr(jax.devices()[0], "num_cores", 1) or 1)
    except Exception:
        cores = 1
    divisors = [d for d in range(1, batch + 1) if batch % d == 0]
    min_bblk = max(1, -(-512 // max(seq_len, 1)))          # ceil(512 / S)
    target = min(batch, max(1, 4 * cores))
    ok = [d for d in divisors if d <= target and batch // d >= min_bblk] or [1]
    pref = [d for d in ok if d % cores == 0] or ok
    blocks = max(pref)
    # Split further (more, smaller steps) until the per-step estimate fits v7x's VMEM.
    for d in divisors:
        if d >= blocks and step_bytes_fn(batch // d) <= _VMEM_FIT_BUDGET:
            return d
    return divisors[-1]


def init_params(key, num_items, embedding_dim, hidden_size, max_seq_len, num_layers):
    keys = jax.random.split(key, 2 + num_layers)
    std = 0.02

    item_emb = std * jax.random.normal(keys[0], (num_items + 1, embedding_dim), jnp.float32)
    item_emb = item_emb.at[0].set(0.0)  # padding_idx=0
    pos_emb = std * jax.random.normal(keys[1], (max_seq_len, embedding_dim), jnp.float32)

    layers = []
    for l in range(num_layers):
        ks = jax.random.split(keys[2 + l], 8)
        D, H = embedding_dim, hidden_size
        layers.append({
            # attention projections, stored as [in, out] so the kernel does x @ W
            "wq": std * jax.random.normal(ks[0], (D, D), jnp.float32),
            "wk": std * jax.random.normal(ks[1], (D, D), jnp.float32),
            "wv": std * jax.random.normal(ks[2], (D, D), jnp.float32),
            "wo": std * jax.random.normal(ks[3], (D, D), jnp.float32),
            "bq": std * jax.random.normal(ks[4], (1, D), jnp.float32),
            "bk": std * jax.random.normal(ks[5], (1, D), jnp.float32),
            "bv": std * jax.random.normal(ks[6], (1, D), jnp.float32),
            "bo": jnp.zeros((1, D), jnp.float32),
            # layer norms (PyTorch defaults: weight=1, bias=0)
            "g1": jnp.ones((D,), jnp.float32), "be1": jnp.zeros((D,), jnp.float32),
            "g2": jnp.ones((D,), jnp.float32), "be2": jnp.zeros((D,), jnp.float32),
            # feed-forward
            "w1": std * jax.random.normal(ks[7], (D, H), jnp.float32),
            "b1": jnp.zeros((1, H), jnp.float32),
            "w2": std * jax.random.normal(jax.random.fold_in(ks[7], 1), (H, D), jnp.float32),
            "b2": jnp.zeros((1, D), jnp.float32),
        })
    return {"item_emb": item_emb, "pos_emb": pos_emb, "layers": layers}


def sasrec_forward(input_seq, params, num_heads, num_layers, num_batch_blocks=None):
    """input_seq: [B, S] int32 item ids (0 = padding). Returns [B, S, D] float32."""
    B, S = input_seq.shape
    D = params["item_emb"].shape[1]

    # Embedding lookups (glue: plain JAX gather outside the kernel).
    x = params["item_emb"][input_seq] + params["pos_emb"][jnp.arange(S)][None, :, :]
    x = x.astype(jnp.float32)
    # src_key_padding_mask -> additive attention bias over keys
    kbias = jnp.where(input_seq == 0, NEG_INF, 0.0).astype(jnp.float32)[:, None, :]

    packed, dims = pack_layer_params(params["layers"], num_heads, MATMUL_DTYPE)
    Dp, Fp, A = dims["Dp"], dims["Fp"], dims["A"]
    x = jnp.pad(x, ((0, 0), (0, 0), (0, Dp - D)))        # lane-dense activations

    weights = [packed[k] for k in ("wqkv", "bqkv", "wo", "bo",
                                   "w1", "b1", "w2", "b2", "ln")]
    step_bytes = lambda bblk: _vmem_step_bytes(bblk, S, Dp, Fp, A, weights, 1)
    if num_batch_blocks is None:
        num_batch_blocks = _choose_batch_blocks(B, S, step_bytes)
    est = _vmem_step_bytes(B // num_batch_blocks, S, Dp, Fp, A, weights, 2)
    vmem_limit = max(32 << 20, min(int(est * 1.3), 64 << 20))

    def call(single_buffer):
        out = run_encoder(x, kbias, packed, num_heads, num_layers, D,
                          num_batch_blocks, vmem_limit, single_buffer)
        return jax.block_until_ready(out)

    try:
        out = call(True)
    except Exception:   # pl.Buffered(1) weight specs unsupported on this Pallas version
        out = call(False)
    return out[:, :, :D]


def _layer_norm_ref(x, gamma, beta):
    mu = jnp.mean(x, axis=-1, keepdims=True)
    var = jnp.mean((x - mu) ** 2, axis=-1, keepdims=True)
    return (x - mu) * jax.lax.rsqrt(var + LN_EPS) * gamma + beta


def sasrec_reference(input_seq, params, num_heads):
    """Pure-JAX float32 reference mirroring the PyTorch forward pass."""
    B, S = input_seq.shape
    D = params["item_emb"].shape[1]
    H, hd = num_heads, D // num_heads
    x = params["item_emb"][input_seq] + params["pos_emb"][jnp.arange(S)][None, :, :]
    bias = jnp.where(input_seq == 0, NEG_INF, 0.0)[:, None, None, :]          # [B,1,1,S]
    for p in params["layers"]:
        q = (x @ p["wq"] + p["bq"]).reshape(B, S, H, hd)
        k = (x @ p["wk"] + p["bk"]).reshape(B, S, H, hd)
        v = (x @ p["wv"] + p["bv"]).reshape(B, S, H, hd)
        s = jnp.einsum('bqhd,bkhd->bhqk', q, k) / jnp.sqrt(float(hd)) + bias
        a = jax.nn.softmax(s, axis=-1)
        o = jnp.einsum('bhqk,bkhd->bqhd', a, v).reshape(B, S, D) @ p["wo"] + p["bo"]
        x = _layer_norm_ref(x + o, p["g1"], p["be1"])
        h1 = jax.nn.relu(x @ p["w1"] + p["b1"])
        ff = h1 @ p["w2"] + p["b2"]
        x = _layer_norm_ref(x + ff, p["g2"], p["be2"])
    return x


if __name__ == "__main__":
    num_items = 50
    embedding_dim = 32
    hidden_size = 32
    max_seq_len = 16
    num_heads = 2
    num_layers = 2

    B, S = 2, 8
    key = jax.random.PRNGKey(0)
    pkey, dkey = jax.random.split(key)

    params = init_params(pkey, num_items, embedding_dim, hidden_size, max_seq_len, num_layers)

    seq = jax.random.randint(dkey, (B, S), 1, num_items + 1, dtype=jnp.int32)
    # left-pad with zeros (padding items), keeping at least one real item per row
    seq = seq.at[0, :3].set(0)
    seq = seq.at[1, :1].set(0)

    out = jax.block_until_ready(sasrec_forward(seq, params, num_heads, num_layers))
    ref = jax.block_until_ready(sasrec_reference(seq, params, num_heads))

    assert out.shape == (B, S, embedding_dim)
    assert bool(jnp.all(jnp.isfinite(out)))
    # bf16 MXU operands + approx reciprocal => loose tolerance vs. f32 reference
    assert bool(jnp.allclose(out, ref, rtol=5e-2, atol=5e-2)), \
        float(jnp.max(jnp.abs(out - ref)))
    print("KERNEL_OK")
</pallas_src>

<mosaic_0001>
module attributes {stable_mosaic.version = 11 : i64} {
  func.func @sasrec_encoder_kernel(%arg0: i32, %arg1: memref<2x8x128xf32, #tpu.memory_space<vmem>>, %arg2: memref<2x1x8xf32, #tpu.memory_space<vmem>>, %arg3: memref<2x128x768xbf16, #tpu.memory_space<vmem>>, %arg4: memref<2x1x768xf32, #tpu.memory_space<vmem>>, %arg5: memref<2x256x128xbf16, #tpu.memory_space<vmem>>, %arg6: memref<2x1x128xf32, #tpu.memory_space<vmem>>, %arg7: memref<2x128x128xbf16, #tpu.memory_space<vmem>>, %arg8: memref<2x1x128xf32, #tpu.memory_space<vmem>>, %arg9: memref<2x128x128xbf16, #tpu.memory_space<vmem>>, %arg10: memref<2x1x128xf32, #tpu.memory_space<vmem>>, %arg11: memref<2x4x128xf32, #tpu.memory_space<vmem>>, %arg12: memref<2x8x128xf32, #tpu.memory_space<vmem>>) attributes {dimension_semantics = [#tpu.dimension_semantics<parallel>], iteration_bounds = array<i64: 1>, scalar_prefetch = 0 : i64, scratch_operands = 0 : i64, tpu.core_type = #tpu.core_type<tc>, window_params = [{transform_indices = @transform_0, window_bounds = array<i64: 2, 8, 128>}, {transform_indices = @transform_1, window_bounds = array<i64: 2, 1, 8>}, {pipeline_mode = #tpu.pipeline_mode<synchronous>, transform_indices = @transform_2, window_bounds = array<i64: 2, 128, 768>}, {pipeline_mode = #tpu.pipeline_mode<synchronous>, transform_indices = @transform_3, window_bounds = array<i64: 2, 1, 768>}, {pipeline_mode = #tpu.pipeline_mode<synchronous>, transform_indices = @transform_4, window_bounds = array<i64: 2, 256, 128>}, {pipeline_mode = #tpu.pipeline_mode<synchronous>, transform_indices = @transform_5, window_bounds = array<i64: 2, 1, 128>}, {pipeline_mode = #tpu.pipeline_mode<synchronous>, transform_indices = @transform_6, window_bounds = array<i64: 2, 128, 128>}, {pipeline_mode = #tpu.pipeline_mode<synchronous>, transform_indices = @transform_7, window_bounds = array<i64: 2, 1, 128>}, {pipeline_mode = #tpu.pipeline_mode<synchronous>, transform_indices = @transform_8, window_bounds = array<i64: 2, 128, 128>}, {pipeline_mode = #tpu.pipeline_mode<synchronous>, transform_indices = @transform_9, window_bounds = array<i64: 2, 1, 128>}, {pipeline_mode = #tpu.pipeline_mode<synchronous>, transform_indices = @transform_10, window_bounds = array<i64: 2, 4, 128>}, {transform_indices = @transform_11, window_bounds = array<i64: 2, 8, 128>}]} {
    %c0 = arith.constant 0 : index
    %c0_0 = arith.constant 0 : index
    %c0_1 = arith.constant 0 : index
    %0 = vector.load %arg1[%c0, %c0_0, %c0_1] : memref<2x8x128xf32, #tpu.memory_space<vmem>>, vector<2x8x128xf32>
    %1 = vector.shape_cast %0 : vector<2x8x128xf32> to vector<16x128xf32>
    %c0_2 = arith.constant 0 : index
    %c0_3 = arith.constant 0 : index
    %c0_4 = arith.constant 0 : index
    %2 = vector.load %arg2[%c0_2, %c0_3, %c0_4] : memref<2x1x8xf32, #tpu.memory_space<vmem>>, vector<2x1x8xf32>
    %3 = vector.shape_cast %2 : vector<2x1x8xf32> to vector<2x1x8xf32>
    %4 = vector.broadcast %3 : vector<2x1x8xf32> to vector<2x8x8xf32>
    %c0_5 = arith.constant 0 : index
    %c0_6 = arith.constant 0 : index
    %c0_7 = arith.constant 0 : index
    %5 = vector.load %arg11[%c0_5, %c0_6, %c0_7] : memref<2x4x128xf32, #tpu.memory_space<vmem>>, vector<1x4x128xf32>
    %6 = vector.shape_cast %5 : vector<1x4x128xf32> to vector<4x128xf32>
    %7 = arith.truncf %1 : vector<16x128xf32> to vector<16x128xbf16>
    %c0_8 = arith.constant 0 : index
    %c0_9 = arith.constant 0 : index
    %c0_10 = arith.constant 0 : index
    %8 = vector.load %arg3[%c0_8, %c0_9, %c0_10] : memref<2x128x768xbf16, #tpu.memory_space<vmem>>, vector<1x128x768xbf16>
    %9 = vector.shape_cast %8 : vector<1x128x768xbf16> to vector<128x768xbf16>
    %cst = arith.constant dense<0.000000e+00> : vector<16x768xf32>
    %10 = tpu.matmul %7, %9, %cst {dimension_numbers = #tpu.dot_dimension_numbers<[1], [0], [0], [1], [0, 0, 1, 1], [], []>} : vector<16x128xbf16>, vector<128x768xbf16>, vector<16x768xf32> -> vector<16x768xf32>
    %c0_11 = arith.constant 0 : index
    %c0_12 = arith.constant 0 : index
    %c0_13 = arith.constant 0 : index
    %11 = vector.load %arg4[%c0_11, %c0_12, %c0_13] : memref<2x1x768xf32, #tpu.memory_space<vmem>>, vector<1x1x768xf32>
    %12 = vector.shape_cast %11 : vector<1x1x768xf32> to vector<1x768xf32>
    %13 = vector.broadcast %12 : vector<1x768xf32> to vector<16x768xf32>
    %14 = arith.addf %10, %13 : vector<16x768xf32>
    %15 = arith.truncf %14 : vector<16x768xf32> to vector<16x768xbf16>
    %16 = vector.extract_strided_slice %15 {offsets = [0, 0], sizes = [16, 128], strides = [1, 1]} : vector<16x768xbf16> to vector<16x128xbf16>
    %17 = vector.shape_cast %16 : vector<16x128xbf16> to vector<2x8x128xbf16>
    %18 = vector.extract_strided_slice %15 {offsets = [0, 256], sizes = [16, 128], strides = [1, 1]} : vector<16x768xbf16> to vector<16x128xbf16>
    %19 = vector.shape_cast %18 : vector<16x128xbf16> to vector<2x8x128xbf16>
    %20 = vector.extract_strided_slice %15 {offsets = [0, 512], sizes = [16, 128], strides = [1, 1]} : vector<16x768xbf16> to vector<16x128xbf16>
    %21 = vector.shape_cast %20 : vector<16x128xbf16> to vector<2x8x128xbf16>
    "tpu.trace_start"() <{level = 10 : i32, message = "bqd,bkd->bqk"}> : () -> ()
    %cst_14 = arith.constant dense<0.000000e+00> : vector<2x8x8xf32>
    %22 = tpu.matmul %17, %19, %cst_14 {dimension_numbers = #tpu.dot_dimension_numbers<[2], [2], [1], [1], [0, 0, 0, 1, 1, 1], [0], [0]>} : vector<2x8x128xbf16>, vector<2x8x128xbf16>, vector<2x8x8xf32> -> vector<2x8x8xf32>
    "tpu.trace_stop"() : () -> ()
    %23 = arith.addf %22, %4 : vector<2x8x8xf32>
    %cst_15 = arith.constant dense<0xFF800000> : vector<2x8xf32>
    %24 = vector.multi_reduction <maximumf>, %23, %cst_15 [2] : vector<2x8x8xf32> to vector<2x8xf32>
    %25 = vector.shape_cast %24 : vector<2x8xf32> to vector<2x8x1xf32>
    %26 = vector.broadcast %25 : vector<2x8x1xf32> to vector<2x8x8xf32>
    %27 = arith.subf %23, %26 : vector<2x8x8xf32>
    %28 = math.exp %27 : vector<2x8x8xf32>
    %cst_16 = arith.constant dense<0.000000e+00> : vector<2x8xf32>
    %29 = vector.multi_reduction <add>, %28, %cst_16 [2] : vector<2x8x8xf32> to vector<2x8xf32>
    %30 = vector.shape_cast %29 : vector<2x8xf32> to vector<2x8x1xf32>
    %31 = tpu.reciprocal %30 {approx = true} : vector<2x8x1xf32> -> vector<2x8x1xf32>
    %32 = vector.broadcast %31 : vector<2x8x1xf32> to vector<2x8x8xf32>
    %33 = arith.mulf %28, %32 : vector<2x8x8xf32>
    %34 = arith.truncf %33 : vector<2x8x8xf32> to vector<2x8x8xbf16>
    "tpu.trace_start"() <{level = 10 : i32, message = "bqk,bkd->bqd"}> : () -> ()
    %cst_17 = arith.constant dense<0.000000e+00> : vector<2x8x128xf32>
    %35 = tpu.matmul %34, %21, %cst_17 {dimension_numbers = #tpu.dot_dimension_numbers<[2], [1], [1], [2], [0, 0, 0, 1, 1, 2], [0], [0]>} : vector<2x8x8xbf16>, vector<2x8x128xbf16>, vector<2x8x128xf32> -> vector<2x8x128xf32>
    "tpu.trace_stop"() : () -> ()
    %36 = vector.shape_cast %35 : vector<2x8x128xf32> to vector<16x128xf32>
    %37 = arith.truncf %36 : vector<16x128xf32> to vector<16x128xbf16>
    %38 = vector.extract_strided_slice %15 {offsets = [0, 128], sizes = [16, 128], strides = [1, 1]} : vector<16x768xbf16> to vector<16x128xbf16>
    %39 = vector.shape_cast %38 : vector<16x128xbf16> to vector<2x8x128xbf16>
    %40 = vector.extract_strided_slice %15 {offsets = [0, 384], sizes = [16, 128], strides = [1, 1]} : vector<16x768xbf16> to vector<16x128xbf16>
    %41 = vector.shape_cast %40 : vector<16x128xbf16> to vector<2x8x128xbf16>
    %42 = vector.extract_strided_slice %15 {offsets = [0, 640], sizes = [16, 128], strides = [1, 1]} : vector<16x768xbf16> to vector<16x128xbf16>
    %43 = vector.shape_cast %42 : vector<16x128xbf16> to vector<2x8x128xbf16>
    "tpu.trace_start"() <{level = 10 : i32, message = "bqd,bkd->bqk"}> : () -> ()
    %cst_18 = arith.constant dense<0.000000e+00> : vector<2x8x8xf32>
    %44 = tpu.matmul %39, %41, %cst_18 {dimension_numbers = #tpu.dot_dimension_numbers<[2], [2], [1], [1], [0, 0, 0, 1, 1, 1], [0], [0]>} : vector<2x8x128xbf16>, vector<2x8x128xbf16>, vector<2x8x8xf32> -> vector<2x8x8xf32>
    "tpu.trace_stop"() : () -> ()
    %45 = arith.addf %44, %4 : vector<2x8x8xf32>
    %cst_19 = arith.constant dense<0xFF800000> : vector<2x8xf32>
    %46 = vector.multi_reduction <maximumf>, %45, %cst_19 [2] : vector<2x8x8xf32> to vector<2x8xf32>
    %47 = vector.shape_cast %46 : vector<2x8xf32> to vector<2x8x1xf32>
    %48 = vector.broadcast %47 : vector<2x8x1xf32> to vector<2x8x8xf32>
    %49 = arith.subf %45, %48 : vector<2x8x8xf32>
    %50 = math.exp %49 : vector<2x8x8xf32>
    %cst_20 = arith.constant dense<0.000000e+00> : vector<2x8xf32>
    %51 = vector.multi_reduction <add>, %50, %cst_20 [2] : vector<2x8x8xf32> to vector<2x8xf32>
    %52 = vector.shape_cast %51 : vector<2x8xf32> to vector<2x8x1xf32>
    %53 = tpu.reciprocal %52 {approx = true} : vector<2x8x1xf32> -> vector<2x8x1xf32>
    %54 = vector.broadcast %53 : vector<2x8x1xf32> to vector<2x8x8xf32>
    %55 = arith.mulf %50, %54 : vector<2x8x8xf32>
    %56 = arith.truncf %55 : vector<2x8x8xf32> to vector<2x8x8xbf16>
    "tpu.trace_start"() <{level = 10 : i32, message = "bqk,bkd->bqd"}> : () -> ()
    %cst_21 = arith.constant dense<0.000000e+00> : vector<2x8x128xf32>
    %57 = tpu.matmul %56, %43, %cst_21 {dimension_numbers = #tpu.dot_dimension_numbers<[2], [1], [1], [2], [0, 0, 0, 1, 1, 2], [0], [0]>} : vector<2x8x8xbf16>, vector<2x8x128xbf16>, vector<2x8x128xf32> -> vector<2x8x128xf32>
    "tpu.trace_stop"() : () -> ()
    %58 = vector.shape_cast %57 : vector<2x8x128xf32> to vector<16x128xf32>
    %59 = arith.truncf %58 : vector<16x128xf32> to vector<16x128xbf16>
    %60 = tpu.concatenate %37, %59 in 1 : vector<16x128xbf16>, vector<16x128xbf16> -> vector<16x256xbf16>
    %c0_22 = arith.constant 0 : index
    %c0_23 = arith.constant 0 : index
    %c0_24 = arith.constant 0 : index
    %61 = vector.load %arg5[%c0_22, %c0_23, %c0_24] : memref<2x256x128xbf16, #tpu.memory_space<vmem>>, vector<1x256x128xbf16>
    %62 = vector.shape_cast %61 : vector<1x256x128xbf16> to vector<256x128xbf16>
    %cst_25 = arith.constant dense<0.000000e+00> : vector<16x128xf32>
    %63 = tpu.matmul %60, %62, %cst_25 {dimension_numbers = #tpu.dot_dimension_numbers<[1], [0], [0], [1], [0, 0, 1, 1], [], []>} : vector<16x256xbf16>, vector<256x128xbf16>, vector<16x128xf32> -> vector<16x128xf32>
    %c0_26 = arith.constant 0 : index
    %c0_27 = arith.constant 0 : index
    %c0_28 = arith.constant 0 : index
    %64 = vector.load %arg6[%c0_26, %c0_27, %c0_28] : memref<2x1x128xf32, #tpu.memory_space<vmem>>, vector<1x1x128xf32>
    %65 = vector.shape_cast %64 : vector<1x1x128xf32> to vector<1x128xf32>
    %66 = vector.broadcast %65 : vector<1x128xf32> to vector<16x128xf32>
    %67 = arith.addf %63, %66 : vector<16x128xf32>
    %68 = arith.addf %1, %67 : vector<16x128xf32>
    %69 = vector.extract_strided_slice %6 {offsets = [0, 0], sizes = [1, 128], strides = [1, 1]} : vector<4x128xf32> to vector<1x128xf32>
    %70 = vector.extract_strided_slice %6 {offsets = [1, 0], sizes = [1, 128], strides = [1, 1]} : vector<4x128xf32> to vector<1x128xf32>
    %cst_29 = arith.constant dense<0.000000e+00> : vector<16xf32>
    %71 = vector.multi_reduction <add>, %68, %cst_29 [1] : vector<16x128xf32> to vector<16xf32>
    %72 = vector.shape_cast %71 : vector<16xf32> to vector<16x1xf32>
    %cst_30 = arith.constant 3.125000e-02 : f32
    %73 = vector.broadcast %cst_30 : f32 to vector<16x1xf32>
    %74 = arith.mulf %72, %73 : vector<16x1xf32>
    %75 = arith.mulf %68, %68 : vector<16x128xf32>
    %cst_31 = arith.constant dense<0.000000e+00> : vector<16xf32>
    %76 = vector.multi_reduction <add>, %75, %cst_31 [1] : vector<16x128xf32> to vector<16xf32>
    %77 = vector.shape_cast %76 : vector<16xf32> to vector<16x1xf32>
    %cst_32 = arith.constant 3.125000e-02 : f32
    %78 = vector.broadcast %cst_32 : f32 to vector<16x1xf32>
    %79 = arith.mulf %77, %78 : vector<16x1xf32>
    %80 = arith.mulf %74, %74 : vector<16x1xf32>
    %81 = arith.subf %79, %80 : vector<16x1xf32>
    %cst_33 = arith.constant 0.000000e+00 : f32
    %82 = vector.broadcast %cst_33 : f32 to vector<16x1xf32>
    %83 = arith.maximumf %81, %82 : vector<16x1xf32>
    %84 = vector.broadcast %74 : vector<16x1xf32> to vector<16x128xf32>
    %85 = arith.subf %68, %84 : vector<16x128xf32>
    %cst_34 = arith.constant 9.99999974E-6 : f32
    %86 = vector.broadcast %cst_34 : f32 to vector<16x1xf32>
    %87 = arith.addf %83, %86 : vector<16x1xf32>
    %88 = math.rsqrt %87 : vector<16x1xf32>
    %89 = vector.broadcast %88 : vector<16x1xf32> to vector<16x128xf32>
    %90 = arith.mulf %85, %89 : vector<16x128xf32>
    %91 = vector.broadcast %69 : vector<1x128xf32> to vector<16x128xf32>
    %92 = arith.mulf %90, %91 : vector<16x128xf32>
    %93 = vector.broadcast %70 : vector<1x128xf32> to vector<16x128xf32>
    %94 = arith.addf %92, %93 : vector<16x128xf32>
    %95 = arith.truncf %94 : vector<16x128xf32> to vector<16x128xbf16>
    %c0_35 = arith.constant 0 : index
    %c0_36 = arith.constant 0 : index
    %c0_37 = arith.constant 0 : index
    %96 = vector.load %arg7[%c0_35, %c0_36, %c0_37] : memref<2x128x128xbf16, #tpu.memory_space<vmem>>, vector<1x128x128xbf16>
    %97 = vector.shape_cast %96 : vector<1x128x128xbf16> to vector<128x128xbf16>
    %cst_38 = arith.constant dense<0.000000e+00> : vector<16x128xf32>
    %98 = tpu.matmul %95, %97, %cst_38 {dimension_numbers = #tpu.dot_dimension_numbers<[1], [0], [0], [1], [0, 0, 1, 1], [], []>} : vector<16x128xbf16>, vector<128x128xbf16>, vector<16x128xf32> -> vector<16x128xf32>
    %c0_39 = arith.constant 0 : index
    %c0_40 = arith.constant 0 : index
    %c0_41 = arith.constant 0 : index
    %99 = vector.load %arg8[%c0_39, %c0_40, %c0_41] : memref<2x1x128xf32, #tpu.memory_space<vmem>>, vector<1x1x128xf32>
    %100 = vector.shape_cast %99 : vector<1x1x128xf32> to vector<1x128xf32>
    %101 = vector.broadcast %100 : vector<1x128xf32> to vector<16x128xf32>
    %102 = arith.addf %98, %101 : vector<16x128xf32>
    %cst_42 = arith.constant 0.000000e+00 : f32
    %103 = vector.broadcast %cst_42 : f32 to vector<16x128xf32>
    %104 = arith.maximumf %102, %103 : vector<16x128xf32>
    %105 = arith.truncf %104 : vector<16x128xf32> to vector<16x128xbf16>
    %c0_43 = arith.constant 0 : index
    %c0_44 = arith.constant 0 : index
    %c0_45 = arith.constant 0 : index
    %106 = vector.load %arg9[%c0_43, %c0_44, %c0_45] : memref<2x128x128xbf16, #tpu.memory_space<vmem>>, vector<1x128x128xbf16>
    %107 = vector.shape_cast %106 : vector<1x128x128xbf16> to vector<128x128xbf16>
    %cst_46 = arith.constant dense<0.000000e+00> : vector<16x128xf32>
    %108 = tpu.matmul %105, %107, %cst_46 {dimension_numbers = #tpu.dot_dimension_numbers<[1], [0], [0], [1], [0, 0, 1, 1], [], []>} : vector<16x128xbf16>, vector<128x128xbf16>, vector<16x128xf32> -> vector<16x128xf32>
    %c0_47 = arith.constant 0 : index
    %c0_48 = arith.constant 0 : index
    %c0_49 = arith.constant 0 : index
    %109 = vector.load %arg10[%c0_47, %c0_48, %c0_49] : memref<2x1x128xf32, #tpu.memory_space<vmem>>, vector<1x1x128xf32>
    %110 = vector.shape_cast %109 : vector<1x1x128xf32> to vector<1x128xf32>
    %111 = vector.broadcast %110 : vector<1x128xf32> to vector<16x128xf32>
    %112 = arith.addf %108, %111 : vector<16x128xf32>
    %113 = arith.addf %94, %112 : vector<16x128xf32>
    %114 = vector.extract_strided_slice %6 {offsets = [2, 0], sizes = [1, 128], strides = [1, 1]} : vector<4x128xf32> to vector<1x128xf32>
    %115 = vector.extract_strided_slice %6 {offsets = [3, 0], sizes = [1, 128], strides = [1, 1]} : vector<4x128xf32> to vector<1x128xf32>
    %cst_50 = arith.constant dense<0.000000e+00> : vector<16xf32>
    %116 = vector.multi_reduction <add>, %113, %cst_50 [1] : vector<16x128xf32> to vector<16xf32>
    %117 = vector.shape_cast %116 : vector<16xf32> to vector<16x1xf32>
    %cst_51 = arith.constant 3.125000e-02 : f32
    %118 = vector.broadcast %cst_51 : f32 to vector<16x1xf32>
    %119 = arith.mulf %117, %118 : vector<16x1xf32>
    %120 = arith.mulf %113, %113 : vector<16x128xf32>
    %cst_52 = arith.constant dense<0.000000e+00> : vector<16xf32>
    %121 = vector.multi_reduction <add>, %120, %cst_52 [1] : vector<16x128xf32> to vector<16xf32>
    %122 = vector.shape_cast %121 : vector<16xf32> to vector<16x1xf32>
    %cst_53 = arith.constant 3.125000e-02 : f32
    %123 = vector.broadcast %cst_53 : f32 to vector<16x1xf32>
    %124 = arith.mulf %122, %123 : vector<16x1xf32>
    %125 = arith.mulf %119, %119 : vector<16x1xf32>
    %126 = arith.subf %124, %125 : vector<16x1xf32>
    %cst_54 = arith.constant 0.000000e+00 : f32
    %127 = vector.broadcast %cst_54 : f32 to vector<16x1xf32>
    %128 = arith.maximumf %126, %127 : vector<16x1xf32>
    %129 = vector.broadcast %119 : vector<16x1xf32> to vector<16x128xf32>
    %130 = arith.subf %113, %129 : vector<16x128xf32>
    %cst_55 = arith.constant 9.99999974E-6 : f32
    %131 = vector.broadcast %cst_55 : f32 to vector<16x1xf32>
    %132 = arith.addf %128, %131 : vector<16x1xf32>
    %133 = math.rsqrt %132 : vector<16x1xf32>
    %134 = vector.broadcast %133 : vector<16x1xf32> to vector<16x128xf32>
    %135 = arith.mulf %130, %134 : vector<16x128xf32>
    %136 = vector.broadcast %114 : vector<1x128xf32> to vector<16x128xf32>
    %137 = arith.mulf %135, %136 : vector<16x128xf32>
    %138 = vector.broadcast %115 : vector<1x128xf32> to vector<16x128xf32>
    %139 = arith.addf %137, %138 : vector<16x128xf32>
    %c1 = arith.constant 1 : index
    %c0_56 = arith.constant 0 : index
    %c0_57 = arith.constant 0 : index
    %140 = vector.load %arg11[%c1, %c0_56, %c0_57] : memref<2x4x128xf32, #tpu.memory_space<vmem>>, vector<1x4x128xf32>
    %141 = vector.shape_cast %140 : vector<1x4x128xf32> to vector<4x128xf32>
    %142 = arith.truncf %139 : vector<16x128xf32> to vector<16x128xbf16>
    %c1_58 = arith.constant 1 : index
    %c0_59 = arith.constant 0 : index
    %c0_60 = arith.constant 0 : index
    %143 = vector.load %arg3[%c1_58, %c0_59, %c0_60] : memref<2x128x768xbf16, #tpu.memory_space<vmem>>, vector<1x128x768xbf16>
    %144 = vector.shape_cast %143 : vector<1x128x768xbf16> to vector<128x768xbf16>
    %cst_61 = arith.constant dense<0.000000e+00> : vector<16x768xf32>
    %145 = tpu.matmul %142, %144, %cst_61 {dimension_numbers = #tpu.dot_dimension_numbers<[1], [0], [0], [1], [0, 0, 1, 1], [], []>} : vector<16x128xbf16>, vector<128x768xbf16>, vector<16x768xf32> -> vector<16x768xf32>
    %c1_62 = arith.constant 1 : index
    %c0_63 = arith.constant 0 : index
    %c0_64 = arith.constant 0 : index
    %146 = vector.load %arg4[%c1_62, %c0_63, %c0_64] : memref<2x1x768xf32, #tpu.memory_space<vmem>>, vector<1x1x768xf32>
    %147 = vector.shape_cast %146 : vector<1x1x768xf32> to vector<1x768xf32>
    %148 = vector.broadcast %147 : vector<1x768xf32> to vector<16x768xf32>
    %149 = arith.addf %145, %148 : vector<16x768xf32>
    %150 = arith.truncf %149 : vector<16x768xf32> to vector<16x768xbf16>
    %151 = vector.extract_strided_slice %150 {offsets = [0, 0], sizes = [16, 128], strides = [1, 1]} : vector<16x768xbf16> to vector<16x128xbf16>
    %152 = vector.shape_cast %151 : vector<16x128xbf16> to vector<2x8x128xbf16>
    %153 = vector.extract_strided_slice %150 {offsets = [0, 256], sizes = [16, 128], strides = [1, 1]} : vector<16x768xbf16> to vector<16x128xbf16>
    %154 = vector.shape_cast %153 : vector<16x128xbf16> to vector<2x8x128xbf16>
    %155 = vector.extract_strided_slice %150 {offsets = [0, 512], sizes = [16, 128], strides = [1, 1]} : vector<16x768xbf16> to vector<16x128xbf16>
    %156 = vector.shape_cast %155 : vector<16x128xbf16> to vector<2x8x128xbf16>
    "tpu.trace_start"() <{level = 10 : i32, message = "bqd,bkd->bqk"}> : () -> ()
    %cst_65 = arith.constant dense<0.000000e+00> : vector<2x8x8xf32>
    %157 = tpu.matmul %152, %154, %cst_65 {dimension_numbers = #tpu.dot_dimension_numbers<[2], [2], [1], [1], [0, 0, 0, 1, 1, 1], [0], [0]>} : vector<2x8x128xbf16>, vector<2x8x128xbf16>, vector<2x8x8xf32> -> vector<2x8x8xf32>
    "tpu.trace_stop"() : () -> ()
    %158 = arith.addf %157, %4 : vector<2x8x8xf32>
    %cst_66 = arith.constant dense<0xFF800000> : vector<2x8xf32>
    %159 = vector.multi_reduction <maximumf>, %158, %cst_66 [2] : vector<2x8x8xf32> to vector<2x8xf32>
    %160 = vector.shape_cast %159 : vector<2x8xf32> to vector<2x8x1xf32>
    %161 = vector.broadcast %160 : vector<2x8x1xf32> to vector<2x8x8xf32>
    %162 = arith.subf %158, %161 : vector<2x8x8xf32>
    %163 = math.exp %162 : vector<2x8x8xf32>
    %cst_67 = arith.constant dense<0.000000e+00> : vector<2x8xf32>
    %164 = vector.multi_reduction <add>, %163, %cst_67 [2] : vector<2x8x8xf32> to vector<2x8xf32>
    %165 = vector.shape_cast %164 : vector<2x8xf32> to vector<2x8x1xf32>
    %166 = tpu.reciprocal %165 {approx = true} : vector<2x8x1xf32> -> vector<2x8x1xf32>
    %167 = vector.broadcast %166 : vector<2x8x1xf32> to vector<2x8x8xf32>
    %168 = arith.mulf %163, %167 : vector<2x8x8xf32>
    %169 = arith.truncf %168 : vector<2x8x8xf32> to vector<2x8x8xbf16>
    "tpu.trace_start"() <{level = 10 : i32, message = "bqk,bkd->bqd"}> : () -> ()
    %cst_68 = arith.constant dense<0.000000e+00> : vector<2x8x128xf32>
    %170 = tpu.matmul %169, %156, %cst_68 {dimension_numbers = #tpu.dot_dimension_numbers<[2], [1], [1], [2], [0, 0, 0, 1, 1, 2], [0], [0]>} : vector<2x8x8xbf16>, vector<2x8x128xbf16>, vector<2x8x128xf32> -> vector<2x8x128xf32>
    "tpu.trace_stop"() : () -> ()
    %171 = vector.shape_cast %170 : vector<2x8x128xf32> to vector<16x128xf32>
    %172 = arith.truncf %171 : vector<16x128xf32> to vector<16x128xbf16>
    %173 = vector.extract_strided_slice %150 {offsets = [0, 128], sizes = [16, 128], strides = [1, 1]} : vector<16x768xbf16> to vector<16x128xbf16>
    %174 = vector.shape_cast %173 : vector<16x128xbf16> to vector<2x8x128xbf16>
    %175 = vector.extract_strided_slice %150 {offsets = [0, 384], sizes = [16, 128], strides = [1, 1]} : vector<16x768xbf16> to vector<16x128xbf16>
    %176 = vector.shape_cast %175 : vector<16x128xbf16> to vector<2x8x128xbf16>
    %177 = vector.extract_strided_slice %150 {offsets = [0, 640], sizes = [16, 128], strides = [1, 1]} : vector<16x768xbf16> to vector<16x128xbf16>
    %178 = vector.shape_cast %177 : vector<16x128xbf16> to vector<2x8x128xbf16>
    "tpu.trace_start"() <{level = 10 : i32, message = "bqd,bkd->bqk"}> : () -> ()
    %cst_69 = arith.constant dense<0.000000e+00> : vector<2x8x8xf32>
    %179 = tpu.matmul %174, %176, %cst_69 {dimension_numbers = #tpu.dot_dimension_numbers<[2], [2], [1], [1], [0, 0, 0, 1, 1, 1], [0], [0]>} : vector<2x8x128xbf16>, vector<2x8x128xbf16>, vector<2x8x8xf32> -> vector<2x8x8xf32>
    "tpu.trace_stop"() : () -> ()
    %180 = arith.addf %179, %4 : vector<2x8x8xf32>
    %cst_70 = arith.constant dense<0xFF800000> : vector<2x8xf32>
    %181 = vector.multi_reduction <maximumf>, %180, %cst_70 [2] : vector<2x8x8xf32> to vector<2x8xf32>
    %182 = vector.shape_cast %181 : vector<2x8xf32> to vector<2x8x1xf32>
    %183 = vector.broadcast %182 : vector<2x8x1xf32> to vector<2x8x8xf32>
    %184 = arith.subf %180, %183 : vector<2x8x8xf32>
    %185 = math.exp %184 : vector<2x8x8xf32>
    %cst_71 = arith.constant dense<0.000000e+00> : vector<2x8xf32>
    %186 = vector.multi_reduction <add>, %185, %cst_71 [2] : vector<2x8x8xf32> to vector<2x8xf32>
    %187 = vector.shape_cast %186 : vector<2x8xf32> to vector<2x8x1xf32>
    %188 = tpu.reciprocal %187 {approx = true} : vector<2x8x1xf32> -> vector<2x8x1xf32>
    %189 = vector.broadcast %188 : vector<2x8x1xf32> to vector<2x8x8xf32>
    %190 = arith.mulf %185, %189 : vector<2x8x8xf32>
    %191 = arith.truncf %190 : vector<2x8x8xf32> to vector<2x8x8xbf16>
    "tpu.trace_start"() <{level = 10 : i32, message = "bqk,bkd->bqd"}> : () -> ()
    %cst_72 = arith.constant dense<0.000000e+00> : vector<2x8x128xf32>
    %192 = tpu.matmul %191, %178, %cst_72 {dimension_numbers = #tpu.dot_dimension_numbers<[2], [1], [1], [2], [0, 0, 0, 1, 1, 2], [0], [0]>} : vector<2x8x8xbf16>, vector<2x8x128xbf16>, vector<2x8x128xf32> -> vector<2x8x128xf32>
    "tpu.trace_stop"() : () -> ()
    %193 = vector.shape_cast %192 : vector<2x8x128xf32> to vector<16x128xf32>
    %194 = arith.truncf %193 : vector<16x128xf32> to vector<16x128xbf16>
    %195 = tpu.concatenate %172, %194 in 1 : vector<16x128xbf16>, vector<16x128xbf16> -> vector<16x256xbf16>
    %c1_73 = arith.constant 1 : index
    %c0_74 = arith.constant 0 : index
    %c0_75 = arith.constant 0 : index
    %196 = vector.load %arg5[%c1_73, %c0_74, %c0_75] : memref<2x256x128xbf16, #tpu.memory_space<vmem>>, vector<1x256x128xbf16>
    %197 = vector.shape_cast %196 : vector<1x256x128xbf16> to vector<256x128xbf16>
    %cst_76 = arith.constant dense<0.000000e+00> : vector<16x128xf32>
    %198 = tpu.matmul %195, %197, %cst_76 {dimension_numbers = #tpu.dot_dimension_numbers<[1], [0], [0], [1], [0, 0, 1, 1], [], []>} : vector<16x256xbf16>, vector<256x128xbf16>, vector<16x128xf32> -> vector<16x128xf32>
    %c1_77 = arith.constant 1 : index
    %c0_78 = arith.constant 0 : index
    %c0_79 = arith.constant 0 : index
    %199 = vector.load %arg6[%c1_77, %c0_78, %c0_79] : memref<2x1x128xf32, #tpu.memory_space<vmem>>, vector<1x1x128xf32>
    %200 = vector.shape_cast %199 : vector<1x1x128xf32> to vector<1x128xf32>
    %201 = vector.broadcast %200 : vector<1x128xf32> to vector<16x128xf32>
    %202 = arith.addf %198, %201 : vector<16x128xf32>
    %203 = arith.addf %139, %202 : vector<16x128xf32>
    %204 = vector.extract_strided_slice %141 {offsets = [0, 0], sizes = [1, 128], strides = [1, 1]} : vector<4x128xf32> to vector<1x128xf32>
    %205 = vector.extract_strided_slice %141 {offsets = [1, 0], sizes = [1, 128], strides = [1, 1]} : vector<4x128xf32> to vector<1x128xf32>
    %cst_80 = arith.constant dense<0.000000e+00> : vector<16xf32>
    %206 = vector.multi_reduction <add>, %203, %cst_80 [1] : vector<16x128xf32> to vector<16xf32>
    %207 = vector.shape_cast %206 : vector<16xf32> to vector<16x1xf32>
    %cst_81 = arith.constant 3.125000e-02 : f32
    %208 = vector.broadcast %cst_81 : f32 to vector<16x1xf32>
    %209 = arith.mulf %207, %208 : vector<16x1xf32>
    %210 = arith.mulf %203, %203 : vector<16x128xf32>
    %cst_82 = arith.constant dense<0.000000e+00> : vector<16xf32>
    %211 = vector.multi_reduction <add>, %210, %cst_82 [1] : vector<16x128xf32> to vector<16xf32>
    %212 = vector.shape_cast %211 : vector<16xf32> to vector<16x1xf32>
    %cst_83 = arith.constant 3.125000e-02 : f32
    %213 = vector.broadcast %cst_83 : f32 to vector<16x1xf32>
    %214 = arith.mulf %212, %213 : vector<16x1xf32>
    %215 = arith.mulf %209, %209 : vector<16x1xf32>
    %216 = arith.subf %214, %215 : vector<16x1xf32>
    %cst_84 = arith.constant 0.000000e+00 : f32
    %217 = vector.broadcast %cst_84 : f32 to vector<16x1xf32>
    %218 = arith.maximumf %216, %217 : vector<16x1xf32>
    %219 = vector.broadcast %209 : vector<16x1xf32> to vector<16x128xf32>
    %220 = arith.subf %203, %219 : vector<16x128xf32>
    %cst_85 = arith.constant 9.99999974E-6 : f32
    %221 = vector.broadcast %cst_85 : f32 to vector<16x1xf32>
    %222 = arith.addf %218, %221 : vector<16x1xf32>
    %223 = math.rsqrt %222 : vector<16x1xf32>
    %224 = vector.broadcast %223 : vector<16x1xf32> to vector<16x128xf32>
    %225 = arith.mulf %220, %224 : vector<16x128xf32>
    %226 = vector.broadcast %204 : vector<1x128xf32> to vector<16x128xf32>
    %227 = arith.mulf %225, %226 : vector<16x128xf32>
    %228 = vector.broadcast %205 : vector<1x128xf32> to vector<16x128xf32>
    %229 = arith.addf %227, %228 : vector<16x128xf32>
    %230 = arith.truncf %229 : vector<16x128xf32> to vector<16x128xbf16>
    %c1_86 = arith.constant 1 : index
    %c0_87 = arith.constant 0 : index
    %c0_88 = arith.constant 0 : index
    %231 = vector.load %arg7[%c1_86, %c0_87, %c0_88] : memref<2x128x128xbf16, #tpu.memory_space<vmem>>, vector<1x128x128xbf16>
    %232 = vector.shape_cast %231 : vector<1x128x128xbf16> to vector<128x128xbf16>
    %cst_89 = arith.constant dense<0.000000e+00> : vector<16x128xf32>
    %233 = tpu.matmul %230, %232, %cst_89 {dimension_numbers = #tpu.dot_dimension_numbers<[1], [0], [0], [1], [0, 0, 1, 1], [], []>} : vector<16x128xbf16>, vector<128x128xbf16>, vector<16x128xf32> -> vector<16x128xf32>
    %c1_90 = arith.constant 1 : index
    %c0_91 = arith.constant 0 : index
    %c0_92 = arith.constant 0 : index
    %234 = vector.load %arg8[%c1_90, %c0_91, %c0_92] : memref<2x1x128xf32, #tpu.memory_space<vmem>>, vector<1x1x128xf32>
    %235 = vector.shape_cast %234 : vector<1x1x128xf32> to vector<1x128xf32>
    %236 = vector.broadcast %235 : vector<1x128xf32> to vector<16x128xf32>
    %237 = arith.addf %233, %236 : vector<16x128xf32>
    %cst_93 = arith.constant 0.000000e+00 : f32
    %238 = vector.broadcast %cst_93 : f32 to vector<16x128xf32>
    %239 = arith.maximumf %237, %238 : vector<16x128xf32>
    %240 = arith.truncf %239 : vector<16x128xf32> to vector<16x128xbf16>
    %c1_94 = arith.constant 1 : index
    %c0_95 = arith.constant 0 : index
    %c0_96 = arith.constant 0 : index
    %241 = vector.load %arg9[%c1_94, %c0_95, %c0_96] : memref<2x128x128xbf16, #tpu.memory_space<vmem>>, vector<1x128x128xbf16>
    %242 = vector.shape_cast %241 : vector<1x128x128xbf16> to vector<128x128xbf16>
    %cst_97 = arith.constant dense<0.000000e+00> : vector<16x128xf32>
    %243 = tpu.matmul %240, %242, %cst_97 {dimension_numbers = #tpu.dot_dimension_numbers<[1], [0], [0], [1], [0, 0, 1, 1], [], []>} : vector<16x128xbf16>, vector<128x128xbf16>, vector<16x128xf32> -> vector<16x128xf32>
    %c1_98 = arith.constant 1 : index
    %c0_99 = arith.constant 0 : index
    %c0_100 = arith.constant 0 : index
    %244 = vector.load %arg10[%c1_98, %c0_99, %c0_100] : memref<2x1x128xf32, #tpu.memory_space<vmem>>, vector<1x1x128xf32>
    %245 = vector.shape_cast %244 : vector<1x1x128xf32> to vector<1x128xf32>
    %246 = vector.broadcast %245 : vector<1x128xf32> to vector<16x128xf32>
    %247 = arith.addf %243, %246 : vector<16x128xf32>
    %248 = arith.addf %229, %247 : vector<16x128xf32>
    %249 = vector.extract_strided_slice %141 {offsets = [2, 0], sizes = [1, 128], strides = [1, 1]} : vector<4x128xf32> to vector<1x128xf32>
    %250 = vector.extract_strided_slice %141 {offsets = [3, 0], sizes = [1, 128], strides = [1, 1]} : vector<4x128xf32> to vector<1x128xf32>
    %cst_101 = arith.constant dense<0.000000e+00> : vector<16xf32>
    %251 = vector.multi_reduction <add>, %248, %cst_101 [1] : vector<16x128xf32> to vector<16xf32>
    %252 = vector.shape_cast %251 : vector<16xf32> to vector<16x1xf32>
    %cst_102 = arith.constant 3.125000e-02 : f32
    %253 = vector.broadcast %cst_102 : f32 to vector<16x1xf32>
    %254 = arith.mulf %252, %253 : vector<16x1xf32>
    %255 = arith.mulf %248, %248 : vector<16x128xf32>
    %cst_103 = arith.constant dense<0.000000e+00> : vector<16xf32>
    %256 = vector.multi_reduction <add>, %255, %cst_103 [1] : vector<16x128xf32> to vector<16xf32>
    %257 = vector.shape_cast %256 : vector<16xf32> to vector<16x1xf32>
    %cst_104 = arith.constant 3.125000e-02 : f32
    %258 = vector.broadcast %cst_104 : f32 to vector<16x1xf32>
    %259 = arith.mulf %257, %258 : vector<16x1xf32>
    %260 = arith.mulf %254, %254 : vector<16x1xf32>
    %261 = arith.subf %259, %260 : vector<16x1xf32>
    %cst_105 = arith.constant 0.000000e+00 : f32
    %262 = vector.broadcast %cst_105 : f32 to vector<16x1xf32>
    %263 = arith.maximumf %261, %262 : vector<16x1xf32>
    %264 = vector.broadcast %254 : vector<16x1xf32> to vector<16x128xf32>
    %265 = arith.subf %248, %264 : vector<16x128xf32>
    %cst_106 = arith.constant 9.99999974E-6 : f32
    %266 = vector.broadcast %cst_106 : f32 to vector<16x1xf32>
    %267 = arith.addf %263, %266 : vector<16x1xf32>
    %268 = math.rsqrt %267 : vector<16x1xf32>
    %269 = vector.broadcast %268 : vector<16x1xf32> to vector<16x128xf32>
    %270 = arith.mulf %265, %269 : vector<16x128xf32>
    %271 = vector.broadcast %249 : vector<1x128xf32> to vector<16x128xf32>
    %272 = arith.mulf %270, %271 : vector<16x128xf32>
    %273 = vector.broadcast %250 : vector<1x128xf32> to vector<16x128xf32>
    %274 = arith.addf %272, %273 : vector<16x128xf32>
    %275 = vector.shape_cast %274 : vector<16x128xf32> to vector<2x8x128xf32>
    %c0_107 = arith.constant 0 : index
    %c0_108 = arith.constant 0 : index
    %c0_109 = arith.constant 0 : index
    %276 = vector.load %arg12[%c0_107, %c0_108, %c0_109] : memref<2x8x128xf32, #tpu.memory_space<vmem>>, vector<2x8x128xf32>
    tpu.vector_store %arg12[%c0_107, %c0_108, %c0_109], %275 {strides = array<i32>} : memref<2x8x128xf32, #tpu.memory_space<vmem>>, vector<2x8x128xf32>,
    return
  }
  func.func @transform_0(%arg0: i32) -> (i32, i32, i32) {
    %c0_i32 = arith.constant 0 : i32
    %c0_i32_0 = arith.constant 0 : i32
    %c0_i32_1 = arith.constant 0 : i32
    return %arg0, %c0_i32, %c0_i32_0 : i32, i32, i32
  }
  func.func @transform_1(%arg0: i32) -> (i32, i32, i32) {
    %c0_i32 = arith.constant 0 : i32
    %c0_i32_0 = arith.constant 0 : i32
    %c0_i32_1 = arith.constant 0 : i32
    return %arg0, %c0_i32, %c0_i32_0 : i32, i32, i32
  }
  func.func @transform_2(%arg0: i32) -> (i32, i32, i32) {
    %c0_i32 = arith.constant 0 : i32
    %c0_i32_0 = arith.constant 0 : i32
    %c0_i32_1 = arith.constant 0 : i32
    %c0_i32_2 = arith.constant 0 : i32
    return %c0_i32, %c0_i32_0, %c0_i32_1 : i32, i32, i32
  }
  func.func @transform_3(%arg0: i32) -> (i32, i32, i32) {
    %c0_i32 = arith.constant 0 : i32
    %c0_i32_0 = arith.constant 0 : i32
    %c0_i32_1 = arith.constant 0 : i32
    %c0_i32_2 = arith.constant 0 : i32
    return %c0_i32, %c0_i32_0, %c0_i32_1 : i32, i32, i32
  }
  func.func @transform_4(%arg0: i32) -> (i32, i32, i32) {
    %c0_i32 = arith.constant 0 : i32
    %c0_i32_0 = arith.constant 0 : i32
    %c0_i32_1 = arith.constant 0 : i32
    %c0_i32_2 = arith.constant 0 : i32
    return %c0_i32, %c0_i32_0, %c0_i32_1 : i32, i32, i32
  }
  func.func @transform_5(%arg0: i32) -> (i32, i32, i32) {
    %c0_i32 = arith.constant 0 : i32
    %c0_i32_0 = arith.constant 0 : i32
    %c0_i32_1 = arith.constant 0 : i32
    %c0_i32_2 = arith.constant 0 : i32
    return %c0_i32, %c0_i32_0, %c0_i32_1 : i32, i32, i32
  }
  func.func @transform_6(%arg0: i32) -> (i32, i32, i32) {
    %c0_i32 = arith.constant 0 : i32
    %c0_i32_0 = arith.constant 0 : i32
    %c0_i32_1 = arith.constant 0 : i32
    %c0_i32_2 = arith.constant 0 : i32
    return %c0_i32, %c0_i32_0, %c0_i32_1 : i32, i32, i32
  }
  func.func @transform_7(%arg0: i32) -> (i32, i32, i32) {
    %c0_i32 = arith.constant 0 : i32
    %c0_i32_0 = arith.constant 0 : i32
    %c0_i32_1 = arith.constant 0 : i32
    %c0_i32_2 = arith.constant 0 : i32
    return %c0_i32, %c0_i32_0, %c0_i32_1 : i32, i32, i32
  }
  func.func @transform_8(%arg0: i32) -> (i32, i32, i32) {
    %c0_i32 = arith.constant 0 : i32
    %c0_i32_0 = arith.constant 0 : i32
    %c0_i32_1 = arith.constant 0 : i32
    %c0_i32_2 = arith.constant 0 : i32
    return %c0_i32, %c0_i32_0, %c0_i32_1 : i32, i32, i32
  }
  func.func @transform_9(%arg0: i32) -> (i32, i32, i32) {
    %c0_i32 = arith.constant 0 : i32
    %c0_i32_0 = arith.constant 0 : i32
    %c0_i32_1 = arith.constant 0 : i32
    %c0_i32_2 = arith.constant 0 : i32
    return %c0_i32, %c0_i32_0, %c0_i32_1 : i32, i32, i32
  }
  func.func @transform_10(%arg0: i32) -> (i32, i32, i32) {
    %c0_i32 = arith.constant 0 : i32
    %c0_i32_0 = arith.constant 0 : i32
    %c0_i32_1 = arith.constant 0 : i32
    %c0_i32_2 = arith.constant 0 : i32
    return %c0_i32, %c0_i32_0, %c0_i32_1 : i32, i32, i32
  }
  func.func @transform_11(%arg0: i32) -> (i32, i32, i32) {
    %c0_i32 = arith.constant 0 : i32
    %c0_i32_0 = arith.constant 0 : i32
    %c0_i32_1 = arith.constant 0 : i32
    return %arg0, %c0_i32, %c0_i32_0 : i32, i32, i32
  }
}

module attributes {stable_mosaic.version = 11 : i64} {
  func.func @sasrec_encoder_kernel(%arg0: i32, %arg1: memref<2x8x128xf32, #tpu.memory_space<vmem>>, %arg2: memref<2x1x8xf32, #tpu.memory_space<vmem>>, %arg3: memref<2x128x768xbf16, #tpu.memory_space<vmem>>, %arg4: memref<2x1x768xf32, #tpu.memory_space<vmem>>, %arg5: memref<2x256x128xbf16, #tpu.memory_space<vmem>>, %arg6: memref<2x1x128xf32, #tpu.memory_space<vmem>>, %arg7: memref<2x128x128xbf16, #tpu.memory_space<vmem>>, %arg8: memref<2x1x128xf32, #tpu.memory_space<vmem>>, %arg9: memref<2x128x128xbf16, #tpu.memory_space<vmem>>, %arg10: memref<2x1x128xf32, #tpu.memory_space<vmem>>, %arg11: memref<2x4x128xf32, #tpu.memory_space<vmem>>, %arg12: memref<2x8x128xf32, #tpu.memory_space<vmem>>) attributes {dimension_semantics = [#tpu.dimension_semantics<parallel>], iteration_bounds = array<i64: 1>, scalar_prefetch = 0 : i64, scratch_operands = 0 : i64, tpu.core_type = #tpu.core_type<tc>, window_params = [{transform_indices = @transform_0, window_bounds = array<i64: 2, 8, 128>}, {transform_indices = @transform_1, window_bounds = array<i64: 2, 1, 8>}, {pipeline_mode = #tpu.pipeline_mode<synchronous>, transform_indices = @transform_2, window_bounds = array<i64: 2, 128, 768>}, {pipeline_mode = #tpu.pipeline_mode<synchronous>, transform_indices = @transform_3, window_bounds = array<i64: 2, 1, 768>}, {pipeline_mode = #tpu.pipeline_mode<synchronous>, transform_indices = @transform_4, window_bounds = array<i64: 2, 256, 128>}, {pipeline_mode = #tpu.pipeline_mode<synchronous>, transform_indices = @transform_5, window_bounds = array<i64: 2, 1, 128>}, {pipeline_mode = #tpu.pipeline_mode<synchronous>, transform_indices = @transform_6, window_bounds = array<i64: 2, 128, 128>}, {pipeline_mode = #tpu.pipeline_mode<synchronous>, transform_indices = @transform_7, window_bounds = array<i64: 2, 1, 128>}, {pipeline_mode = #tpu.pipeline_mode<synchronous>, transform_indices = @transform_8, window_bounds = array<i64: 2, 128, 128>}, {pipeline_mode = #tpu.pipeline_mode<synchronous>, transform_indices = @transform_9, window_bounds = array<i64: 2, 1, 128>}, {pipeline_mode = #tpu.pipeline_mode<synchronous>, transform_indices = @transform_10, window_bounds = array<i64: 2, 4, 128>}, {transform_indices = @transform_11, window_bounds = array<i64: 2, 8, 128>}]} {
    %c0 = arith.constant 0 : index
    %c0_0 = arith.constant 0 : index
    %c0_1 = arith.constant 0 : index
    %0 = vector.load %arg1[%c0, %c0_0, %c0_1] : memref<2x8x128xf32, #tpu.memory_space<vmem>>, vector<2x8x128xf32>
    %1 = vector.shape_cast %0 : vector<2x8x128xf32> to vector<16x128xf32>
    %c0_2 = arith.constant 0 : index
    %c0_3 = arith.constant 0 : index
    %c0_4 = arith.constant 0 : index
    %2 = vector.load %arg2[%c0_2, %c0_3, %c0_4] : memref<2x1x8xf32, #tpu.memory_space<vmem>>, vector<2x1x8xf32>
    %3 = vector.shape_cast %2 : vector<2x1x8xf32> to vector<2x1x8xf32>
    %4 = vector.broadcast %3 : vector<2x1x8xf32> to vector<2x8x8xf32>
    %c0_5 = arith.constant 0 : index
    %c0_6 = arith.constant 0 : index
    %c0_7 = arith.constant 0 : index
    %5 = vector.load %arg11[%c0_5, %c0_6, %c0_7] : memref<2x4x128xf32, #tpu.memory_space<vmem>>, vector<1x4x128xf32>
    %6 = vector.shape_cast %5 : vector<1x4x128xf32> to vector<4x128xf32>
    %7 = arith.truncf %1 : vector<16x128xf32> to vector<16x128xbf16>
    %c0_8 = arith.constant 0 : index
    %c0_9 = arith.constant 0 : index
    %c0_10 = arith.constant 0 : index
    %8 = vector.load %arg3[%c0_8, %c0_9, %c0_10] : memref<2x128x768xbf16, #tpu.memory_space<vmem>>, vector<1x128x768xbf16>
    %9 = vector.shape_cast %8 : vector<1x128x768xbf16> to vector<128x768xbf16>
    %cst = arith.constant dense<0.000000e+00> : vector<16x768xf32>
    %10 = tpu.matmul %7, %9, %cst {dimension_numbers = #tpu.dot_dimension_numbers<[1], [0], [0], [1], [0, 0, 1, 1], [], []>} : vector<16x128xbf16>, vector<128x768xbf16>, vector<16x768xf32> -> vector<16x768xf32>
    %c0_11 = arith.constant 0 : index
    %c0_12 = arith.constant 0 : index
    %c0_13 = arith.constant 0 : index
    %11 = vector.load %arg4[%c0_11, %c0_12, %c0_13] : memref<2x1x768xf32, #tpu.memory_space<vmem>>, vector<1x1x768xf32>
    %12 = vector.shape_cast %11 : vector<1x1x768xf32> to vector<1x768xf32>
    %13 = vector.broadcast %12 : vector<1x768xf32> to vector<16x768xf32>
    %14 = arith.addf %10, %13 : vector<16x768xf32>
    %15 = arith.truncf %14 : vector<16x768xf32> to vector<16x768xbf16>
    %16 = vector.extract_strided_slice %15 {offsets = [0, 0], sizes = [16, 128], strides = [1, 1]} : vector<16x768xbf16> to vector<16x128xbf16>
    %17 = vector.shape_cast %16 : vector<16x128xbf16> to vector<2x8x128xbf16>
    %18 = vector.extract_strided_slice %15 {offsets = [0, 256], sizes = [16, 128], strides = [1, 1]} : vector<16x768xbf16> to vector<16x128xbf16>
    %19 = vector.shape_cast %18 : vector<16x128xbf16> to vector<2x8x128xbf16>
    %20 = vector.extract_strided_slice %15 {offsets = [0, 512], sizes = [16, 128], strides = [1, 1]} : vector<16x768xbf16> to vector<16x128xbf16>
    %21 = vector.shape_cast %20 : vector<16x128xbf16> to vector<2x8x128xbf16>
    "tpu.trace_start"() <{level = 10 : i32, message = "bqd,bkd->bqk"}> : () -> ()
    %cst_14 = arith.constant dense<0.000000e+00> : vector<2x8x8xf32>
    %22 = tpu.matmul %17, %19, %cst_14 {dimension_numbers = #tpu.dot_dimension_numbers<[2], [2], [1], [1], [0, 0, 0, 1, 1, 1], [0], [0]>} : vector<2x8x128xbf16>, vector<2x8x128xbf16>, vector<2x8x8xf32> -> vector<2x8x8xf32>
    "tpu.trace_stop"() : () -> ()
    %23 = arith.addf %22, %4 : vector<2x8x8xf32>
    %cst_15 = arith.constant dense<0xFF800000> : vector<2x8xf32>
    %24 = vector.multi_reduction <maximumf>, %23, %cst_15 [2] : vector<2x8x8xf32> to vector<2x8xf32>
    %25 = vector.shape_cast %24 : vector<2x8xf32> to vector<2x8x1xf32>
    %26 = vector.broadcast %25 : vector<2x8x1xf32> to vector<2x8x8xf32>
    %27 = arith.subf %23, %26 : vector<2x8x8xf32>
    %28 = math.exp %27 : vector<2x8x8xf32>
    %cst_16 = arith.constant dense<0.000000e+00> : vector<2x8xf32>
    %29 = vector.multi_reduction <add>, %28, %cst_16 [2] : vector<2x8x8xf32> to vector<2x8xf32>
    %30 = vector.shape_cast %29 : vector<2x8xf32> to vector<2x8x1xf32>
    %31 = tpu.reciprocal %30 {approx = true} : vector<2x8x1xf32> -> vector<2x8x1xf32>
    %32 = vector.broadcast %31 : vector<2x8x1xf32> to vector<2x8x8xf32>
    %33 = arith.mulf %28, %32 : vector<2x8x8xf32>
    %34 = arith.truncf %33 : vector<2x8x8xf32> to vector<2x8x8xbf16>
    "tpu.trace_start"() <{level = 10 : i32, message = "bqk,bkd->bqd"}> : () -> ()
    %cst_17 = arith.constant dense<0.000000e+00> : vector<2x8x128xf32>
    %35 = tpu.matmul %34, %21, %cst_17 {dimension_numbers = #tpu.dot_dimension_numbers<[2], [1], [1], [2], [0, 0, 0, 1, 1, 2], [0], [0]>} : vector<2x8x8xbf16>, vector<2x8x128xbf16>, vector<2x8x128xf32> -> vector<2x8x128xf32>
    "tpu.trace_stop"() : () -> ()
    %36 = vector.shape_cast %35 : vector<2x8x128xf32> to vector<16x128xf32>
    %37 = arith.truncf %36 : vector<16x128xf32> to vector<16x128xbf16>
    %38 = vector.extract_strided_slice %15 {offsets = [0, 128], sizes = [16, 128], strides = [1, 1]} : vector<16x768xbf16> to vector<16x128xbf16>
    %39 = vector.shape_cast %38 : vector<16x128xbf16> to vector<2x8x128xbf16>
    %40 = vector.extract_strided_slice %15 {offsets = [0, 384], sizes = [16, 128], strides = [1, 1]} : vector<16x768xbf16> to vector<16x128xbf16>
    %41 = vector.shape_cast %40 : vector<16x128xbf16> to vector<2x8x128xbf16>
    %42 = vector.extract_strided_slice %15 {offsets = [0, 640], sizes = [16, 128], strides = [1, 1]} : vector<16x768xbf16> to vector<16x128xbf16>
    %43 = vector.shape_cast %42 : vector<16x128xbf16> to vector<2x8x128xbf16>
    "tpu.trace_start"() <{level = 10 : i32, message = "bqd,bkd->bqk"}> : () -> ()
    %cst_18 = arith.constant dense<0.000000e+00> : vector<2x8x8xf32>
    %44 = tpu.matmul %39, %41, %cst_18 {dimension_numbers = #tpu.dot_dimension_numbers<[2], [2], [1], [1], [0, 0, 0, 1, 1, 1], [0], [0]>} : vector<2x8x128xbf16>, vector<2x8x128xbf16>, vector<2x8x8xf32> -> vector<2x8x8xf32>
    "tpu.trace_stop"() : () -> ()
    %45 = arith.addf %44, %4 : vector<2x8x8xf32>
    %cst_19 = arith.constant dense<0xFF800000> : vector<2x8xf32>
    %46 = vector.multi_reduction <maximumf>, %45, %cst_19 [2] : vector<2x8x8xf32> to vector<2x8xf32>
    %47 = vector.shape_cast %46 : vector<2x8xf32> to vector<2x8x1xf32>
    %48 = vector.broadcast %47 : vector<2x8x1xf32> to vector<2x8x8xf32>
    %49 = arith.subf %45, %48 : vector<2x8x8xf32>
    %50 = math.exp %49 : vector<2x8x8xf32>
    %cst_20 = arith.constant dense<0.000000e+00> : vector<2x8xf32>
    %51 = vector.multi_reduction <add>, %50, %cst_20 [2] : vector<2x8x8xf32> to vector<2x8xf32>
    %52 = vector.shape_cast %51 : vector<2x8xf32> to vector<2x8x1xf32>
    %53 = tpu.reciprocal %52 {approx = true} : vector<2x8x1xf32> -> vector<2x8x1xf32>
    %54 = vector.broadcast %53 : vector<2x8x1xf32> to vector<2x8x8xf32>
    %55 = arith.mulf %50, %54 : vector<2x8x8xf32>
    %56 = arith.truncf %55 : vector<2x8x8xf32> to vector<2x8x8xbf16>
    "tpu.trace_start"() <{level = 10 : i32, message = "bqk,bkd->bqd"}> : () -> ()
    %cst_21 = arith.constant dense<0.000000e+00> : vector<2x8x128xf32>
    %57 = tpu.matmul %56, %43, %cst_21 {dimension_numbers = #tpu.dot_dimension_numbers<[2], [1], [1], [2], [0, 0, 0, 1, 1, 2], [0], [0]>} : vector<2x8x8xbf16>, vector<2x8x128xbf16>, vector<2x8x128xf32> -> vector<2x8x128xf32>
    "tpu.trace_stop"() : () -> ()
    %58 = vector.shape_cast %57 : vector<2x8x128xf32> to vector<16x128xf32>
    %59 = arith.truncf %58 : vector<16x128xf32> to vector<16x128xbf16>
    %60 = tpu.concatenate %37, %59 in 1 : vector<16x128xbf16>, vector<16x128xbf16> -> vector<16x256xbf16>
    %c0_22 = arith.constant 0 : index
    %c0_23 = arith.constant 0 : index
    %c0_24 = arith.constant 0 : index
    %61 = vector.load %arg5[%c0_22, %c0_23, %c0_24] : memref<2x256x128xbf16, #tpu.memory_space<vmem>>, vector<1x256x128xbf16>
    %62 = vector.shape_cast %61 : vector<1x256x128xbf16> to vector<256x128xbf16>
    %cst_25 = arith.constant dense<0.000000e+00> : vector<16x128xf32>
    %63 = tpu.matmul %60, %62, %cst_25 {dimension_numbers = #tpu.dot_dimension_numbers<[1], [0], [0], [1], [0, 0, 1, 1], [], []>} : vector<16x256xbf16>, vector<256x128xbf16>, vector<16x128xf32> -> vector<16x128xf32>
    %c0_26 = arith.constant 0 : index
    %c0_27 = arith.constant 0 : index
    %c0_28 = arith.constant 0 : index
    %64 = vector.load %arg6[%c0_26, %c0_27, %c0_28] : memref<2x1x128xf32, #tpu.memory_space<vmem>>, vector<1x1x128xf32>
    %65 = vector.shape_cast %64 : vector<1x1x128xf32> to vector<1x128xf32>
    %66 = vector.broadcast %65 : vector<1x128xf32> to vector<16x128xf32>
    %67 = arith.addf %63, %66 : vector<16x128xf32>
    %68 = arith.addf %1, %67 : vector<16x128xf32>
    %69 = vector.extract_strided_slice %6 {offsets = [0, 0], sizes = [1, 128], strides = [1, 1]} : vector<4x128xf32> to vector<1x128xf32>
    %70 = vector.extract_strided_slice %6 {offsets = [1, 0], sizes = [1, 128], strides = [1, 1]} : vector<4x128xf32> to vector<1x128xf32>
    %cst_29 = arith.constant dense<0.000000e+00> : vector<16xf32>
    %71 = vector.multi_reduction <add>, %68, %cst_29 [1] : vector<16x128xf32> to vector<16xf32>
    %72 = vector.shape_cast %71 : vector<16xf32> to vector<16x1xf32>
    %cst_30 = arith.constant 3.125000e-02 : f32
    %73 = vector.broadcast %cst_30 : f32 to vector<16x1xf32>
    %74 = arith.mulf %72, %73 : vector<16x1xf32>
    %75 = arith.mulf %68, %68 : vector<16x128xf32>
    %cst_31 = arith.constant dense<0.000000e+00> : vector<16xf32>
    %76 = vector.multi_reduction <add>, %75, %cst_31 [1] : vector<16x128xf32> to vector<16xf32>
    %77 = vector.shape_cast %76 : vector<16xf32> to vector<16x1xf32>
    %cst_32 = arith.constant 3.125000e-02 : f32
    %78 = vector.broadcast %cst_32 : f32 to vector<16x1xf32>
    %79 = arith.mulf %77, %78 : vector<16x1xf32>
    %80 = arith.mulf %74, %74 : vector<16x1xf32>
    %81 = arith.subf %79, %80 : vector<16x1xf32>
    %cst_33 = arith.constant 0.000000e+00 : f32
    %82 = vector.broadcast %cst_33 : f32 to vector<16x1xf32>
    %83 = arith.maximumf %81, %82 : vector<16x1xf32>
    %84 = vector.broadcast %74 : vector<16x1xf32> to vector<16x128xf32>
    %85 = arith.subf %68, %84 : vector<16x128xf32>
    %cst_34 = arith.constant 9.99999974E-6 : f32
    %86 = vector.broadcast %cst_34 : f32 to vector<16x1xf32>
    %87 = arith.addf %83, %86 : vector<16x1xf32>
    %88 = math.rsqrt %87 : vector<16x1xf32>
    %89 = vector.broadcast %88 : vector<16x1xf32> to vector<16x128xf32>
    %90 = arith.mulf %85, %89 : vector<16x128xf32>
    %91 = vector.broadcast %69 : vector<1x128xf32> to vector<16x128xf32>
    %92 = arith.mulf %90, %91 : vector<16x128xf32>
    %93 = vector.broadcast %70 : vector<1x128xf32> to vector<16x128xf32>
    %94 = arith.addf %92, %93 : vector<16x128xf32>
    %95 = arith.truncf %94 : vector<16x128xf32> to vector<16x128xbf16>
    %c0_35 = arith.constant 0 : index
    %c0_36 = arith.constant 0 : index
    %c0_37 = arith.constant 0 : index
    %96 = vector.load %arg7[%c0_35, %c0_36, %c0_37] : memref<2x128x128xbf16, #tpu.memory_space<vmem>>, vector<1x128x128xbf16>
    %97 = vector.shape_cast %96 : vector<1x128x128xbf16> to vector<128x128xbf16>
    %cst_38 = arith.constant dense<0.000000e+00> : vector<16x128xf32>
    %98 = tpu.matmul %95, %97, %cst_38 {dimension_numbers = #tpu.dot_dimension_numbers<[1], [0], [0], [1], [0, 0, 1, 1], [], []>} : vector<16x128xbf16>, vector<128x128xbf16>, vector<16x128xf32> -> vector<16x128xf32>
    %c0_39 = arith.constant 0 : index
    %c0_40 = arith.constant 0 : index
    %c0_41 = arith.constant 0 : index
    %99 = vector.load %arg8[%c0_39, %c0_40, %c0_41] : memref<2x1x128xf32, #tpu.memory_space<vmem>>, vector<1x1x128xf32>
    %100 = vector.shape_cast %99 : vector<1x1x128xf32> to vector<1x128xf32>
    %101 = vector.broadcast %100 : vector<1x128xf32> to vector<16x128xf32>
    %102 = arith.addf %98, %101 : vector<16x128xf32>
    %cst_42 = arith.constant 0.000000e+00 : f32
    %103 = vector.broadcast %cst_42 : f32 to vector<16x128xf32>
    %104 = arith.maximumf %102, %103 : vector<16x128xf32>
    %105 = arith.truncf %104 : vector<16x128xf32> to vector<16x128xbf16>
    %c0_43 = arith.constant 0 : index
    %c0_44 = arith.constant 0 : index
    %c0_45 = arith.constant 0 : index
    %106 = vector.load %arg9[%c0_43, %c0_44, %c0_45] : memref<2x128x128xbf16, #tpu.memory_space<vmem>>, vector<1x128x128xbf16>
    %107 = vector.shape_cast %106 : vector<1x128x128xbf16> to vector<128x128xbf16>
    %cst_46 = arith.constant dense<0.000000e+00> : vector<16x128xf32>
    %108 = tpu.matmul %105, %107, %cst_46 {dimension_numbers = #tpu.dot_dimension_numbers<[1], [0], [0], [1], [0, 0, 1, 1], [], []>} : vector<16x128xbf16>, vector<128x128xbf16>, vector<16x128xf32> -> vector<16x128xf32>
    %c0_47 = arith.constant 0 : index
    %c0_48 = arith.constant 0 : index
    %c0_49 = arith.constant 0 : index
    %109 = vector.load %arg10[%c0_47, %c0_48, %c0_49] : memref<2x1x128xf32, #tpu.memory_space<vmem>>, vector<1x1x128xf32>
    %110 = vector.shape_cast %109 : vector<1x1x128xf32> to vector<1x128xf32>
    %111 = vector.broadcast %110 : vector<1x128xf32> to vector<16x128xf32>
    %112 = arith.addf %108, %111 : vector<16x128xf32>
    %113 = arith.addf %94, %112 : vector<16x128xf32>
    %114 = vector.extract_strided_slice %6 {offsets = [2, 0], sizes = [1, 128], strides = [1, 1]} : vector<4x128xf32> to vector<1x128xf32>
    %115 = vector.extract_strided_slice %6 {offsets = [3, 0], sizes = [1, 128], strides = [1, 1]} : vector<4x128xf32> to vector<1x128xf32>
    %cst_50 = arith.constant dense<0.000000e+00> : vector<16xf32>
    %116 = vector.multi_reduction <add>, %113, %cst_50 [1] : vector<16x128xf32> to vector<16xf32>
    %117 = vector.shape_cast %116 : vector<16xf32> to vector<16x1xf32>
    %cst_51 = arith.constant 3.125000e-02 : f32
    %118 = vector.broadcast %cst_51 : f32 to vector<16x1xf32>
    %119 = arith.mulf %117, %118 : vector<16x1xf32>
    %120 = arith.mulf %113, %113 : vector<16x128xf32>
    %cst_52 = arith.constant dense<0.000000e+00> : vector<16xf32>
    %121 = vector.multi_reduction <add>, %120, %cst_52 [1] : vector<16x128xf32> to vector<16xf32>
    %122 = vector.shape_cast %121 : vector<16xf32> to vector<16x1xf32>
    %cst_53 = arith.constant 3.125000e-02 : f32
    %123 = vector.broadcast %cst_53 : f32 to vector<16x1xf32>
    %124 = arith.mulf %122, %123 : vector<16x1xf32>
    %125 = arith.mulf %119, %119 : vector<16x1xf32>
    %126 = arith.subf %124, %125 : vector<16x1xf32>
    %cst_54 = arith.constant 0.000000e+00 : f32
    %127 = vector.broadcast %cst_54 : f32 to vector<16x1xf32>
    %128 = arith.maximumf %126, %127 : vector<16x1xf32>
    %129 = vector.broadcast %119 : vector<16x1xf32> to vector<16x128xf32>
    %130 = arith.subf %113, %129 : vector<16x128xf32>
    %cst_55 = arith.constant 9.99999974E-6 : f32
    %131 = vector.broadcast %cst_55 : f32 to vector<16x1xf32>
    %132 = arith.addf %128, %131 : vector<16x1xf32>
    %133 = math.rsqrt %132 : vector<16x1xf32>
    %134 = vector.broadcast %133 : vector<16x1xf32> to vector<16x128xf32>
    %135 = arith.mulf %130, %134 : vector<16x128xf32>
    %136 = vector.broadcast %114 : vector<1x128xf32> to vector<16x128xf32>
    %137 = arith.mulf %135, %136 : vector<16x128xf32>
    %138 = vector.broadcast %115 : vector<1x128xf32> to vector<16x128xf32>
    %139 = arith.addf %137, %138 : vector<16x128xf32>
    %c1 = arith.constant 1 : index
    %c0_56 = arith.constant 0 : index
    %c0_57 = arith.constant 0 : index
    %140 = vector.load %arg11[%c1, %c0_56, %c0_57] : memref<2x4x128xf32, #tpu.memory_space<vmem>>, vector<1x4x128xf32>
    %141 = vector.shape_cast %140 : vector<1x4x128xf32> to vector<4x128xf32>
    %142 = arith.truncf %139 : vector<16x128xf32> to vector<16x128xbf16>
    %c1_58 = arith.constant 1 : index
    %c0_59 = arith.constant 0 : index
    %c0_60 = arith.constant 0 : index
    %143 = vector.load %arg3[%c1_58, %c0_59, %c0_60] : memref<2x128x768xbf16, #tpu.memory_space<vmem>>, vector<1x128x768xbf16>
    %144 = vector.shape_cast %143 : vector<1x128x768xbf16> to vector<128x768xbf16>
    %cst_61 = arith.constant dense<0.000000e+00> : vector<16x768xf32>
    %145 = tpu.matmul %142, %144, %cst_61 {dimension_numbers = #tpu.dot_dimension_numbers<[1], [0], [0], [1], [0, 0, 1, 1], [], []>} : vector<16x128xbf16>, vector<128x768xbf16>, vector<16x768xf32> -> vector<16x768xf32>
    %c1_62 = arith.constant 1 : index
    %c0_63 = arith.constant 0 : index
    %c0_64 = arith.constant 0 : index
    %146 = vector.load %arg4[%c1_62, %c0_63, %c0_64] : memref<2x1x768xf32, #tpu.memory_space<vmem>>, vector<1x1x768xf32>
    %147 = vector.shape_cast %146 : vector<1x1x768xf32> to vector<1x768xf32>
    %148 = vector.broadcast %147 : vector<1x768xf32> to vector<16x768xf32>
    %149 = arith.addf %145, %148 : vector<16x768xf32>
    %150 = arith.truncf %149 : vector<16x768xf32> to vector<16x768xbf16>
    %151 = vector.extract_strided_slice %150 {offsets = [0, 0], sizes = [16, 128], strides = [1, 1]} : vector<16x768xbf16> to vector<16x128xbf16>
    %152 = vector.shape_cast %151 : vector<16x128xbf16> to vector<2x8x128xbf16>
    %153 = vector.extract_strided_slice %150 {offsets = [0, 256], sizes = [16, 128], strides = [1, 1]} : vector<16x768xbf16> to vector<16x128xbf16>
    %154 = vector.shape_cast %153 : vector<16x128xbf16> to vector<2x8x128xbf16>
    %155 = vector.extract_strided_slice %150 {offsets = [0, 512], sizes = [16, 128], strides = [1, 1]} : vector<16x768xbf16> to vector<16x128xbf16>
    %156 = vector.shape_cast %155 : vector<16x128xbf16> to vector<2x8x128xbf16>
    "tpu.trace_start"() <{level = 10 : i32, message = "bqd,bkd->bqk"}> : () -> ()
    %cst_65 = arith.constant dense<0.000000e+00> : vector<2x8x8xf32>
    %157 = tpu.matmul %152, %154, %cst_65 {dimension_numbers = #tpu.dot_dimension_numbers<[2], [2], [1], [1], [0, 0, 0, 1, 1, 1], [0], [0]>} : vector<2x8x128xbf16>, vector<2x8x128xbf16>, vector<2x8x8xf32> -> vector<2x8x8xf32>
    "tpu.trace_stop"() : () -> ()
    %158 = arith.addf %157, %4 : vector<2x8x8xf32>
    %cst_66 = arith.constant dense<0xFF800000> : vector<2x8xf32>
    %159 = vector.multi_reduction <maximumf>, %158, %cst_66 [2] : vector<2x8x8xf32> to vector<2x8xf32>
    %160 = vector.shape_cast %159 : vector<2x8xf32> to vector<2x8x1xf32>
    %161 = vector.broadcast %160 : vector<2x8x1xf32> to vector<2x8x8xf32>
    %162 = arith.subf %158, %161 : vector<2x8x8xf32>
    %163 = math.exp %162 : vector<2x8x8xf32>
    %cst_67 = arith.constant dense<0.000000e+00> : vector<2x8xf32>
    %164 = vector.multi_reduction <add>, %163, %cst_67 [2] : vector<2x8x8xf32> to vector<2x8xf32>
    %165 = vector.shape_cast %164 : vector<2x8xf32> to vector<2x8x1xf32>
    %166 = tpu.reciprocal %165 {approx = true} : vector<2x8x1xf32> -> vector<2x8x1xf32>
    %167 = vector.broadcast %166 : vector<2x8x1xf32> to vector<2x8x8xf32>
    %168 = arith.mulf %163, %167 : vector<2x8x8xf32>
    %169 = arith.truncf %168 : vector<2x8x8xf32> to vector<2x8x8xbf16>
    "tpu.trace_start"() <{level = 10 : i32, message = "bqk,bkd->bqd"}> : () -> ()
    %cst_68 = arith.constant dense<0.000000e+00> : vector<2x8x128xf32>
    %170 = tpu.matmul %169, %156, %cst_68 {dimension_numbers = #tpu.dot_dimension_numbers<[2], [1], [1], [2], [0, 0, 0, 1, 1, 2], [0], [0]>} : vector<2x8x8xbf16>, vector<2x8x128xbf16>, vector<2x8x128xf32> -> vector<2x8x128xf32>
    "tpu.trace_stop"() : () -> ()
    %171 = vector.shape_cast %170 : vector<2x8x128xf32> to vector<16x128xf32>
    %172 = arith.truncf %171 : vector<16x128xf32> to vector<16x128xbf16>
    %173 = vector.extract_strided_slice %150 {offsets = [0, 128], sizes = [16, 128], strides = [1, 1]} : vector<16x768xbf16> to vector<16x128xbf16>
    %174 = vector.shape_cast %173 : vector<16x128xbf16> to vector<2x8x128xbf16>
    %175 = vector.extract_strided_slice %150 {offsets = [0, 384], sizes = [16, 128], strides = [1, 1]} : vector<16x768xbf16> to vector<16x128xbf16>
    %176 = vector.shape_cast %175 : vector<16x128xbf16> to vector<2x8x128xbf16>
    %177 = vector.extract_strided_slice %150 {offsets = [0, 640], sizes = [16, 128], strides = [1, 1]} : vector<16x768xbf16> to vector<16x128xbf16>
    %178 = vector.shape_cast %177 : vector<16x128xbf16> to vector<2x8x128xbf16>
    "tpu.trace_start"() <{level = 10 : i32, message = "bqd,bkd->bqk"}> : () -> ()
    %cst_69 = arith.constant dense<0.000000e+00> : vector<2x8x8xf32>
    %179 = tpu.matmul %174, %176, %cst_69 {dimension_numbers = #tpu.dot_dimension_numbers<[2], [2], [1], [1], [0, 0, 0, 1, 1, 1], [0], [0]>} : vector<2x8x128xbf16>, vector<2x8x128xbf16>, vector<2x8x8xf32> -> vector<2x8x8xf32>
    "tpu.trace_stop"() : () -> ()
    %180 = arith.addf %179, %4 : vector<2x8x8xf32>
    %cst_70 = arith.constant dense<0xFF800000> : vector<2x8xf32>
    %181 = vector.multi_reduction <maximumf>, %180, %cst_70 [2] : vector<2x8x8xf32> to vector<2x8xf32>
    %182 = vector.shape_cast %181 : vector<2x8xf32> to vector<2x8x1xf32>
    %183 = vector.broadcast %182 : vector<2x8x1xf32> to vector<2x8x8xf32>
    %184 = arith.subf %180, %183 : vector<2x8x8xf32>
    %185 = math.exp %184 : vector<2x8x8xf32>
    %cst_71 = arith.constant dense<0.000000e+00> : vector<2x8xf32>
    %186 = vector.multi_reduction <add>, %185, %cst_71 [2] : vector<2x8x8xf32> to vector<2x8xf32>
    %187 = vector.shape_cast %186 : vector<2x8xf32> to vector<2x8x1xf32>
    %188 = tpu.reciprocal %187 {approx = true} : vector<2x8x1xf32> -> vector<2x8x1xf32>
    %189 = vector.broadcast %188 : vector<2x8x1xf32> to vector<2x8x8xf32>
    %190 = arith.mulf %185, %189 : vector<2x8x8xf32>
    %191 = arith.truncf %190 : vector<2x8x8xf32> to vector<2x8x8xbf16>
    "tpu.trace_start"() <{level = 10 : i32, message = "bqk,bkd->bqd"}> : () -> ()
    %cst_72 = arith.constant dense<0.000000e+00> : vector<2x8x128xf32>
    %192 = tpu.matmul %191, %178, %cst_72 {dimension_numbers = #tpu.dot_dimension_numbers<[2], [1], [1], [2], [0, 0, 0, 1, 1, 2], [0], [0]>} : vector<2x8x8xbf16>, vector<2x8x128xbf16>, vector<2x8x128xf32> -> vector<2x8x128xf32>
    "tpu.trace_stop"() : () -> ()
    %193 = vector.shape_cast %192 : vector<2x8x128xf32> to vector<16x128xf32>
    %194 = arith.truncf %193 : vector<16x128xf32> to vector<16x128xbf16>
    %195 = tpu.concatenate %172, %194 in 1 : vector<16x128xbf16>, vector<16x128xbf16> -> vector<16x256xbf16>
    %c1_73 = arith.constant 1 : index
    %c0_74 = arith.constant 0 : index
    %c0_75 = arith.constant 0 : index
    %196 = vector.load %arg5[%c1_73, %c0_74, %c0_75] : memref<2x256x128xbf16, #tpu.memory_space<vmem>>, vector<1x256x128xbf16>
    %197 = vector.shape_cast %196 : vector<1x256x128xbf16> to vector<256x128xbf16>
    %cst_76 = arith.constant dense<0.000000e+00> : vector<16x128xf32>
    %198 = tpu.matmul %195, %197, %cst_76 {dimension_numbers = #tpu.dot_dimension_numbers<[1], [0], [0], [1], [0, 0, 1, 1], [], []>} : vector<16x256xbf16>, vector<256x128xbf16>, vector<16x128xf32> -> vector<16x128xf32>
    %c1_77 = arith.constant 1 : index
    %c0_78 = arith.constant 0 : index
    %c0_79 = arith.constant 0 : index
    %199 = vector.load %arg6[%c1_77, %c0_78, %c0_79] : memref<2x1x128xf32, #tpu.memory_space<vmem>>, vector<1x1x128xf32>
    %200 = vector.shape_cast %199 : vector<1x1x128xf32> to vector<1x128xf32>
    %201 = vector.broadcast %200 : vector<1x128xf32> to vector<16x128xf32>
    %202 = arith.addf %198, %201 : vector<16x128xf32>
    %203 = arith.addf %139, %202 : vector<16x128xf32>
    %204 = vector.extract_strided_slice %141 {offsets = [0, 0], sizes = [1, 128], strides = [1, 1]} : vector<4x128xf32> to vector<1x128xf32>
    %205 = vector.extract_strided_slice %141 {offsets = [1, 0], sizes = [1, 128], strides = [1, 1]} : vector<4x128xf32> to vector<1x128xf32>
    %cst_80 = arith.constant dense<0.000000e+00> : vector<16xf32>
    %206 = vector.multi_reduction <add>, %203, %cst_80 [1] : vector<16x128xf32> to vector<16xf32>
    %207 = vector.shape_cast %206 : vector<16xf32> to vector<16x1xf32>
    %cst_81 = arith.constant 3.125000e-02 : f32
    %208 = vector.broadcast %cst_81 : f32 to vector<16x1xf32>
    %209 = arith.mulf %207, %208 : vector<16x1xf32>
    %210 = arith.mulf %203, %203 : vector<16x128xf32>
    %cst_82 = arith.constant dense<0.000000e+00> : vector<16xf32>
    %211 = vector.multi_reduction <add>, %210, %cst_82 [1] : vector<16x128xf32> to vector<16xf32>
    %212 = vector.shape_cast %211 : vector<16xf32> to vector<16x1xf32>
    %cst_83 = arith.constant 3.125000e-02 : f32
    %213 = vector.broadcast %cst_83 : f32 to vector<16x1xf32>
    %214 = arith.mulf %212, %213 : vector<16x1xf32>
    %215 = arith.mulf %209, %209 : vector<16x1xf32>
    %216 = arith.subf %214, %215 : vector<16x1xf32>
    %cst_84 = arith.constant 0.000000e+00 : f32
    %217 = vector.broadcast %cst_84 : f32 to vector<16x1xf32>
    %218 = arith.maximumf %216, %217 : vector<16x1xf32>
    %219 = vector.broadcast %209 : vector<16x1xf32> to vector<16x128xf32>
    %220 = arith.subf %203, %219 : vector<16x128xf32>
    %cst_85 = arith.constant 9.99999974E-6 : f32
    %221 = vector.broadcast %cst_85 : f32 to vector<16x1xf32>
    %222 = arith.addf %218, %221 : vector<16x1xf32>
    %223 = math.rsqrt %222 : vector<16x1xf32>
    %224 = vector.broadcast %223 : vector<16x1xf32> to vector<16x128xf32>
    %225 = arith.mulf %220, %224 : vector<16x128xf32>
    %226 = vector.broadcast %204 : vector<1x128xf32> to vector<16x128xf32>
    %227 = arith.mulf %225, %226 : vector<16x128xf32>
    %228 = vector.broadcast %205 : vector<1x128xf32> to vector<16x128xf32>
    %229 = arith.addf %227, %228 : vector<16x128xf32>
    %230 = arith.truncf %229 : vector<16x128xf32> to vector<16x128xbf16>
    %c1_86 = arith.constant 1 : index
    %c0_87 = arith.constant 0 : index
    %c0_88 = arith.constant 0 : index
    %231 = vector.load %arg7[%c1_86, %c0_87, %c0_88] : memref<2x128x128xbf16, #tpu.memory_space<vmem>>, vector<1x128x128xbf16>
    %232 = vector.shape_cast %231 : vector<1x128x128xbf16> to vector<128x128xbf16>
    %cst_89 = arith.constant dense<0.000000e+00> : vector<16x128xf32>
    %233 = tpu.matmul %230, %232, %cst_89 {dimension_numbers = #tpu.dot_dimension_numbers<[1], [0], [0], [1], [0, 0, 1, 1], [], []>} : vector<16x128xbf16>, vector<128x128xbf16>, vector<16x128xf32> -> vector<16x128xf32>
    %c1_90 = arith.constant 1 : index
    %c0_91 = arith.constant 0 : index
    %c0_92 = arith.constant 0 : index
    %234 = vector.load %arg8[%c1_90, %c0_91, %c0_92] : memref<2x1x128xf32, #tpu.memory_space<vmem>>, vector<1x1x128xf32>
    %235 = vector.shape_cast %234 : vector<1x1x128xf32> to vector<1x128xf32>
    %236 = vector.broadcast %235 : vector<1x128xf32> to vector<16x128xf32>
    %237 = arith.addf %233, %236 : vector<16x128xf32>
    %cst_93 = arith.constant 0.000000e+00 : f32
    %238 = vector.broadcast %cst_93 : f32 to vector<16x128xf32>
    %239 = arith.maximumf %237, %238 : vector<16x128xf32>
    %240 = arith.truncf %239 : vector<16x128xf32> to vector<16x128xbf16>
    %c1_94 = arith.constant 1 : index
    %c0_95 = arith.constant 0 : index
    %c0_96 = arith.constant 0 : index
    %241 = vector.load %arg9[%c1_94, %c0_95, %c0_96] : memref<2x128x128xbf16, #tpu.memory_space<vmem>>, vector<1x128x128xbf16>
    %242 = vector.shape_cast %241 : vector<1x128x128xbf16> to vector<128x128xbf16>
    %cst_97 = arith.constant dense<0.000000e+00> : vector<16x128xf32>
    %243 = tpu.matmul %240, %242, %cst_97 {dimension_numbers = #tpu.dot_dimension_numbers<[1], [0], [0], [1], [0, 0, 1, 1], [], []>} : vector<16x128xbf16>, vector<128x128xbf16>, vector<16x128xf32> -> vector<16x128xf32>
    %c1_98 = arith.constant 1 : index
    %c0_99 = arith.constant 0 : index
    %c0_100 = arith.constant 0 : index
    %244 = vector.load %arg10[%c1_98, %c0_99, %c0_100] : memref<2x1x128xf32, #tpu.memory_space<vmem>>, vector<1x1x128xf32>
    %245 = vector.shape_cast %244 : vector<1x1x128xf32> to vector<1x128xf32>
    %246 = vector.broadcast %245 : vector<1x128xf32> to vector<16x128xf32>
    %247 = arith.addf %243, %246 : vector<16x128xf32>
    %248 = arith.addf %229, %247 : vector<16x128xf32>
    %249 = vector.extract_strided_slice %141 {offsets = [2, 0], sizes = [1, 128], strides = [1, 1]} : vector<4x128xf32> to vector<1x128xf32>
    %250 = vector.extract_strided_slice %141 {offsets = [3, 0], sizes = [1, 128], strides = [1, 1]} : vector<4x128xf32> to vector<1x128xf32>
    %cst_101 = arith.constant dense<0.000000e+00> : vector<16xf32>
    %251 = vector.multi_reduction <add>, %248, %cst_101 [1] : vector<16x128xf32> to vector<16xf32>
    %252 = vector.shape_cast %251 : vector<16xf32> to vector<16x1xf32>
    %cst_102 = arith.constant 3.125000e-02 : f32
    %253 = vector.broadcast %cst_102 : f32 to vector<16x1xf32>
    %254 = arith.mulf %252, %253 : vector<16x1xf32>
    %255 = arith.mulf %248, %248 : vector<16x128xf32>
    %cst_103 = arith.constant dense<0.000000e+00> : vector<16xf32>
    %256 = vector.multi_reduction <add>, %255, %cst_103 [1] : vector<16x128xf32> to vector<16xf32>
    %257 = vector.shape_cast %256 : vector<16xf32> to vector<16x1xf32>
    %cst_104 = arith.constant 3.125000e-02 : f32
    %258 = vector.broadcast %cst_104 : f32 to vector<16x1xf32>
    %259 = arith.mulf %257, %258 : vector<16x1xf32>
    %260 = arith.mulf %254, %254 : vector<16x1xf32>
    %261 = arith.subf %259, %260 : vector<16x1xf32>
    %cst_105 = arith.constant 0.000000e+00 : f32
    %262 = vector.broadcast %cst_105 : f32 to vector<16x1xf32>
    %263 = arith.maximumf %261, %262 : vector<16x1xf32>
    %264 = vector.broadcast %254 : vector<16x1xf32> to vector<16x128xf32>
    %265 = arith.subf %248, %264 : vector<16x128xf32>
    %cst_106 = arith.constant 9.99999974E-6 : f32
    %266 = vector.broadcast %cst_106 : f32 to vector<16x1xf32>
    %267 = arith.addf %263, %266 : vector<16x1xf32>
    %268 = math.rsqrt %267 : vector<16x1xf32>
    %269 = vector.broadcast %268 : vector<16x1xf32> to vector<16x128xf32>
    %270 = arith.mulf %265, %269 : vector<16x128xf32>
    %271 = vector.broadcast %249 : vector<1x128xf32> to vector<16x128xf32>
    %272 = arith.mulf %270, %271 : vector<16x128xf32>
    %273 = vector.broadcast %250 : vector<1x128xf32> to vector<16x128xf32>
    %274 = arith.addf %272, %273 : vector<16x128xf32>
    %275 = vector.shape_cast %274 : vector<16x128xf32> to vector<2x8x128xf32>
    %c0_107 = arith.constant 0 : index
    %c0_108 = arith.constant 0 : index
    %c0_109 = arith.constant 0 : index
    %276 = vector.load %arg12[%c0_107, %c0_108, %c0_109] : memref<2x8x128xf32, #tpu.memory_space<vmem>>, vector<2x8x128xf32>
    tpu.vector_store %arg12[%c0_107, %c0_108, %c0_109], %275 {strides = array<i32>} : memref<2x8x128xf32, #tpu.memory_space<vmem>>, vector<2x8x128xf32>,
    return
  }
  func.func @transform_0(%arg0: i32) -> (i32, i32, i32) {
    %c0_i32 = arith.constant 0 : i32
    %c0_i32_0 = arith.constant 0 : i32
    %c0_i32_1 = arith.constant 0 : i32
    return %arg0, %c0_i32, %c0_i32_0 : i32, i32, i32
  }
  func.func @transform_1(%arg0: i32) -> (i32, i32, i32) {
    %c0_i32 = arith.constant 0 : i32
    %c0_i32_0 = arith.constant 0 : i32
    %c0_i32_1 = arith.constant 0 : i32
    return %arg0, %c0_i32, %c0_i32_0 : i32, i32, i32
  }
  func.func @transform_2(%arg0: i32) -> (i32, i32, i32) {
    %c0_i32 = arith.constant 0 : i32
    %c0_i32_0 = arith.constant 0 : i32
    %c0_i32_1 = arith.constant 0 : i32
    %c0_i32_2 = arith.constant 0 : i32
    return %c0_i32, %c0_i32_0, %c0_i32_1 : i32, i32, i32
  }
  func.func @transform_3(%arg0: i32) -> (i32, i32, i32) {
    %c0_i32 = arith.constant 0 : i32
    %c0_i32_0 = arith.constant 0 : i32
    %c0_i32_1 = arith.constant 0 : i32
    %c0_i32_2 = arith.constant 0 : i32
    return %c0_i32, %c0_i32_0, %c0_i32_1 : i32, i32, i32
  }
  func.func @transform_4(%arg0: i32) -> (i32, i32, i32) {
    %c0_i32 = arith.constant 0 : i32
    %c0_i32_0 = arith.constant 0 : i32
    %c0_i32_1 = arith.constant 0 : i32
    %c0_i32_2 = arith.constant 0 : i32
    return %c0_i32, %c0_i32_0, %c0_i32_1 : i32, i32, i32
  }
  func.func @transform_5(%arg0: i32) -> (i32, i32, i32) {
    %c0_i32 = arith.constant 0 : i32
    %c0_i32_0 = arith.constant 0 : i32
    %c0_i32_1 = arith.constant 0 : i32
    %c0_i32_2 = arith.constant 0 : i32
    return %c0_i32, %c0_i32_0, %c0_i32_1 : i32, i32, i32
  }
  func.func @transform_6(%arg0: i32) -> (i32, i32, i32) {
    %c0_i32 = arith.constant 0 : i32
    %c0_i32_0 = arith.constant 0 : i32
    %c0_i32_1 = arith.constant 0 : i32
    %c0_i32_2 = arith.constant 0 : i32
    return %c0_i32, %c0_i32_0, %c0_i32_1 : i32, i32, i32
  }
  func.func @transform_7(%arg0: i32) -> (i32, i32, i32) {
    %c0_i32 = arith.constant 0 : i32
    %c0_i32_0 = arith.constant 0 : i32
    %c0_i32_1 = arith.constant 0 : i32
    %c0_i32_2 = arith.constant 0 : i32
    return %c0_i32, %c0_i32_0, %c0_i32_1 : i32, i32, i32
  }
  func.func @transform_8(%arg0: i32) -> (i32, i32, i32) {
    %c0_i32 = arith.constant 0 : i32
    %c0_i32_0 = arith.constant 0 : i32
    %c0_i32_1 = arith.constant 0 : i32
    %c0_i32_2 = arith.constant 0 : i32
    return %c0_i32, %c0_i32_0, %c0_i32_1 : i32, i32, i32
  }
  func.func @transform_9(%arg0: i32) -> (i32, i32, i32) {
    %c0_i32 = arith.constant 0 : i32
    %c0_i32_0 = arith.constant 0 : i32
    %c0_i32_1 = arith.constant 0 : i32
    %c0_i32_2 = arith.constant 0 : i32
    return %c0_i32, %c0_i32_0, %c0_i32_1 : i32, i32, i32
  }
  func.func @transform_10(%arg0: i32) -> (i32, i32, i32) {
    %c0_i32 = arith.constant 0 : i32
    %c0_i32_0 = arith.constant 0 : i32
    %c0_i32_1 = arith.constant 0 : i32
    %c0_i32_2 = arith.constant 0 : i32
    return %c0_i32, %c0_i32_0, %c0_i32_1 : i32, i32, i32
  }
  func.func @transform_11(%arg0: i32) -> (i32, i32, i32) {
    %c0_i32 = arith.constant 0 : i32
    %c0_i32_0 = arith.constant 0 : i32
    %c0_i32_1 = arith.constant 0 : i32
    return %arg0, %c0_i32, %c0_i32_0 : i32, i32, i32
  }
}

</mosaic_0001>

<llo_original>
// kernel: tpu_custom_call.1
$region0: #{tpu_custom_call.1}
  #allocation0 [shape = 'u32[]', space=smem, size = 0x4, offset = 0x4, fixed_abs, tag = 'smem constant byte address 0x4 - core index']
  #allocation1 [shape = 'u32[72,128]{1,0:T(1,128)}', space=vmem, size = 0x9000, scoped, tag = 'internal scratch']
  %s0 = inlined_call_operand.hbm [shape: f32[2,8,128], index: 0, kind: input, shape index: {}]
  %s1 = inlined_call_operand.hbm [shape: f32[2,1,8], index: 1, kind: input, shape index: {}]
  %s2 = inlined_call_operand.hbm [shape: bf16[2,128,768], index: 2, kind: input, shape index: {}]
  %s3 = inlined_call_operand.hbm [shape: f32[2,1,768], index: 3, kind: input, shape index: {}]
  %s4 = inlined_call_operand.hbm [shape: bf16[2,256,128], index: 4, kind: input, shape index: {}]
  %s5 = inlined_call_operand.hbm [shape: f32[2,1,128], index: 5, kind: input, shape index: {}]
  %s6 = inlined_call_operand.hbm [shape: bf16[2,128,128], index: 6, kind: input, shape index: {}]
  %s7 = inlined_call_operand.hbm [shape: f32[2,1,128], index: 7, kind: input, shape index: {}]
  %s8 = inlined_call_operand.hbm [shape: bf16[2,128,128], index: 8, kind: input, shape index: {}]
  %s9 = inlined_call_operand.hbm [shape: f32[2,1,128], index: 9, kind: input, shape index: {}]
  %s10 = inlined_call_operand.vmem [shape: f32[2,4,128], index: 10, kind: input, shape index: {}]
  %s11 = inlined_call_operand.hbm [shape: f32[2,8,128], index: 11, kind: output, shape index: {}]
  %s12 = sld [smem:[#allocation0]]
  $region94: #{tpu_custom_call.1} parent=0
    _
  %s14 = ssub.s32 1, %s12
  %s15 = scalar_select 0, %s14, %s12
  $region1: #{tpu_custom_call.1} parent=0
    #allocation2 [shape = 'u8[8192]{0}', space=vmem, size = 0x2000, scoped, tag = 'input window, operand 0, single buffered']
    #allocation3 [shape = 's32[1]{0}', space=sflag, size = 0x4, scoped, tag = 'scoped memory for tpu_custom_call.1']
    #allocation4 [shape = 's32[1]{0}', space=sflag, size = 0x4, scoped, tag = 'scoped memory for tpu_custom_call.1']
    #allocation5 [shape = 'u8[1024]{0}', space=vmem, size = 0x400, scoped, tag = 'input window, operand 1, single buffered']
    #allocation6 [shape = 's32[1]{0}', space=sflag, size = 0x4, scoped, tag = 'scoped memory for tpu_custom_call.1']
    #allocation7 [shape = 'u8[393216]{0}', space=vmem, size = 0x60000, scoped, tag = 'input window, operand 2, single buffered']
    #allocation8 [shape = 'u8[6144]{0}', space=vmem, size = 0x1800, scoped, tag = 'input window, operand 3, single buffered']
    #allocation9 [shape = 's32[1]{0}', space=sflag, size = 0x4, scoped, tag = 'scoped memory for tpu_custom_call.1']
    #allocation10 [shape = 'u8[131072]{0}', space=vmem, size = 0x20000, scoped, tag = 'input window, operand 4, single buffered']
    #allocation11 [shape = 'u8[1024]{0}', space=vmem, size = 0x400, scoped, tag = 'input window, operand 5, single buffered']
    #allocation12 [shape = 's32[1]{0}', space=sflag, size = 0x4, scoped, tag = 'scoped memory for tpu_custom_call.1']
    #allocation13 [shape = 'u8[65536]{0}', space=vmem, size = 0x10000, scoped, tag = 'input window, operand 6, single buffered']
    #allocation14 [shape = 'u8[1024]{0}', space=vmem, size = 0x400, scoped, tag = 'input window, operand 7, single buffered']
    #allocation15 [shape = 's32[1]{0}', space=sflag, size = 0x4, scoped, tag = 'scoped memory for tpu_custom_call.1']
    #allocation16 [shape = 'u8[65536]{0}', space=vmem, size = 0x10000, scoped, tag = 'input window, operand 8, single buffered']
    #allocation17 [shape = 'u8[1024]{0}', space=vmem, size = 0x400, scoped, tag = 'input window, operand 9, single buffered']
    #allocation18 [shape = 's32[1]{0}', space=sflag, size = 0x4, scoped, tag = 'scoped memory for tpu_custom_call.1']
    #allocation19 [shape = 'u8[8192]{0}', space=vmem, size = 0x2000, scoped, tag = 'output window, operand 0, single buffered']
    %16 = vsyncpa [#allocation3], 0
    %17 = vsyncpa [#allocation6], 0
    %18 = vsyncpa [#allocation9], 0
    %19 = vsyncpa [#allocation12], 0
    %20 = vsyncpa [#allocation15], 0
    %21 = vsyncpa [#allocation18], 0
    %22 = vsyncpa [#allocation4], 0
    // Predicated region
    $region2: #{tpu_custom_call.1} parent=1 // pred_check
      _
    $region3: #{tpu_custom_call.1} parent=1 // pred_check_branch
      %24 = sbr.rel (0) target = $region5
    $region4: #{tpu_custom_call.1} parent=1 // pred_region
      %26 = vsyncadd [#allocation3], 0
      %s27 = sshll.u32 %s0, 4
      %s28 = int_to_ptr.hbm [resolvable:$true] %s27
      %s29 = sshll.u32 [#allocation2], 4
      %s30 = int_to_ptr.vmem [resolvable:$true] %s29
      %35 = dma.hbm_to_vmem [thread:$0]  %s28, 256, %s30, [#allocation3], 128, 128, 8
    $region5: #{tpu_custom_call.1} parent=1 // pred_fallthru
      _
    // Predicated region
    $region6: #{tpu_custom_call.1} parent=1 // pred_check
      _
    $region7: #{tpu_custom_call.1} parent=1 // pred_check_branch
      %37 = sbr.rel (0) target = $region9
    $region8: #{tpu_custom_call.1} parent=1 // pred_region
      %39 = vsyncadd [#allocation6], 0
      %s40 = sshll.u32 %s1, 4
      %s41 = int_to_ptr.hbm [resolvable:$true] %s40
      %s42 = sshll.u32 [#allocation5], 4
      %s43 = int_to_ptr.vmem [resolvable:$true] %s42
      %48 = dma.hbm_to_vmem [thread:$0]  %s41, 32, %s43, [#allocation6], 16, 16, 1
    $region9: #{tpu_custom_call.1} parent=1 // pred_fallthru
      _
    // Predicated region
    $region10: #{tpu_custom_call.1} parent=1 // pred_check
      _
    $region11: #{tpu_custom_call.1} parent=1 // pred_check_branch
      %50 = sbr.rel (0) target = $region13
    $region12: #{tpu_custom_call.1} parent=1 // pred_region
      %52 = vsyncadd [#allocation6], 0
      %s53 = sshll.u32 %s2, 4
      %s54 = int_to_ptr.hbm [resolvable:$true] %s53
      %s55 = sshll.u32 [#allocation7], 4
      %s56 = int_to_ptr.vmem [resolvable:$true] %s55
      %61 = dma.hbm_to_vmem [thread:$0]  %s54, 12288, %s56, [#allocation6], 384, 384, 24
    $region13: #{tpu_custom_call.1} parent=1 // pred_fallthru
      _
    // Predicated region
    $region14: #{tpu_custom_call.1} parent=1 // pred_check
      _
    $region15: #{tpu_custom_call.1} parent=1 // pred_check_branch
      %63 = sbr.rel (0) target = $region17
    $region16: #{tpu_custom_call.1} parent=1 // pred_region
      %65 = vsyncadd [#allocation9], 0
      %s66 = sshll.u32 %s3, 4
      %s67 = int_to_ptr.hbm [resolvable:$true] %s66
      %s68 = sshll.u32 [#allocation8], 4
      %s69 = int_to_ptr.vmem [resolvable:$true] %s68
      %74 = dma.hbm_to_vmem [thread:$0]  %s67, 192, %s69, [#allocation9], 96, 96, 6
    $region17: #{tpu_custom_call.1} parent=1 // pred_fallthru
      _
    // Predicated region
    $region18: #{tpu_custom_call.1} parent=1 // pred_check
      _
    $region19: #{tpu_custom_call.1} parent=1 // pred_check_branch
      %76 = sbr.rel (0) target = $region21
    $region20: #{tpu_custom_call.1} parent=1 // pred_region
      %78 = vsyncadd [#allocation9], 0
      %s79 = sshll.u32 %s4, 4
      %s80 = int_to_ptr.hbm [resolvable:$true] %s79
      %s81 = sshll.u32 [#allocation10], 4
      %s82 = int_to_ptr.vmem [resolvable:$true] %s81
      %87 = dma.hbm_to_vmem [thread:$0]  %s80, 4096, %s82, [#allocation9], 64, 64, 4
    $region21: #{tpu_custom_call.1} parent=1 // pred_fallthru
      _
    // Predicated region
    $region22: #{tpu_custom_call.1} parent=1 // pred_check
      _
    $region23: #{tpu_custom_call.1} parent=1 // pred_check_branch
      %89 = sbr.rel (0) target = $region25
    $region24: #{tpu_custom_call.1} parent=1 // pred_region
      %91 = vsyncadd [#allocation12], 0
      %s92 = sshll.u32 %s5, 4
      %s93 = int_to_ptr.hbm [resolvable:$true] %s92
      %s94 = sshll.u32 [#allocation11], 4
      %s95 = int_to_ptr.vmem [resolvable:$true] %s94
      %100 = dma.hbm_to_vmem [thread:$0]  %s93, 32, %s95, [#allocation12], 16, 16, 1
    $region25: #{tpu_custom_call.1} parent=1 // pred_fallthru
      _
    // Predicated region
    $region26: #{tpu_custom_call.1} parent=1 // pred_check
      _
    $region27: #{tpu_custom_call.1} parent=1 // pred_check_branch
      %102 = sbr.rel (0) target = $region29
    $region28: #{tpu_custom_call.1} parent=1 // pred_region
      %104 = vsyncadd [#allocation12], 0
      %s105 = sshll.u32 %s6, 4
      %s106 = int_to_ptr.hbm [resolvable:$true] %s105
      %s107 = sshll.u32 [#allocation13], 4
      %s108 = int_to_ptr.vmem [resolvable:$true] %s107
      %113 = dma.hbm_to_vmem [thread:$0]  %s106, 2048, %s108, [#allocation12], 64, 64, 4
    $region29: #{tpu_custom_call.1} parent=1 // pred_fallthru
      _
    // Predicated region
    $region30: #{tpu_custom_call.1} parent=1 // pred_check
      _
    $region31: #{tpu_custom_call.1} parent=1 // pred_check_branch
      %115 = sbr.rel (0) target = $region33
    $region32: #{tpu_custom_call.1} parent=1 // pred_region
      %117 = vsyncadd [#allocation15], 0
      %s118 = sshll.u32 %s7, 4
      %s119 = int_to_ptr.hbm [resolvable:$true] %s118
      %s120 = sshll.u32 [#allocation14], 4
      %s121 = int_to_ptr.vmem [resolvable:$true] %s120
      %126 = dma.hbm_to_vmem [thread:$0]  %s119, 32, %s121, [#allocation15], 16, 16, 1
    $region33: #{tpu_custom_call.1} parent=1 // pred_fallthru
      _
    // Predicated region
    $region34: #{tpu_custom_call.1} parent=1 // pred_check
      _
    $region35: #{tpu_custom_call.1} parent=1 // pred_check_branch
      %128 = sbr.rel (0) target = $region37
    $region36: #{tpu_custom_call.1} parent=1 // pred_region
      %130 = vsyncadd [#allocation15], 0
      %s131 = sshll.u32 %s8, 4
      %s132 = int_to_ptr.hbm [resolvable:$true] %s131
      %s133 = sshll.u32 [#allocation16], 4
      %s134 = int_to_ptr.vmem [resolvable:$true] %s133
      %139 = dma.hbm_to_vmem [thread:$0]  %s132, 2048, %s134, [#allocation15], 64, 64, 4
    $region37: #{tpu_custom_call.1} parent=1 // pred_fallthru
      _
    // Predicated region
    $region38: #{tpu_custom_call.1} parent=1 // pred_check
      _
    $region39: #{tpu_custom_call.1} parent=1 // pred_check_branch
      %141 = sbr.rel (0) target = $region41
    $region40: #{tpu_custom_call.1} parent=1 // pred_region
      %143 = vsyncadd [#allocation18], 0
      %s144 = sshll.u32 %s9, 4
      %s145 = int_to_ptr.hbm [resolvable:$true] %s144
      %s146 = sshll.u32 [#allocation17], 4
      %s147 = int_to_ptr.vmem [resolvable:$true] %s146
      %152 = dma.hbm_to_vmem [thread:$0]  %s145, 32, %s147, [#allocation18], 16, 16, 1
    $region41: #{tpu_custom_call.1} parent=1 // pred_fallthru
      _
    // Predicated region
    $region42: #{tpu_custom_call.1} parent=1 // pred_check
      _
    $region43: #{tpu_custom_call.1} parent=1 // pred_check_branch
      %154 = sbr.rel (0) target = $region45
    $region44: #{tpu_custom_call.1} parent=1 // pred_region
      _
    $region45: #{tpu_custom_call.1} parent=1 // pred_fallthru
      _
    // Predicated region
    $region46: #{tpu_custom_call.1} parent=1 // pred_check
      _
    $region47: #{tpu_custom_call.1} parent=1 // pred_check_branch
      %156 = sbr.rel (0) target = $region49
    $region48: #{tpu_custom_call.1} parent=1 // pred_region
      %158 = dma.done [#allocation3], 256
    $region49: #{tpu_custom_call.1} parent=1 // pred_fallthru
      _
    // Predicated region
    $region50: #{tpu_custom_call.1} parent=1 // pred_check
      _
    $region51: #{tpu_custom_call.1} parent=1 // pred_check_branch
      %160 = sbr.rel (0) target = $region53
    $region52: #{tpu_custom_call.1} parent=1 // pred_region
      %162 = dma.done [#allocation6], 32
    $region53: #{tpu_custom_call.1} parent=1 // pred_fallthru
      _
    // Predicated region
    $region54: #{tpu_custom_call.1} parent=1 // pred_check
      _
    $region55: #{tpu_custom_call.1} parent=1 // pred_check_branch
      %164 = sbr.rel (0) target = $region57
    $region56: #{tpu_custom_call.1} parent=1 // pred_region
      %166 = dma.done [#allocation6], 12288
    $region57: #{tpu_custom_call.1} parent=1 // pred_fallthru
      _
    // Predicated region
    $region58: #{tpu_custom_call.1} parent=1 // pred_check
      _
    $region59: #{tpu_custom_call.1} parent=1 // pred_check_branch
      %168 = sbr.rel (0) target = $region61
    $region60: #{tpu_custom_call.1} parent=1 // pred_region
      %170 = dma.done [#allocation9], 192
    $region61: #{tpu_custom_call.1} parent=1 // pred_fallthru
      _
    // Predicated region
    $region62: #{tpu_custom_call.1} parent=1 // pred_check
      _
    $region63: #{tpu_custom_call.1} parent=1 // pred_check_branch
      %172 = sbr.rel (0) target = $region65
    $region64: #{tpu_custom_call.1} parent=1 // pred_region
      %174 = dma.done [#allocation9], 4096
    $region65: #{tpu_custom_call.1} parent=1 // pred_fallthru
      _
    // Predicated region
    $region66: #{tpu_custom_call.1} parent=1 // pred_check
      _
    $region67: #{tpu_custom_call.1} parent=1 // pred_check_branch
      %176 = sbr.rel (0) target = $region69
    $region68: #{tpu_custom_call.1} parent=1 // pred_region
      %178 = dma.done [#allocation12], 32
    $region69: #{tpu_custom_call.1} parent=1 // pred_fallthru
      _
    // Predicated region
    $region70: #{tpu_custom_call.1} parent=1 // pred_check
      _
    $region71: #{tpu_custom_call.1} parent=1 // pred_check_branch
      %180 = sbr.rel (0) target = $region73
    $region72: #{tpu_custom_call.1} parent=1 // pred_region
      %182 = dma.done [#allocation12], 2048
    $region73: #{tpu_custom_call.1} parent=1 // pred_fallthru
      _
    // Predicated region
    $region74: #{tpu_custom_call.1} parent=1 // pred_check
      _
    $region75: #{tpu_custom_call.1} parent=1 // pred_check_branch
      %184 = sbr.rel (0) target = $region77
    $region76: #{tpu_custom_call.1} parent=1 // pred_region
      %186 = dma.done [#allocation15], 32
    $region77: #{tpu_custom_call.1} parent=1 // pred_fallthru
      _
    // Predicated region
    $region78: #{tpu_custom_call.1} parent=1 // pred_check
      _
    $region79: #{tpu_custom_call.1} parent=1 // pred_check_branch
      %188 = sbr.rel (0) target = $region81
    $region80: #{tpu_custom_call.1} parent=1 // pred_region
      %190 = dma.done [#allocation15], 2048
    $region81: #{tpu_custom_call.1} parent=1 // pred_fallthru
      _
    // Predicated region
    $region82: #{tpu_custom_call.1} parent=1 // pred_check
      _
    $region83: #{tpu_custom_call.1} parent=1 // pred_check_branch
      %192 = sbr.rel (0) target = $region85
    $region84: #{tpu_custom_call.1} parent=1 // pred_region
      %194 = dma.done [#allocation18], 32
    $region85: #{tpu_custom_call.1} parent=1 // pred_fallthru
      _
    %v196 = vld [vmem:[#allocation2] sm:$0xff]
    %v197 = vld [vmem:[#allocation2 + $0x8] sm:$0xff]
    %v198 = vld [vmem:[#allocation5] sm:$0x1]
    %v199 = vld [vmem:[#allocation5 + $0x1] sm:$0x1]
    %v202 = vperm.slane %v198, 0
    %v203 = vperm.slane %v199, 0
    %v206 = vld [vmem:[%s10] sm:$0xf]
    %v207 = vpack.c.bf16 %v197, %v196
    %v208 = vld [vmem:[#allocation7] sm:$0xff]
    %v209 = vld [vmem:[#allocation7 + $0x8] sm:$0xff]
    %v210 = vld [vmem:[#allocation7 + $0x10] sm:$0xff]
    %v211 = vld [vmem:[#allocation7 + $0x18] sm:$0xff]
    %v212 = vld [vmem:[#allocation7 + $0x20] sm:$0xff]
    %v213 = vld [vmem:[#allocation7 + $0x28] sm:$0xff]
    %v214 = vld [vmem:[#allocation7 + $0x30] sm:$0xff]
    %v215 = vld [vmem:[#allocation7 + $0x38] sm:$0xff]
    %v216 = vld [vmem:[#allocation7 + $0x40] sm:$0xff]
    %v217 = vld [vmem:[#allocation7 + $0x48] sm:$0xff]
    %v218 = vld [vmem:[#allocation7 + $0x50] sm:$0xff]
    %v219 = vld [vmem:[#allocation7 + $0x58] sm:$0xff]
    %v220 = vld [vmem:[#allocation7 + $0x60] sm:$0xff]
    %v221 = vld [vmem:[#allocation7 + $0x68] sm:$0xff]
    %v222 = vld [vmem:[#allocation7 + $0x70] sm:$0xff]
    %v223 = vld [vmem:[#allocation7 + $0x78] sm:$0xff]
    %v224 = vld [vmem:[#allocation7 + $0x80] sm:$0xff]
    %v225 = vld [vmem:[#allocation7 + $0x88] sm:$0xff]
    %v226 = vld [vmem:[#allocation7 + $0x90] sm:$0xff]
    %v227 = vld [vmem:[#allocation7 + $0x98] sm:$0xff]
    %v228 = vld [vmem:[#allocation7 + $0xa0] sm:$0xff]
    %v229 = vld [vmem:[#allocation7 + $0xa8] sm:$0xff]
    %v230 = vld [vmem:[#allocation7 + $0xb0] sm:$0xff]
    %v231 = vld [vmem:[#allocation7 + $0xb8] sm:$0xff]
    %v232 = vld [vmem:[#allocation7 + $0xc0] sm:$0xff]
    %v233 = vld [vmem:[#allocation7 + $0xc8] sm:$0xff]
    %v234 = vld [vmem:[#allocation7 + $0xd0] sm:$0xff]
    %v235 = vld [vmem:[#allocation7 + $0xd8] sm:$0xff]
    %v236 = vld [vmem:[#allocation7 + $0xe0] sm:$0xff]
    %v237 = vld [vmem:[#allocation7 + $0xe8] sm:$0xff]
    %v238 = vld [vmem:[#allocation7 + $0xf0] sm:$0xff]
    %v239 = vld [vmem:[#allocation7 + $0xf8] sm:$0xff]
    %v240 = vld [vmem:[#allocation7 + $0x100] sm:$0xff]
    %v241 = vld [vmem:[#allocation7 + $0x108] sm:$0xff]
    %v242 = vld [vmem:[#allocation7 + $0x110] sm:$0xff]
    %v243 = vld [vmem:[#allocation7 + $0x118] sm:$0xff]
    %v244 = vld [vmem:[#allocation7 + $0x120] sm:$0xff]
    %v245 = vld [vmem:[#allocation7 + $0x128] sm:$0xff]
    %v246 = vld [vmem:[#allocation7 + $0x130] sm:$0xff]
    %v247 = vld [vmem:[#allocation7 + $0x138] sm:$0xff]
    %v248 = vld [vmem:[#allocation7 + $0x140] sm:$0xff]
    %v249 = vld [vmem:[#allocation7 + $0x148] sm:$0xff]
    %v250 = vld [vmem:[#allocation7 + $0x150] sm:$0xff]
    %v251 = vld [vmem:[#allocation7 + $0x158] sm:$0xff]
    %v252 = vld [vmem:[#allocation7 + $0x160] sm:$0xff]
    %v253 = vld [vmem:[#allocation7 + $0x168] sm:$0xff]
    %v254 = vld [vmem:[#allocation7 + $0x170] sm:$0xff]
    %v255 = vld [vmem:[#allocation7 + $0x178] sm:$0xff]
    %v256 = vld [vmem:[#allocation8] sm:$0x3f]
    %v258 = vperm.slane %v256, 0
    %v259 = vperm.slane %v256, 1
    %v260 = vperm.slane %v256, 2
    %v261 = vperm.slane %v256, 3
    %v262 = vperm.slane %v256, 4
    %v263 = vperm.slane %v256, 5
    %v318 = vunpack.c.l.b16 %v208
    %v319 = vunpack.c.h.b16 %v208
    %v320 = vunpack.c.l.b16 %v209
    %v321 = vunpack.c.h.b16 %v209
    %v322 = vunpack.c.l.b16 %v210
    %v323 = vunpack.c.h.b16 %v210
    %v324 = vunpack.c.l.b16 %v211
    %v325 = vunpack.c.h.b16 %v211
    %v326 = vunpack.c.l.b16 %v212
    %v327 = vunpack.c.h.b16 %v212
    %v328 = vunpack.c.l.b16 %v213
    %v329 = vunpack.c.h.b16 %v213
    %v330 = vunpack.c.l.b16 %v214
    %v331 = vunpack.c.h.b16 %v214
    %v332 = vunpack.c.l.b16 %v215
    %v333 = vunpack.c.h.b16 %v215
    %v334 = vunpack.c.l.b16 %v216
    %v335 = vunpack.c.h.b16 %v216
    %v336 = vunpack.c.l.b16 %v217
    %v337 = vunpack.c.h.b16 %v217
    %v338 = vunpack.c.l.b16 %v218
    %v339 = vunpack.c.h.b16 %v218
    %v340 = vunpack.c.l.b16 %v219
    %v341 = vunpack.c.h.b16 %v219
    %v342 = vunpack.c.l.b16 %v220
    %v343 = vunpack.c.h.b16 %v220
    %v344 = vunpack.c.l.b16 %v221
    %v345 = vunpack.c.h.b16 %v221
    %v346 = vunpack.c.l.b16 %v222
    %v347 = vunpack.c.h.b16 %v222
    %v348 = vunpack.c.l.b16 %v223
    %v349 = vunpack.c.h.b16 %v223
    %v350 = vunpack.c.l.b16 %v224
    %v351 = vunpack.c.h.b16 %v224
    %v352 = vunpack.c.l.b16 %v225
    %v353 = vunpack.c.h.b16 %v225
    %v354 = vunpack.c.l.b16 %v226
    %v355 = vunpack.c.h.b16 %v226
    %v356 = vunpack.c.l.b16 %v227
    %v357 = vunpack.c.h.b16 %v227
    %v358 = vunpack.c.l.b16 %v228
    %v359 = vunpack.c.h.b16 %v228
    %v360 = vunpack.c.l.b16 %v229
    %v361 = vunpack.c.h.b16 %v229
    %v362 = vunpack.c.l.b16 %v230
    %v363 = vunpack.c.h.b16 %v230
    %v364 = vunpack.c.l.b16 %v231
    %v365 = vunpack.c.h.b16 %v231
    %v366 = vunpack.c.l.b16 %v232
    %v367 = vunpack.c.h.b16 %v232
    %v368 = vunpack.c.l.b16 %v233
    %v369 = vunpack.c.h.b16 %v233
    %v370 = vunpack.c.l.b16 %v234
    %v371 = vunpack.c.h.b16 %v234
    %v372 = vunpack.c.l.b16 %v235
    %v373 = vunpack.c.h.b16 %v235
    %v374 = vunpack.c.l.b16 %v236
    %v375 = vunpack.c.h.b16 %v236
    %v376 = vunpack.c.l.b16 %v237
    %v377 = vunpack.c.h.b16 %v237
    %v378 = vunpack.c.l.b16 %v238
    %v379 = vunpack.c.h.b16 %v238
    %v380 = vunpack.c.l.b16 %v239
    %v381 = vunpack.c.h.b16 %v239
    %v382 = vunpack.c.l.b16 %v240
    %v383 = vunpack.c.h.b16 %v240
    %v384 = vunpack.c.l.b16 %v241
    %v385 = vunpack.c.h.b16 %v241
    %v386 = vunpack.c.l.b16 %v242
    %v387 = vunpack.c.h.b16 %v242
    %v388 = vunpack.c.l.b16 %v243
    %v389 = vunpack.c.h.b16 %v243
    %v390 = vunpack.c.l.b16 %v244
    %v391 = vunpack.c.h.b16 %v244
    %v392 = vunpack.c.l.b16 %v245
    %v393 = vunpack.c.h.b16 %v245
    %v394 = vunpack.c.l.b16 %v246
    %v395 = vunpack.c.h.b16 %v246
    %v396 = vunpack.c.l.b16 %v247
    %v397 = vunpack.c.h.b16 %v247
    %v398 = vunpack.c.l.b16 %v248
    %v399 = vunpack.c.h.b16 %v248
    %v400 = vunpack.c.l.b16 %v249
    %v401 = vunpack.c.h.b16 %v249
    %v402 = vunpack.c.l.b16 %v250
    %v403 = vunpack.c.h.b16 %v250
    %v404 = vunpack.c.l.b16 %v251
    %v405 = vunpack.c.h.b16 %v251
    %v406 = vunpack.c.l.b16 %v252
    %v407 = vunpack.c.h.b16 %v252
    %v408 = vunpack.c.l.b16 %v253
    %v409 = vunpack.c.h.b16 %v253
    %v410 = vunpack.c.l.b16 %v254
    %v411 = vunpack.c.h.b16 %v254
    %v412 = vunpack.c.l.b16 %v255
    %v413 = vunpack.c.h.b16 %v255
    %v414 = vpack.c.b16 %v324, %v318
    %v415 = vpack.c.b16 %v325, %v319
    %v416 = vpack.c.b16 %v326, %v320
    %v417 = vpack.c.b16 %v327, %v321
    %v418 = vpack.c.b16 %v328, %v322
    %v419 = vpack.c.b16 %v329, %v323
    %v420 = vpack.c.b16 %v336, %v330
    %v421 = vpack.c.b16 %v337, %v331
    %v422 = vpack.c.b16 %v338, %v332
    %v423 = vpack.c.b16 %v339, %v333
    %v424 = vpack.c.b16 %v340, %v334
    %v425 = vpack.c.b16 %v341, %v335
    %v426 = vpack.c.b16 %v348, %v342
    %v427 = vpack.c.b16 %v349, %v343
    %v428 = vpack.c.b16 %v350, %v344
    %v429 = vpack.c.b16 %v351, %v345
    %v430 = vpack.c.b16 %v352, %v346
    %v431 = vpack.c.b16 %v353, %v347
    %v432 = vpack.c.b16 %v360, %v354
    %v433 = vpack.c.b16 %v361, %v355
    %v434 = vpack.c.b16 %v362, %v356
    %v435 = vpack.c.b16 %v363, %v357
    %v436 = vpack.c.b16 %v364, %v358
    %v437 = vpack.c.b16 %v365, %v359
    %v438 = vpack.c.b16 %v372, %v366
    %v439 = vpack.c.b16 %v373, %v367
    %v440 = vpack.c.b16 %v374, %v368
    %v441 = vpack.c.b16 %v375, %v369
    %v442 = vpack.c.b16 %v376, %v370
    %v443 = vpack.c.b16 %v377, %v371
    %v444 = vpack.c.b16 %v384, %v378
    %v445 = vpack.c.b16 %v385, %v379
    %v446 = vpack.c.b16 %v386, %v380
    %v447 = vpack.c.b16 %v387, %v381
    %v448 = vpack.c.b16 %v388, %v382
    %v449 = vpack.c.b16 %v389, %v383
    %v450 = vpack.c.b16 %v396, %v390
    %v451 = vpack.c.b16 %v397, %v391
    %v452 = vpack.c.b16 %v398, %v392
    %v453 = vpack.c.b16 %v399, %v393
    %v454 = vpack.c.b16 %v400, %v394
    %v455 = vpack.c.b16 %v401, %v395
    %v456 = vpack.c.b16 %v408, %v402
    %v457 = vpack.c.b16 %v409, %v403
    %v458 = vpack.c.b16 %v410, %v404
    %v459 = vpack.c.b16 %v411, %v405
    %v460 = vpack.c.b16 %v412, %v406
    %v461 = vpack.c.b16 %v413, %v407
    %510 = vmatpush.bf16.msra.mxu0 %v456
    %511 = vmatpush.bf16.msra.mxu0 %v450
    %512 = vmatpush.bf16.msra.mxu0 %v444
    %513 = vmatpush.bf16.msra.mxu0 %v438
    %514 = vmatpush.bf16.msra.mxu0 %v432
    %515 = vmatpush.bf16.msra.mxu0 %v426
    %516 = vmatpush.bf16.msra.mxu0 %v420
    %517 = vmatpush.bf16.msra.mxu0 %v414
    %518 = vmatmul.bf16.gmra.mxu0 %v207
    %v519 = vpop.f32.mrf.mxu0
    %v520 = vadd.f32 %v258, %v519
    %v521 = vpop.f32.mrf.mxu0
    %v522 = vadd.f32 %v258, %v521
    %523 = vdwg.mxu0
    %524 = vmatpush.bf16.msra.mxu0 %v457
    %525 = vmatpush.bf16.msra.mxu0 %v451
    %526 = vmatpush.bf16.msra.mxu0 %v445
    %527 = vmatpush.bf16.msra.mxu0 %v439
    %528 = vmatpush.bf16.msra.mxu0 %v433
    %529 = vmatpush.bf16.msra.mxu0 %v427
    %530 = vmatpush.bf16.msra.mxu0 %v421
    %531 = vmatpush.bf16.msra.mxu0 %v415
    %532 = vmatmul.bf16.gmra.mxu0 %v207
    %v533 = vpop.f32.mrf.mxu0
    %v534 = vadd.f32 %v259, %v533
    %v535 = vpop.f32.mrf.mxu0
    %v536 = vadd.f32 %v259, %v535
    %537 = vdwg.mxu0
    %538 = vmatpush.bf16.msra.mxu0 %v458
    %539 = vmatpush.bf16.msra.mxu0 %v452
    %540 = vmatpush.bf16.msra.mxu0 %v446
    %541 = vmatpush.bf16.msra.mxu0 %v440
    %542 = vmatpush.bf16.msra.mxu0 %v434
    %543 = vmatpush.bf16.msra.mxu0 %v428
    %544 = vmatpush.bf16.msra.mxu0 %v422
    %545 = vmatpush.bf16.msra.mxu0 %v416
    %546 = vmatmul.bf16.gmra.mxu0 %v207
    %v547 = vpop.f32.mrf.mxu0
    %v548 = vadd.f32 %v260, %v547
    %v549 = vpop.f32.mrf.mxu0
    %v550 = vadd.f32 %v260, %v549
    %551 = vdwg.mxu0
    %552 = vmatpush.bf16.msra.mxu0 %v459
    %553 = vmatpush.bf16.msra.mxu0 %v453
    %554 = vmatpush.bf16.msra.mxu0 %v447
    %555 = vmatpush.bf16.msra.mxu0 %v441
    %556 = vmatpush.bf16.msra.mxu0 %v435
    %557 = vmatpush.bf16.msra.mxu0 %v429
    %558 = vmatpush.bf16.msra.mxu0 %v423
    %559 = vmatpush.bf16.msra.mxu0 %v417
    %560 = vmatmul.bf16.gmra.mxu0 %v207
    %v561 = vpop.f32.mrf.mxu0
    %v562 = vadd.f32 %v261, %v561
    %v563 = vpop.f32.mrf.mxu0
    %v564 = vadd.f32 %v261, %v563
    %565 = vdwg.mxu0
    %566 = vmatpush.bf16.msra.mxu0 %v460
    %567 = vmatpush.bf16.msra.mxu0 %v454
    %568 = vmatpush.bf16.msra.mxu0 %v448
    %569 = vmatpush.bf16.msra.mxu0 %v442
    %570 = vmatpush.bf16.msra.mxu0 %v436
    %571 = vmatpush.bf16.msra.mxu0 %v430
    %572 = vmatpush.bf16.msra.mxu0 %v424
    %573 = vmatpush.bf16.msra.mxu0 %v418
    %574 = vmatmul.bf16.gmra.mxu0 %v207
    %v575 = vpop.f32.mrf.mxu0
    %v576 = vadd.f32 %v262, %v575
    %v577 = vpop.f32.mrf.mxu0
    %v578 = vadd.f32 %v262, %v577
    %579 = vdwg.mxu0
    %580 = vmatpush.bf16.msra.mxu0 %v461
    %581 = vmatpush.bf16.msra.mxu0 %v455
    %582 = vmatpush.bf16.msra.mxu0 %v449
    %583 = vmatpush.bf16.msra.mxu0 %v443
    %584 = vmatpush.bf16.msra.mxu0 %v437
    %585 = vmatpush.bf16.msra.mxu0 %v431
    %586 = vmatpush.bf16.msra.mxu0 %v425
    %587 = vmatpush.bf16.msra.mxu0 %v419
    %588 = vmatmul.bf16.gmra.mxu0 %v207
    %v589 = vpop.f32.mrf.mxu0
    %v590 = vadd.f32 %v263, %v589
    %v591 = vpop.f32.mrf.mxu0
    %v592 = vadd.f32 %v263, %v591
    %593 = vdwg.mxu0
    %v594 = vpack.c.bf16 %v534, %v520
    %v595 = vpack.c.bf16 %v562, %v548
    %v596 = vpack.c.bf16 %v590, %v576
    %v597 = vpack.c.bf16 %v536, %v522
    %v598 = vpack.c.bf16 %v564, %v550
    %v599 = vpack.c.bf16 %v592, %v578
    %600 = vmatpush.bf16.xpose.msra.mxu0 0
    %601 = vmatpush.bf16.xpose.msra.mxu0 0
    %602 = vmatpush.bf16.xpose.msra.mxu0 0
    %603 = vmatpush.bf16.xpose.msra.mxu0 0
    %604 = vmatpush.bf16.xpose.msra.mxu0 0
    %605 = vmatpush.bf16.xpose.msra.mxu0 0
    %606 = vmatpush.bf16.xpose.msra.mxu0 0
    %607 = vmatpush.bf16.xpose.msra.mxu0 %v595
    %608 = vmatmul.bf16.gmra.mxu0 %v594
    %v609 = vpop.f32.mrf.mxu0
    %v610 = vadd.f32 %v202, %v609
    %v611 = vpop.f32.mrf.mxu0
    %612 = vdwg.mxu0
    %613 = vmatpush.bf16.xpose.msra.mxu0 0
    %614 = vmatpush.bf16.xpose.msra.mxu0 0
    %615 = vmatpush.bf16.xpose.msra.mxu0 0
    %616 = vmatpush.bf16.xpose.msra.mxu0 0
    %617 = vmatpush.bf16.xpose.msra.mxu0 0
    %618 = vmatpush.bf16.xpose.msra.mxu0 0
    %619 = vmatpush.bf16.xpose.msra.mxu0 0
    %620 = vmatpush.bf16.xpose.msra.mxu0 %v598
    %621 = vmatmul.bf16.gmra.mxu0 %v597
    %v622 = vpop.f32.mrf.mxu0
    %v623 = vadd.f32 %v203, %v622
    %v624 = vpop.f32.mrf.mxu0
    %625 = vdwg.mxu0
    %vm626 = vcmask 64512
    %v627 = vsel %vm626, %v610, -inf
    %628 = vmax.xlane.f32.xlu0 %v627
    %v629 = vpop.xlane.xlu0 %628
    %v630 = vsel %vm626, %v623, -inf
    %631 = vmax.xlane.f32.xlu0 %v630
    %v632 = vpop.xlane.xlu0 %631
    %v633 = vsub.f32 %v610, %v629
    %v634 = vsub.f32 %v623, %v632
    %v635 = vmul.f32 %v633, 1.442695
    %v636 = vpow.pop %v635
    %v637 = vmul.f32 %v634, 1.442695
    %v638 = vpow.pop %v637
    %v639 = vsel %vm626, %v636, 0.0
    %640 = vadd.xlane.f32.xlu0 %v639
    %v641 = vpop.xlane.xlu0 %640
    %v642 = vsel %vm626, %v638, 0.0
    %643 = vadd.xlane.f32.xlu0 %v642
    %v644 = vpop.xlane.xlu0 %643
    %v645 = vrcp.pop %v641
    %v646 = vrcp.pop %v644
    %v647 = vmul.f32 %v636, %v645
    %v648 = vmul.f32 %v638, %v646
    %v649 = vpack.c.bf16 %v647, %v647
    %v650 = vpack.c.bf16 %v648, %v648
    %v652 = vsel %vm626, %v649, 0
    %vm654 = vcmask 1043456
    %v656 = vsel %vm654, %v596, 0
    %658 = vmatpush.bf16.msra.mxu0 0
    %659 = vmatpush.bf16.msra.mxu0 0
    %660 = vmatpush.bf16.msra.mxu0 0
    %661 = vmatpush.bf16.msra.mxu0 0
    %662 = vmatpush.bf16.msra.mxu0 0
    %663 = vmatpush.bf16.msra.mxu0 0
    %664 = vmatpush.bf16.msra.mxu0 0
    %665 = vmatpush.bf16.msra.mxu0 %v656
    %666 = vmatmul.bf16.gmra.mxu0 %v652
    %v667 = vpop.f32.mrf.mxu0
    %v668 = vadd.f32 0.0, %v667
    %v669 = vpop.f32.mrf.mxu0
    %670 = vdwg.mxu0
    %v672 = vsel %vm626, %v650, 0
    %v675 = vsel %vm654, %v599, 0
    %677 = vmatpush.bf16.msra.mxu0 0
    %678 = vmatpush.bf16.msra.mxu0 0
    %679 = vmatpush.bf16.msra.mxu0 0
    %680 = vmatpush.bf16.msra.mxu0 0
    %681 = vmatpush.bf16.msra.mxu0 0
    %682 = vmatpush.bf16.msra.mxu0 0
    %683 = vmatpush.bf16.msra.mxu0 0
    %684 = vmatpush.bf16.msra.mxu0 %v675
    %685 = vmatmul.bf16.gmra.mxu0 %v672
    %v686 = vpop.f32.mrf.mxu0
    %v687 = vadd.f32 0.0, %v686
    %v688 = vpop.f32.mrf.mxu0
    %689 = vdwg.mxu0
    %v690 = vpack.c.bf16 %v668, %v668
    %v691 = vpack.c.bf16 %v687, %v687
    %v694 = vrot.slane %v594, 4
    %v695 = vrot.slane %v597, 4
    %v700 = vrot.slane %v595, 4
    %v701 = vrot.slane %v598, 4
    %v706 = vrot.slane %v596, 4
    %v707 = vrot.slane %v599, 4
    %708 = vmatpush.bf16.xpose.msra.mxu0 0
    %709 = vmatpush.bf16.xpose.msra.mxu0 0
    %710 = vmatpush.bf16.xpose.msra.mxu0 0
    %711 = vmatpush.bf16.xpose.msra.mxu0 0
    %712 = vmatpush.bf16.xpose.msra.mxu0 0
    %713 = vmatpush.bf16.xpose.msra.mxu0 0
    %714 = vmatpush.bf16.xpose.msra.mxu0 0
    %715 = vmatpush.bf16.xpose.msra.mxu0 %v700
    %716 = vmatmul.bf16.gmra.mxu0 %v694
    %v717 = vpop.f32.mrf.mxu0
    %v718 = vadd.f32 %v202, %v717
    %v719 = vpop.f32.mrf.mxu0
    %720 = vdwg.mxu0
    %721 = vmatpush.bf16.xpose.msra.mxu0 0
    %722 = vmatpush.bf16.xpose.msra.mxu0 0
    %723 = vmatpush.bf16.xpose.msra.mxu0 0
    %724 = vmatpush.bf16.xpose.msra.mxu0 0
    %725 = vmatpush.bf16.xpose.msra.mxu0 0
    %726 = vmatpush.bf16.xpose.msra.mxu0 0
    %727 = vmatpush.bf16.xpose.msra.mxu0 0
    %728 = vmatpush.bf16.xpose.msra.mxu0 %v701
    %729 = vmatmul.bf16.gmra.mxu0 %v695
    %v730 = vpop.f32.mrf.mxu0
    %v731 = vadd.f32 %v203, %v730
    %v732 = vpop.f32.mrf.mxu0
    %733 = vdwg.mxu0
    %v734 = vsel %vm626, %v718, -inf
    %735 = vmax.xlane.f32.xlu0 %v734
    %v736 = vpop.xlane.xlu0 %735
    %v737 = vsel %vm626, %v731, -inf
    %738 = vmax.xlane.f32.xlu0 %v737
    %v739 = vpop.xlane.xlu0 %738
    %v740 = vsub.f32 %v718, %v736
    %v741 = vsub.f32 %v731, %v739
    %v742 = vmul.f32 %v740, 1.442695
    %v743 = vpow.pop %v742
    %v744 = vmul.f32 %v741, 1.442695
    %v745 = vpow.pop %v744
    %v746 = vsel %vm626, %v743, 0.0
    %747 = vadd.xlane.f32.xlu0 %v746
    %v748 = vpop.xlane.xlu0 %747
    %v749 = vsel %vm626, %v745, 0.0
    %750 = vadd.xlane.f32.xlu0 %v749
    %v751 = vpop.xlane.xlu0 %750
    %v752 = vrcp.pop %v748
    %v753 = vrcp.pop %v751
    %v754 = vmul.f32 %v743, %v752
    %v755 = vmul.f32 %v745, %v753
    %v756 = vpack.c.bf16 %v754, %v754
    %v757 = vpack.c.bf16 %v755, %v755
    %v759 = vsel %vm626, %v756, 0
    %v762 = vsel %vm654, %v706, 0
    %764 = vmatpush.bf16.msra.mxu0 0
    %765 = vmatpush.bf16.msra.mxu0 0
    %766 = vmatpush.bf16.msra.mxu0 0
    %767 = vmatpush.bf16.msra.mxu0 0
    %768 = vmatpush.bf16.msra.mxu0 0
    %769 = vmatpush.bf16.msra.mxu0 0
    %770 = vmatpush.bf16.msra.mxu0 0
    %771 = vmatpush.bf16.msra.mxu0 %v762
    %772 = vmatmul.bf16.gmra.mxu0 %v759
    %v773 = vpop.f32.mrf.mxu0
    %v774 = vadd.f32 0.0, %v773
    %v775 = vpop.f32.mrf.mxu0
    %776 = vdwg.mxu0
    %v778 = vsel %vm626, %v757, 0
    %v781 = vsel %vm654, %v707, 0
    %783 = vmatpush.bf16.msra.mxu0 0
    %784 = vmatpush.bf16.msra.mxu0 0
    %785 = vmatpush.bf16.msra.mxu0 0
    %786 = vmatpush.bf16.msra.mxu0 0
    %787 = vmatpush.bf16.msra.mxu0 0
    %788 = vmatpush.bf16.msra.mxu0 0
    %789 = vmatpush.bf16.msra.mxu0 0
    %790 = vmatpush.bf16.msra.mxu0 %v781
    %791 = vmatmul.bf16.gmra.mxu0 %v778
    %v792 = vpop.f32.mrf.mxu0
    %v793 = vadd.f32 0.0, %v792
    %v794 = vpop.f32.mrf.mxu0
    %795 = vdwg.mxu0
    %v796 = vpack.c.bf16 %v774, %v774
    %v797 = vpack.c.bf16 %v793, %v793
    %v800 = vunpack.c.l.b16 %v690
    %v801 = vunpack.c.l.b16 %v691
    %v802 = vpack.c.b16 %v801, %v800
    %v806 = vunpack.c.l.b16 %v796
    %v807 = vunpack.c.l.b16 %v797
    %v808 = vpack.c.b16 %v807, %v806
    %v810 = vld [vmem:[#allocation10] sm:$0xf]
    %v811 = vld [vmem:[#allocation10 + $0x4] sm:$0xf]
    %v812 = vld [vmem:[#allocation10 + $0x8] sm:$0xf]
    %v813 = vld [vmem:[#allocation10 + $0xc] sm:$0xf]
    %v814 = vld [vmem:[#allocation10 + $0x10] sm:$0xf]
    %v815 = vld [vmem:[#allocation10 + $0x14] sm:$0xf]
    %v816 = vld [vmem:[#allocation10 + $0x18] sm:$0xf]
    %v817 = vld [vmem:[#allocation10 + $0x1c] sm:$0xf]
    %v818 = vld [vmem:[#allocation10 + $0x20] sm:$0xf]
    %v819 = vld [vmem:[#allocation10 + $0x24] sm:$0xf]
    %v820 = vld [vmem:[#allocation10 + $0x28] sm:$0xf]
    %v821 = vld [vmem:[#allocation10 + $0x2c] sm:$0xf]
    %v822 = vld [vmem:[#allocation10 + $0x30] sm:$0xf]
    %v823 = vld [vmem:[#allocation10 + $0x34] sm:$0xf]
    %v824 = vld [vmem:[#allocation10 + $0x38] sm:$0xf]
    %v825 = vld [vmem:[#allocation10 + $0x3c] sm:$0xf]
    %v826 = vld [vmem:[#allocation10 + $0x40] sm:$0xf]
    %v827 = vld [vmem:[#allocation10 + $0x44] sm:$0xf]
    %v828 = vld [vmem:[#allocation10 + $0x48] sm:$0xf]
    %v829 = vld [vmem:[#allocation10 + $0x4c] sm:$0xf]
    %v830 = vld [vmem:[#allocation10 + $0x50] sm:$0xf]
    %v831 = vld [vmem:[#allocation10 + $0x54] sm:$0xf]
    %v832 = vld [vmem:[#allocation10 + $0x58] sm:$0xf]
    %v833 = vld [vmem:[#allocation10 + $0x5c] sm:$0xf]
    %v834 = vld [vmem:[#allocation10 + $0x60] sm:$0xf]
    %v835 = vld [vmem:[#allocation10 + $0x64] sm:$0xf]
    %v836 = vld [vmem:[#allocation10 + $0x68] sm:$0xf]
    %v837 = vld [vmem:[#allocation10 + $0x6c] sm:$0xf]
    %v838 = vld [vmem:[#allocation10 + $0x70] sm:$0xf]
    %v839 = vld [vmem:[#allocation10 + $0x74] sm:$0xf]
    %v840 = vld [vmem:[#allocation10 + $0x78] sm:$0xf]
    %v841 = vld [vmem:[#allocation10 + $0x7c] sm:$0xf]
    %v842 = vld [vmem:[#allocation11] sm:$0x1]
    %v844 = vperm.slane %v842, 0
    %v878 = vunpack.c.l.b16 %v810
    %v879 = vunpack.c.l.b16 %v811
    %v880 = vunpack.c.l.b16 %v812
    %v881 = vunpack.c.l.b16 %v813
    %v882 = vunpack.c.l.b16 %v814
    %v883 = vunpack.c.l.b16 %v815
    %v884 = vunpack.c.l.b16 %v816
    %v885 = vunpack.c.l.b16 %v817
    %v886 = vunpack.c.l.b16 %v818
    %v887 = vunpack.c.l.b16 %v819
    %v888 = vunpack.c.l.b16 %v820
    %v889 = vunpack.c.l.b16 %v821
    %v890 = vunpack.c.l.b16 %v822
    %v891 = vunpack.c.l.b16 %v823
    %v892 = vunpack.c.l.b16 %v824
    %v893 = vunpack.c.l.b16 %v825
    %v894 = vunpack.c.l.b16 %v826
    %v895 = vunpack.c.l.b16 %v827
    %v896 = vunpack.c.l.b16 %v828
    %v897 = vunpack.c.l.b16 %v829
    %v898 = vunpack.c.l.b16 %v830
    %v899 = vunpack.c.l.b16 %v831
    %v900 = vunpack.c.l.b16 %v832
    %v901 = vunpack.c.l.b16 %v833
    %v902 = vunpack.c.l.b16 %v834
    %v903 = vunpack.c.l.b16 %v835
    %v904 = vunpack.c.l.b16 %v836
    %v905 = vunpack.c.l.b16 %v837
    %v906 = vunpack.c.l.b16 %v838
    %v907 = vunpack.c.l.b16 %v839
    %v908 = vunpack.c.l.b16 %v840
    %v909 = vunpack.c.l.b16 %v841
    %v910 = vpack.c.b16 %v879, %v878
    %v911 = vpack.c.b16 %v881, %v880
    %v912 = vpack.c.b16 %v883, %v882
    %v913 = vpack.c.b16 %v885, %v884
    %v914 = vpack.c.b16 %v887, %v886
    %v915 = vpack.c.b16 %v889, %v888
    %v916 = vpack.c.b16 %v891, %v890
    %v917 = vpack.c.b16 %v893, %v892
    %v918 = vpack.c.b16 %v895, %v894
    %v919 = vpack.c.b16 %v897, %v896
    %v920 = vpack.c.b16 %v899, %v898
    %v921 = vpack.c.b16 %v901, %v900
    %v922 = vpack.c.b16 %v903, %v902
    %v923 = vpack.c.b16 %v905, %v904
    %v924 = vpack.c.b16 %v907, %v906
    %v925 = vpack.c.b16 %v909, %v908
    %942 = vmatpush.bf16.msra.mxu0 %v917
    %943 = vmatpush.bf16.msra.mxu0 %v916
    %944 = vmatpush.bf16.msra.mxu0 %v915
    %945 = vmatpush.bf16.msra.mxu0 %v914
    %946 = vmatpush.bf16.msra.mxu0 %v913
    %947 = vmatpush.bf16.msra.mxu0 %v912
    %948 = vmatpush.bf16.msra.mxu0 %v911
    %949 = vmatpush.bf16.msra.mxu0 %v910
    %950 = vmatmul.bf16.gmra.mxu0 %v802
    %v951 = vpop.f32.mrf.mxu0
    %v952 = vadd.f32 %v844, %v951
    %v953 = vpop.f32.mrf.mxu0
    %v954 = vadd.f32 %v844, %v953
    %955 = vdwg.mxu0
    %956 = vmatpush.bf16.msra.mxu0 %v925
    %957 = vmatpush.bf16.msra.mxu0 %v924
    %958 = vmatpush.bf16.msra.mxu0 %v923
    %959 = vmatpush.bf16.msra.mxu0 %v922
    %960 = vmatpush.bf16.msra.mxu0 %v921
    %961 = vmatpush.bf16.msra.mxu0 %v920
    %962 = vmatpush.bf16.msra.mxu0 %v919
    %963 = vmatpush.bf16.msra.mxu0 %v918
    %964 = vmatmul.bf16.gmra.mxu0 %v808
    %v965 = vpop.f32.mrf.mxu0
    %v966 = vadd.f32 %v952, %v965
    %v967 = vpop.f32.mrf.mxu0
    %v968 = vadd.f32 %v954, %v967
    %969 = vdwg.mxu0
    %v970 = vadd.f32 %v196, %v966
    %v971 = vadd.f32 %v197, %v968
    %972 = vadd.xlane.f32.xlu0 %v970
    %v973 = vpop.xlane.xlu0 %972
    %974 = vadd.xlane.f32.xlu0 %v971
    %v975 = vpop.xlane.xlu0 %974
    %v976 = vmul.f32 %v973, 0.03125
    %v977 = vmul.f32 %v975, 0.03125
    %v978 = vmul.f32 %v970, %v970
    %v979 = vmul.f32 %v971, %v971
    %980 = vadd.xlane.f32.xlu0 %v978
    %v981 = vpop.xlane.xlu0 %980
    %982 = vadd.xlane.f32.xlu0 %v979
    %v983 = vpop.xlane.xlu0 %982
    %v984 = vmul.f32 %v981, 0.03125
    %v985 = vmul.f32 %v983, 0.03125
    %v986 = vmul.f32 %v976, %v976
    %v987 = vmul.f32 %v977, %v977
    %v988 = vsub.f32 %v984, %v986
    %v989 = vsub.f32 %v985, %v987
    %v990 = vmax.f32 %v988, 0.0
    %v991 = vmax.f32 %v989, 0.0
    %v992 = vsub.f32 %v970, %v976
    %v993 = vsub.f32 %v971, %v977
    %v994 = vadd.f32 %v990, 1e-05
    %v995 = vadd.f32 %v991, 1e-05
    %v996 = vrsqrt.pop %v994
    %v997 = vmul.f32 %v996, %v994
    %v998 = vmul.f32 %v997, %v996
    %v999 = vmul.f32 0.5, %v998
    %v1000 = vsub.f32 1.5, %v999
    %v1001 = vmul.f32 %v996, %v1000
    %vm1002 = vweird.f32 %v994
    %vm1003 = vweird.f32 %v996
    %vm1004 = vmor %vm1002, %vm1003
    %v1005 = vsel %vm1004, %v996, %v1001
    %v1006 = vrsqrt.pop %v995
    %v1007 = vmul.f32 %v1006, %v995
    %v1008 = vmul.f32 %v1007, %v1006
    %v1009 = vmul.f32 0.5, %v1008
    %v1010 = vsub.f32 1.5, %v1009
    %v1011 = vmul.f32 %v1006, %v1010
    %vm1012 = vweird.f32 %v995
    %vm1013 = vweird.f32 %v1006
    %vm1014 = vmor %vm1012, %vm1013
    %v1015 = vsel %vm1014, %v1006, %v1011
    %v1016 = vmul.f32 %v992, %v1005
    %v1017 = vmul.f32 %v993, %v1015
    %v1018 = vperm.slane %v206, 0
    %v1019 = vmul.f32 %v1016, %v1018
    %v1020 = vmul.f32 %v1017, %v1018
    %v1021 = vperm.slane %v206, 1
    %v1022 = vadd.f32 %v1019, %v1021
    %v1023 = vadd.f32 %v1020, %v1021
    %v1024 = vpack.c.bf16 %v1023, %v1022
    %v1025 = vld [vmem:[#allocation13] sm:$0xf]
    %v1026 = vld [vmem:[#allocation13 + $0x4] sm:$0xf]
    %v1027 = vld [vmem:[#allocation13 + $0x8] sm:$0xf]
    %v1028 = vld [vmem:[#allocation13 + $0xc] sm:$0xf]
    %v1029 = vld [vmem:[#allocation13 + $0x10] sm:$0xf]
    %v1030 = vld [vmem:[#allocation13 + $0x14] sm:$0xf]
    %v1031 = vld [vmem:[#allocation13 + $0x18] sm:$0xf]
    %v1032 = vld [vmem:[#allocation13 + $0x1c] sm:$0xf]
    %v1033 = vld [vmem:[#allocation13 + $0x20] sm:$0xf]
    %v1034 = vld [vmem:[#allocation13 + $0x24] sm:$0xf]
    %v1035 = vld [vmem:[#allocation13 + $0x28] sm:$0xf]
    %v1036 = vld [vmem:[#allocation13 + $0x2c] sm:$0xf]
    %v1037 = vld [vmem:[#allocation13 + $0x30] sm:$0xf]
    %v1038 = vld [vmem:[#allocation13 + $0x34] sm:$0xf]
    %v1039 = vld [vmem:[#allocation13 + $0x38] sm:$0xf]
    %v1040 = vld [vmem:[#allocation13 + $0x3c] sm:$0xf]
    %v1041 = vld [vmem:[#allocation14] sm:$0x1]
    %v1043 = vperm.slane %v1041, 0
    %v1061 = vunpack.c.l.b16 %v1025
    %v1062 = vunpack.c.l.b16 %v1026
    %v1063 = vunpack.c.l.b16 %v1027
    %v1064 = vunpack.c.l.b16 %v1028
    %v1065 = vunpack.c.l.b16 %v1029
    %v1066 = vunpack.c.l.b16 %v1030
    %v1067 = vunpack.c.l.b16 %v1031
    %v1068 = vunpack.c.l.b16 %v1032
    %v1069 = vunpack.c.l.b16 %v1033
    %v1070 = vunpack.c.l.b16 %v1034
    %v1071 = vunpack.c.l.b16 %v1035
    %v1072 = vunpack.c.l.b16 %v1036
    %v1073 = vunpack.c.l.b16 %v1037
    %v1074 = vunpack.c.l.b16 %v1038
    %v1075 = vunpack.c.l.b16 %v1039
    %v1076 = vunpack.c.l.b16 %v1040
    %v1077 = vpack.c.b16 %v1062, %v1061
    %v1078 = vpack.c.b16 %v1064, %v1063
    %v1079 = vpack.c.b16 %v1066, %v1065
    %v1080 = vpack.c.b16 %v1068, %v1067
    %v1081 = vpack.c.b16 %v1070, %v1069
    %v1082 = vpack.c.b16 %v1072, %v1071
    %v1083 = vpack.c.b16 %v1074, %v1073
    %v1084 = vpack.c.b16 %v1076, %v1075
    %1093 = vmatpush.bf16.msra.mxu0 %v1084
    %1094 = vmatpush.bf16.msra.mxu0 %v1083
    %1095 = vmatpush.bf16.msra.mxu0 %v1082
    %1096 = vmatpush.bf16.msra.mxu0 %v1081
    %1097 = vmatpush.bf16.msra.mxu0 %v1080
    %1098 = vmatpush.bf16.msra.mxu0 %v1079
    %1099 = vmatpush.bf16.msra.mxu0 %v1078
    %1100 = vmatpush.bf16.msra.mxu0 %v1077
    %1101 = vmatmul.bf16.gmra.mxu0 %v1024
    %v1102 = vpop.f32.mrf.mxu0
    %v1103 = vadd.f32 %v1043, %v1102
    %v1104 = vpop.f32.mrf.mxu0
    %v1105 = vadd.f32 %v1043, %v1104
    %1106 = vdwg.mxu0
    %v1107 = vmax.f32 %v1103, 0.0
    %v1108 = vmax.f32 %v1105, 0.0
    %v1109 = vpack.c.bf16 %v1108, %v1107
    %v1110 = vld [vmem:[#allocation16] sm:$0xf]
    %v1111 = vld [vmem:[#allocation16 + $0x4] sm:$0xf]
    %v1112 = vld [vmem:[#allocation16 + $0x8] sm:$0xf]
    %v1113 = vld [vmem:[#allocation16 + $0xc] sm:$0xf]
    %v1114 = vld [vmem:[#allocation16 + $0x10] sm:$0xf]
    %v1115 = vld [vmem:[#allocation16 + $0x14] sm:$0xf]
    %v1116 = vld [vmem:[#allocation16 + $0x18] sm:$0xf]
    %v1117 = vld [vmem:[#allocation16 + $0x1c] sm:$0xf]
    %v1118 = vld [vmem:[#allocation16 + $0x20] sm:$0xf]
    %v1119 = vld [vmem:[#allocation16 + $0x24] sm:$0xf]
    %v1120 = vld [vmem:[#allocation16 + $0x28] sm:$0xf]
    %v1121 = vld [vmem:[#allocation16 + $0x2c] sm:$0xf]
    %v1122 = vld [vmem:[#allocation16 + $0x30] sm:$0xf]
    %v1123 = vld [vmem:[#allocation16 + $0x34] sm:$0xf]
    %v1124 = vld [vmem:[#allocation16 + $0x38] sm:$0xf]
    %v1125 = vld [vmem:[#allocation16 + $0x3c] sm:$0xf]
    %v1126 = vld [vmem:[#allocation17] sm:$0x1]
    %v1128 = vperm.slane %v1126, 0
    %v1146 = vunpack.c.l.b16 %v1110
    %v1147 = vunpack.c.l.b16 %v1111
    %v1148 = vunpack.c.l.b16 %v1112
    %v1149 = vunpack.c.l.b16 %v1113
    %v1150 = vunpack.c.l.b16 %v1114
    %v1151 = vunpack.c.l.b16 %v1115
    %v1152 = vunpack.c.l.b16 %v1116
    %v1153 = vunpack.c.l.b16 %v1117
    %v1154 = vunpack.c.l.b16 %v1118
    %v1155 = vunpack.c.l.b16 %v1119
    %v1156 = vunpack.c.l.b16 %v1120
    %v1157 = vunpack.c.l.b16 %v1121
    %v1158 = vunpack.c.l.b16 %v1122
    %v1159 = vunpack.c.l.b16 %v1123
    %v1160 = vunpack.c.l.b16 %v1124
    %v1161 = vunpack.c.l.b16 %v1125
    %v1162 = vpack.c.b16 %v1147, %v1146
    %v1163 = vpack.c.b16 %v1149, %v1148
    %v1164 = vpack.c.b16 %v1151, %v1150
    %v1165 = vpack.c.b16 %v1153, %v1152
    %v1166 = vpack.c.b16 %v1155, %v1154
    %v1167 = vpack.c.b16 %v1157, %v1156
    %v1168 = vpack.c.b16 %v1159, %v1158
    %v1169 = vpack.c.b16 %v1161, %v1160
    %1178 = vmatpush.bf16.msra.mxu0 %v1169
    %1179 = vmatpush.bf16.msra.mxu0 %v1168
    %1180 = vmatpush.bf16.msra.mxu0 %v1167
    %1181 = vmatpush.bf16.msra.mxu0 %v1166
    %1182 = vmatpush.bf16.msra.mxu0 %v1165
    %1183 = vmatpush.bf16.msra.mxu0 %v1164
    %1184 = vmatpush.bf16.msra.mxu0 %v1163
    %1185 = vmatpush.bf16.msra.mxu0 %v1162
    %1186 = vmatmul.bf16.gmra.mxu0 %v1109
    %v1187 = vpop.f32.mrf.mxu0
    %v1188 = vadd.f32 %v1128, %v1187
    %v1189 = vpop.f32.mrf.mxu0
    %v1190 = vadd.f32 %v1128, %v1189
    %1191 = vdwg.mxu0
    %v1192 = vadd.f32 %v1022, %v1188
    %v1193 = vadd.f32 %v1023, %v1190
    %1194 = vadd.xlane.f32.xlu0 %v1192
    %v1195 = vpop.xlane.xlu0 %1194
    %1196 = vadd.xlane.f32.xlu0 %v1193
    %v1197 = vpop.xlane.xlu0 %1196
    %v1198 = vmul.f32 %v1195, 0.03125
    %v1199 = vmul.f32 %v1197, 0.03125
    %v1200 = vmul.f32 %v1192, %v1192
    %v1201 = vmul.f32 %v1193, %v1193
    %1202 = vadd.xlane.f32.xlu0 %v1200
    %v1203 = vpop.xlane.xlu0 %1202
    %1204 = vadd.xlane.f32.xlu0 %v1201
    %v1205 = vpop.xlane.xlu0 %1204
    %v1206 = vmul.f32 %v1203, 0.03125
    %v1207 = vmul.f32 %v1205, 0.03125
    %v1208 = vmul.f32 %v1198, %v1198
    %v1209 = vmul.f32 %v1199, %v1199
    %v1210 = vsub.f32 %v1206, %v1208
    %v1211 = vsub.f32 %v1207, %v1209
    %v1212 = vmax.f32 %v1210, 0.0
    %v1213 = vmax.f32 %v1211, 0.0
    %v1214 = vsub.f32 %v1192, %v1198
    %v1215 = vsub.f32 %v1193, %v1199
    %v1216 = vadd.f32 %v1212, 1e-05
    %v1217 = vadd.f32 %v1213, 1e-05
    %v1218 = vrsqrt.pop %v1216
    %v1219 = vmul.f32 %v1218, %v1216
    %v1220 = vmul.f32 %v1219, %v1218
    %v1221 = vmul.f32 0.5, %v1220
    %v1222 = vsub.f32 1.5, %v1221
    %v1223 = vmul.f32 %v1218, %v1222
    %vm1224 = vweird.f32 %v1216
    %vm1225 = vweird.f32 %v1218
    %vm1226 = vmor %vm1224, %vm1225
    %v1227 = vsel %vm1226, %v1218, %v1223
    %v1228 = vrsqrt.pop %v1217
    %v1229 = vmul.f32 %v1228, %v1217
    %v1230 = vmul.f32 %v1229, %v1228
    %v1231 = vmul.f32 0.5, %v1230
    %v1232 = vsub.f32 1.5, %v1231
    %v1233 = vmul.f32 %v1228, %v1232
    %vm1234 = vweird.f32 %v1217
    %vm1235 = vweird.f32 %v1228
    %vm1236 = vmor %vm1234, %vm1235
    %v1237 = vsel %vm1236, %v1228, %v1233
    %v1238 = vmul.f32 %v1214, %v1227
    %v1239 = vmul.f32 %v1215, %v1237
    %v1240 = vperm.slane %v206, 2
    %v1241 = vmul.f32 %v1238, %v1240
    %v1242 = vmul.f32 %v1239, %v1240
    %v1243 = vperm.slane %v206, 3
    %v1244 = vadd.f32 %v1241, %v1243
    %v1245 = vadd.f32 %v1242, %v1243
    %s1246 = scalar_lea.vmem %s10, 4
    %v1247 = vld [vmem:[%s1246] sm:$0xf]
    %v1248 = vpack.c.bf16 %v1245, %v1244
    %s1249 = scalar_lea.vmem [#allocation7], 384
    %v1250 = vld [vmem:[%s1249] sm:$0xff]
    %v1251 = vld [vmem:[%s1249 + $0x8] sm:$0xff]
    %v1252 = vld [vmem:[%s1249 + $0x10] sm:$0xff]
    %v1253 = vld [vmem:[%s1249 + $0x18] sm:$0xff]
    %v1254 = vld [vmem:[%s1249 + $0x20] sm:$0xff]
    %v1255 = vld [vmem:[%s1249 + $0x28] sm:$0xff]
    %v1256 = vld [vmem:[%s1249 + $0x30] sm:$0xff]
    %v1257 = vld [vmem:[%s1249 + $0x38] sm:$0xff]
    %v1258 = vld [vmem:[%s1249 + $0x40] sm:$0xff]
    %v1259 = vld [vmem:[%s1249 + $0x48] sm:$0xff]
    %v1260 = vld [vmem:[%s1249 + $0x50] sm:$0xff]
    %v1261 = vld [vmem:[%s1249 + $0x58] sm:$0xff]
    %v1262 = vld [vmem:[%s1249 + $0x60] sm:$0xff]
    %v1263 = vld [vmem:[%s1249 + $0x68] sm:$0xff]
    %v1264 = vld [vmem:[%s1249 + $0x70] sm:$0xff]
    %v1265 = vld [vmem:[%s1249 + $0x78] sm:$0xff]
    %v1266 = vld [vmem:[%s1249 + $0x80] sm:$0xff]
    %v1267 = vld [vmem:[%s1249 + $0x88] sm:$0xff]
    %v1268 = vld [vmem:[%s1249 + $0x90] sm:$0xff]
    %v1269 = vld [vmem:[%s1249 + $0x98] sm:$0xff]
    %v1270 = vld [vmem:[%s1249 + $0xa0] sm:$0xff]
    %v1271 = vld [vmem:[%s1249 + $0xa8] sm:$0xff]
    %v1272 = vld [vmem:[%s1249 + $0xb0] sm:$0xff]
    %v1273 = vld [vmem:[%s1249 + $0xb8] sm:$0xff]
    %v1274 = vld [vmem:[%s1249 + $0xc0] sm:$0xff]
    %v1275 = vld [vmem:[%s1249 + $0xc8] sm:$0xff]
    %v1276 = vld [vmem:[%s1249 + $0xd0] sm:$0xff]
    %v1277 = vld [vmem:[%s1249 + $0xd8] sm:$0xff]
    %v1278 = vld [vmem:[%s1249 + $0xe0] sm:$0xff]
    %v1279 = vld [vmem:[%s1249 + $0xe8] sm:$0xff]
    %v1280 = vld [vmem:[%s1249 + $0xf0] sm:$0xff]
    %v1281 = vld [vmem:[%s1249 + $0xf8] sm:$0xff]
    %v1282 = vld [vmem:[%s1249 + $0x100] sm:$0xff]
    %v1283 = vld [vmem:[%s1249 + $0x108] sm:$0xff]
    %v1284 = vld [vmem:[%s1249 + $0x110] sm:$0xff]
    %v1285 = vld [vmem:[%s1249 + $0x118] sm:$0xff]
    %v1286 = vld [vmem:[%s1249 + $0x120] sm:$0xff]
    %v1287 = vld [vmem:[%s1249 + $0x128] sm:$0xff]
    %v1288 = vld [vmem:[%s1249 + $0x130] sm:$0xff]
    %v1289 = vld [vmem:[%s1249 + $0x138] sm:$0xff]
    %v1290 = vld [vmem:[%s1249 + $0x140] sm:$0xff]
    %v1291 = vld [vmem:[%s1249 + $0x148] sm:$0xff]
    %v1292 = vld [vmem:[%s1249 + $0x150] sm:$0xff]
    %v1293 = vld [vmem:[%s1249 + $0x158] sm:$0xff]
    %v1294 = vld [vmem:[%s1249 + $0x160] sm:$0xff]
    %v1295 = vld [vmem:[%s1249 + $0x168] sm:$0xff]
    %v1296 = vld [vmem:[%s1249 + $0x170] sm:$0xff]
    %v1297 = vld [vmem:[%s1249 + $0x178] sm:$0xff]
    %s1298 = scalar_lea.vmem [#allocation8], 6
    %v1299 = vld [vmem:[%s1298] sm:$0x3f]
    %v1301 = vperm.slane %v1299, 0
    %v1302 = vperm.slane %v1299, 1
    %v1303 = vperm.slane %v1299, 2
    %v1304 = vperm.slane %v1299, 3
    %v1305 = vperm.slane %v1299, 4
    %v1306 = vperm.slane %v1299, 5
    %v1361 = vunpack.c.l.b16 %v1250
    %v1362 = vunpack.c.h.b16 %v1250
    %v1363 = vunpack.c.l.b16 %v1251
    %v1364 = vunpack.c.h.b16 %v1251
    %v1365 = vunpack.c.l.b16 %v1252
    %v1366 = vunpack.c.h.b16 %v1252
    %v1367 = vunpack.c.l.b16 %v1253
    %v1368 = vunpack.c.h.b16 %v1253
    %v1369 = vunpack.c.l.b16 %v1254
    %v1370 = vunpack.c.h.b16 %v1254
    %v1371 = vunpack.c.l.b16 %v1255
    %v1372 = vunpack.c.h.b16 %v1255
    %v1373 = vunpack.c.l.b16 %v1256
    %v1374 = vunpack.c.h.b16 %v1256
    %v1375 = vunpack.c.l.b16 %v1257
    %v1376 = vunpack.c.h.b16 %v1257
    %v1377 = vunpack.c.l.b16 %v1258
    %v1378 = vunpack.c.h.b16 %v1258
    %v1379 = vunpack.c.l.b16 %v1259
    %v1380 = vunpack.c.h.b16 %v1259
    %v1381 = vunpack.c.l.b16 %v1260
    %v1382 = vunpack.c.h.b16 %v1260
    %v1383 = vunpack.c.l.b16 %v1261
    %v1384 = vunpack.c.h.b16 %v1261
    %v1385 = vunpack.c.l.b16 %v1262
    %v1386 = vunpack.c.h.b16 %v1262
    %v1387 = vunpack.c.l.b16 %v1263
    %v1388 = vunpack.c.h.b16 %v1263
    %v1389 = vunpack.c.l.b16 %v1264
    %v1390 = vunpack.c.h.b16 %v1264
    %v1391 = vunpack.c.l.b16 %v1265
    %v1392 = vunpack.c.h.b16 %v1265
    %v1393 = vunpack.c.l.b16 %v1266
    %v1394 = vunpack.c.h.b16 %v1266
    %v1395 = vunpack.c.l.b16 %v1267
    %v1396 = vunpack.c.h.b16 %v1267
    %v1397 = vunpack.c.l.b16 %v1268
    %v1398 = vunpack.c.h.b16 %v1268
    %v1399 = vunpack.c.l.b16 %v1269
    %v1400 = vunpack.c.h.b16 %v1269
    %v1401 = vunpack.c.l.b16 %v1270
    %v1402 = vunpack.c.h.b16 %v1270
    %v1403 = vunpack.c.l.b16 %v1271
    %v1404 = vunpack.c.h.b16 %v1271
    %v1405 = vunpack.c.l.b16 %v1272
    %v1406 = vunpack.c.h.b16 %v1272
    %v1407 = vunpack.c.l.b16 %v1273
    %v1408 = vunpack.c.h.b16 %v1273
    %v1409 = vunpack.c.l.b16 %v1274
    %v1410 = vunpack.c.h.b16 %v1274
    %v1411 = vunpack.c.l.b16 %v1275
    %v1412 = vunpack.c.h.b16 %v1275
    %v1413 = vunpack.c.l.b16 %v1276
    %v1414 = vunpack.c.h.b16 %v1276
    %v1415 = vunpack.c.l.b16 %v1277
    %v1416 = vunpack.c.h.b16 %v1277
    %v1417 = vunpack.c.l.b16 %v1278
    %v1418 = vunpack.c.h.b16 %v1278
    %v1419 = vunpack.c.l.b16 %v1279
    %v1420 = vunpack.c.h.b16 %v1279
    %v1421 = vunpack.c.l.b16 %v1280
    %v1422 = vunpack.c.h.b16 %v1280
    %v1423 = vunpack.c.l.b16 %v1281
    %v1424 = vunpack.c.h.b16 %v1281
    %v1425 = vunpack.c.l.b16 %v1282
    %v1426 = vunpack.c.h.b16 %v1282
    %v1427 = vunpack.c.l.b16 %v1283
    %v1428 = vunpack.c.h.b16 %v1283
    %v1429 = vunpack.c.l.b16 %v1284
    %v1430 = vunpack.c.h.b16 %v1284
    %v1431 = vunpack.c.l.b16 %v1285
    %v1432 = vunpack.c.h.b16 %v1285
    %v1433 = vunpack.c.l.b16 %v1286
    %v1434 = vunpack.c.h.b16 %v1286
    %v1435 = vunpack.c.l.b16 %v1287
    %v1436 = vunpack.c.h.b16 %v1287
    %v1437 = vunpack.c.l.b16 %v1288
    %v1438 = vunpack.c.h.b16 %v1288
    %v1439 = vunpack.c.l.b16 %v1289
    %v1440 = vunpack.c.h.b16 %v1289
    %v1441 = vunpack.c.l.b16 %v1290
    %v1442 = vunpack.c.h.b16 %v1290
    %v1443 = vunpack.c.l.b16 %v1291
    %v1444 = vunpack.c.h.b16 %v1291
    %v1445 = vunpack.c.l.b16 %v1292
    %v1446 = vunpack.c.h.b16 %v1292
    %v1447 = vunpack.c.l.b16 %v1293
    %v1448 = vunpack.c.h.b16 %v1293
    %v1449 = vunpack.c.l.b16 %v1294
    %v1450 = vunpack.c.h.b16 %v1294
    %v1451 = vunpack.c.l.b16 %v1295
    %v1452 = vunpack.c.h.b16 %v1295
    %v1453 = vunpack.c.l.b16 %v1296
    %v1454 = vunpack.c.h.b16 %v1296
    %v1455 = vunpack.c.l.b16 %v1297
    %v1456 = vunpack.c.h.b16 %v1297
    %v1457 = vpack.c.b16 %v1367, %v1361
    %v1458 = vpack.c.b16 %v1368, %v1362
    %v1459 = vpack.c.b16 %v1369, %v1363
    %v1460 = vpack.c.b16 %v1370, %v1364
    %v1461 = vpack.c.b16 %v1371, %v1365
    %v1462 = vpack.c.b16 %v1372, %v1366
    %v1463 = vpack.c.b16 %v1379, %v1373
    %v1464 = vpack.c.b16 %v1380, %v1374
    %v1465 = vpack.c.b16 %v1381, %v1375
    %v1466 = vpack.c.b16 %v1382, %v1376
    %v1467 = vpack.c.b16 %v1383, %v1377
    %v1468 = vpack.c.b16 %v1384, %v1378
    %v1469 = vpack.c.b16 %v1391, %v1385
    %v1470 = vpack.c.b16 %v1392, %v1386
    %v1471 = vpack.c.b16 %v1393, %v1387
    %v1472 = vpack.c.b16 %v1394, %v1388
    %v1473 = vpack.c.b16 %v1395, %v1389
    %v1474 = vpack.c.b16 %v1396, %v1390
    %v1475 = vpack.c.b16 %v1403, %v1397
    %v1476 = vpack.c.b16 %v1404, %v1398
    %v1477 = vpack.c.b16 %v1405, %v1399
    %v1478 = vpack.c.b16 %v1406, %v1400
    %v1479 = vpack.c.b16 %v1407, %v1401
    %v1480 = vpack.c.b16 %v1408, %v1402
    %v1481 = vpack.c.b16 %v1415, %v1409
    %v1482 = vpack.c.b16 %v1416, %v1410
    %v1483 = vpack.c.b16 %v1417, %v1411
    %v1484 = vpack.c.b16 %v1418, %v1412
    %v1485 = vpack.c.b16 %v1419, %v1413
    %v1486 = vpack.c.b16 %v1420, %v1414
    %v1487 = vpack.c.b16 %v1427, %v1421
    %v1488 = vpack.c.b16 %v1428, %v1422
    %v1489 = vpack.c.b16 %v1429, %v1423
    %v1490 = vpack.c.b16 %v1430, %v1424
    %v1491 = vpack.c.b16 %v1431, %v1425
    %v1492 = vpack.c.b16 %v1432, %v1426
    %v1493 = vpack.c.b16 %v1439, %v1433
    %v1494 = vpack.c.b16 %v1440, %v1434
    %v1495 = vpack.c.b16 %v1441, %v1435
    %v1496 = vpack.c.b16 %v1442, %v1436
    %v1497 = vpack.c.b16 %v1443, %v1437
    %v1498 = vpack.c.b16 %v1444, %v1438
    %v1499 = vpack.c.b16 %v1451, %v1445
    %v1500 = vpack.c.b16 %v1452, %v1446
    %v1501 = vpack.c.b16 %v1453, %v1447
    %v1502 = vpack.c.b16 %v1454, %v1448
    %v1503 = vpack.c.b16 %v1455, %v1449
    %v1504 = vpack.c.b16 %v1456, %v1450
    %1553 = vmatpush.bf16.msra.mxu0 %v1499
    %1554 = vmatpush.bf16.msra.mxu0 %v1493
    %1555 = vmatpush.bf16.msra.mxu0 %v1487
    %1556 = vmatpush.bf16.msra.mxu0 %v1481
    %1557 = vmatpush.bf16.msra.mxu0 %v1475
    %1558 = vmatpush.bf16.msra.mxu0 %v1469
    %1559 = vmatpush.bf16.msra.mxu0 %v1463
    %1560 = vmatpush.bf16.msra.mxu0 %v1457
    %1561 = vmatmul.bf16.gmra.mxu0 %v1248
    %v1562 = vpop.f32.mrf.mxu0
    %v1563 = vadd.f32 %v1301, %v1562
    %v1564 = vpop.f32.mrf.mxu0
    %v1565 = vadd.f32 %v1301, %v1564
    %1566 = vdwg.mxu0
    %1567 = vmatpush.bf16.msra.mxu0 %v1500
    %1568 = vmatpush.bf16.msra.mxu0 %v1494
    %1569 = vmatpush.bf16.msra.mxu0 %v1488
    %1570 = vmatpush.bf16.msra.mxu0 %v1482
    %1571 = vmatpush.bf16.msra.mxu0 %v1476
    %1572 = vmatpush.bf16.msra.mxu0 %v1470
    %1573 = vmatpush.bf16.msra.mxu0 %v1464
    %1574 = vmatpush.bf16.msra.mxu0 %v1458
    %1575 = vmatmul.bf16.gmra.mxu0 %v1248
    %v1576 = vpop.f32.mrf.mxu0
    %v1577 = vadd.f32 %v1302, %v1576
    %v1578 = vpop.f32.mrf.mxu0
    %v1579 = vadd.f32 %v1302, %v1578
    %1580 = vdwg.mxu0
    %1581 = vmatpush.bf16.msra.mxu0 %v1501
    %1582 = vmatpush.bf16.msra.mxu0 %v1495
    %1583 = vmatpush.bf16.msra.mxu0 %v1489
    %1584 = vmatpush.bf16.msra.mxu0 %v1483
    %1585 = vmatpush.bf16.msra.mxu0 %v1477
    %1586 = vmatpush.bf16.msra.mxu0 %v1471
    %1587 = vmatpush.bf16.msra.mxu0 %v1465
    %1588 = vmatpush.bf16.msra.mxu0 %v1459
    %1589 = vmatmul.bf16.gmra.mxu0 %v1248
    %v1590 = vpop.f32.mrf.mxu0
    %v1591 = vadd.f32 %v1303, %v1590
    %v1592 = vpop.f32.mrf.mxu0
    %v1593 = vadd.f32 %v1303, %v1592
    %1594 = vdwg.mxu0
    %1595 = vmatpush.bf16.msra.mxu0 %v1502
    %1596 = vmatpush.bf16.msra.mxu0 %v1496
    %1597 = vmatpush.bf16.msra.mxu0 %v1490
    %1598 = vmatpush.bf16.msra.mxu0 %v1484
    %1599 = vmatpush.bf16.msra.mxu0 %v1478
    %1600 = vmatpush.bf16.msra.mxu0 %v1472
    %1601 = vmatpush.bf16.msra.mxu0 %v1466
    %1602 = vmatpush.bf16.msra.mxu0 %v1460
    %1603 = vmatmul.bf16.gmra.mxu0 %v1248
    %v1604 = vpop.f32.mrf.mxu0
    %v1605 = vadd.f32 %v1304, %v1604
    %v1606 = vpop.f32.mrf.mxu0
    %v1607 = vadd.f32 %v1304, %v1606
    %1608 = vdwg.mxu0
    %1609 = vmatpush.bf16.msra.mxu0 %v1503
    %1610 = vmatpush.bf16.msra.mxu0 %v1497
    %1611 = vmatpush.bf16.msra.mxu0 %v1491
    %1612 = vmatpush.bf16.msra.mxu0 %v1485
    %1613 = vmatpush.bf16.msra.mxu0 %v1479
    %1614 = vmatpush.bf16.msra.mxu0 %v1473
    %1615 = vmatpush.bf16.msra.mxu0 %v1467
    %1616 = vmatpush.bf16.msra.mxu0 %v1461
    %1617 = vmatmul.bf16.gmra.mxu0 %v1248
    %v1618 = vpop.f32.mrf.mxu0
    %v1619 = vadd.f32 %v1305, %v1618
    %v1620 = vpop.f32.mrf.mxu0
    %v1621 = vadd.f32 %v1305, %v1620
    %1622 = vdwg.mxu0
    %1623 = vmatpush.bf16.msra.mxu0 %v1504
    %1624 = vmatpush.bf16.msra.mxu0 %v1498
    %1625 = vmatpush.bf16.msra.mxu0 %v1492
    %1626 = vmatpush.bf16.msra.mxu0 %v1486
    %1627 = vmatpush.bf16.msra.mxu0 %v1480
    %1628 = vmatpush.bf16.msra.mxu0 %v1474
    %1629 = vmatpush.bf16.msra.mxu0 %v1468
    %1630 = vmatpush.bf16.msra.mxu0 %v1462
    %1631 = vmatmul.bf16.gmra.mxu0 %v1248
    %v1632 = vpop.f32.mrf.mxu0
    %v1633 = vadd.f32 %v1306, %v1632
    %v1634 = vpop.f32.mrf.mxu0
    %v1635 = vadd.f32 %v1306, %v1634
    %1636 = vdwg.mxu0
    %v1637 = vpack.c.bf16 %v1577, %v1563
    %v1638 = vpack.c.bf16 %v1605, %v1591
    %v1639 = vpack.c.bf16 %v1633, %v1619
    %v1640 = vpack.c.bf16 %v1579, %v1565
    %v1641 = vpack.c.bf16 %v1607, %v1593
    %v1642 = vpack.c.bf16 %v1635, %v1621
    %1643 = vmatpush.bf16.xpose.msra.mxu0 0
    %1644 = vmatpush.bf16.xpose.msra.mxu0 0
    %1645 = vmatpush.bf16.xpose.msra.mxu0 0
    %1646 = vmatpush.bf16.xpose.msra.mxu0 0
    %1647 = vmatpush.bf16.xpose.msra.mxu0 0
    %1648 = vmatpush.bf16.xpose.msra.mxu0 0
    %1649 = vmatpush.bf16.xpose.msra.mxu0 0
    %1650 = vmatpush.bf16.xpose.msra.mxu0 %v1638
    %1651 = vmatmul.bf16.gmra.mxu0 %v1637
    %v1652 = vpop.f32.mrf.mxu0
    %v1653 = vadd.f32 %v202, %v1652
    %v1654 = vpop.f32.mrf.mxu0
    %1655 = vdwg.mxu0
    %1656 = vmatpush.bf16.xpose.msra.mxu0 0
    %1657 = vmatpush.bf16.xpose.msra.mxu0 0
    %1658 = vmatpush.bf16.xpose.msra.mxu0 0
    %1659 = vmatpush.bf16.xpose.msra.mxu0 0
    %1660 = vmatpush.bf16.xpose.msra.mxu0 0
    %1661 = vmatpush.bf16.xpose.msra.mxu0 0
    %1662 = vmatpush.bf16.xpose.msra.mxu0 0
    %1663 = vmatpush.bf16.xpose.msra.mxu0 %v1641
    %1664 = vmatmul.bf16.gmra.mxu0 %v1640
    %v1665 = vpop.f32.mrf.mxu0
    %v1666 = vadd.f32 %v203, %v1665
    %v1667 = vpop.f32.mrf.mxu0
    %1668 = vdwg.mxu0
    %v1669 = vsel %vm626, %v1653, -inf
    %1670 = vmax.xlane.f32.xlu0 %v1669
    %v1671 = vpop.xlane.xlu0 %1670
    %v1672 = vsel %vm626, %v1666, -inf
    %1673 = vmax.xlane.f32.xlu0 %v1672
    %v1674 = vpop.xlane.xlu0 %1673
    %v1675 = vsub.f32 %v1653, %v1671
    %v1676 = vsub.f32 %v1666, %v1674
    %v1677 = vmul.f32 %v1675, 1.442695
    %v1678 = vpow.pop %v1677
    %v1679 = vmul.f32 %v1676, 1.442695
    %v1680 = vpow.pop %v1679
    %v1681 = vsel %vm626, %v1678, 0.0
    %1682 = vadd.xlane.f32.xlu0 %v1681
    %v1683 = vpop.xlane.xlu0 %1682
    %v1684 = vsel %vm626, %v1680, 0.0
    %1685 = vadd.xlane.f32.xlu0 %v1684
    %v1686 = vpop.xlane.xlu0 %1685
    %v1687 = vrcp.pop %v1683
    %v1688 = vrcp.pop %v1686
    %v1689 = vmul.f32 %v1678, %v1687
    %v1690 = vmul.f32 %v1680, %v1688
    %v1691 = vpack.c.bf16 %v1689, %v1689
    %v1692 = vpack.c.bf16 %v1690, %v1690
    %v1694 = vsel %vm626, %v1691, 0
    %v1697 = vsel %vm654, %v1639, 0
    %1699 = vmatpush.bf16.msra.mxu0 0
    %1700 = vmatpush.bf16.msra.mxu0 0
    %1701 = vmatpush.bf16.msra.mxu0 0
    %1702 = vmatpush.bf16.msra.mxu0 0
    %1703 = vmatpush.bf16.msra.mxu0 0
    %1704 = vmatpush.bf16.msra.mxu0 0
    %1705 = vmatpush.bf16.msra.mxu0 0
    %1706 = vmatpush.bf16.msra.mxu0 %v1697
    %1707 = vmatmul.bf16.gmra.mxu0 %v1694
    %v1708 = vpop.f32.mrf.mxu0
    %v1709 = vadd.f32 0.0, %v1708
    %v1710 = vpop.f32.mrf.mxu0
    %1711 = vdwg.mxu0
    %v1713 = vsel %vm626, %v1692, 0
    %v1716 = vsel %vm654, %v1642, 0
    %1718 = vmatpush.bf16.msra.mxu0 0
    %1719 = vmatpush.bf16.msra.mxu0 0
    %1720 = vmatpush.bf16.msra.mxu0 0
    %1721 = vmatpush.bf16.msra.mxu0 0
    %1722 = vmatpush.bf16.msra.mxu0 0
    %1723 = vmatpush.bf16.msra.mxu0 0
    %1724 = vmatpush.bf16.msra.mxu0 0
    %1725 = vmatpush.bf16.msra.mxu0 %v1716
    %1726 = vmatmul.bf16.gmra.mxu0 %v1713
    %v1727 = vpop.f32.mrf.mxu0
    %v1728 = vadd.f32 0.0, %v1727
    %v1729 = vpop.f32.mrf.mxu0
    %1730 = vdwg.mxu0
    %v1731 = vpack.c.bf16 %v1709, %v1709
    %v1732 = vpack.c.bf16 %v1728, %v1728
    %v1735 = vrot.slane %v1637, 4
    %v1736 = vrot.slane %v1640, 4
    %v1741 = vrot.slane %v1638, 4
    %v1742 = vrot.slane %v1641, 4
    %v1747 = vrot.slane %v1639, 4
    %v1748 = vrot.slane %v1642, 4
    %1749 = vmatpush.bf16.xpose.msra.mxu0 0
    %1750 = vmatpush.bf16.xpose.msra.mxu0 0
    %1751 = vmatpush.bf16.xpose.msra.mxu0 0
    %1752 = vmatpush.bf16.xpose.msra.mxu0 0
    %1753 = vmatpush.bf16.xpose.msra.mxu0 0
    %1754 = vmatpush.bf16.xpose.msra.mxu0 0
    %1755 = vmatpush.bf16.xpose.msra.mxu0 0
    %1756 = vmatpush.bf16.xpose.msra.mxu0 %v1741
    %1757 = vmatmul.bf16.gmra.mxu0 %v1735
    %v1758 = vpop.f32.mrf.mxu0
    %v1759 = vadd.f32 %v202, %v1758
    %v1760 = vpop.f32.mrf.mxu0
    %1761 = vdwg.mxu0
    %1762 = vmatpush.bf16.xpose.msra.mxu0 0
    %1763 = vmatpush.bf16.xpose.msra.mxu0 0
    %1764 = vmatpush.bf16.xpose.msra.mxu0 0
    %1765 = vmatpush.bf16.xpose.msra.mxu0 0
    %1766 = vmatpush.bf16.xpose.msra.mxu0 0
    %1767 = vmatpush.bf16.xpose.msra.mxu0 0
    %1768 = vmatpush.bf16.xpose.msra.mxu0 0
    %1769 = vmatpush.bf16.xpose.msra.mxu0 %v1742
    %1770 = vmatmul.bf16.gmra.mxu0 %v1736
    %v1771 = vpop.f32.mrf.mxu0
    %v1772 = vadd.f32 %v203, %v1771
    %v1773 = vpop.f32.mrf.mxu0
    %1774 = vdwg.mxu0
    %v1775 = vsel %vm626, %v1759, -inf
    %1776 = vmax.xlane.f32.xlu0 %v1775
    %v1777 = vpop.xlane.xlu0 %1776
    %v1778 = vsel %vm626, %v1772, -inf
    %1779 = vmax.xlane.f32.xlu0 %v1778
    %v1780 = vpop.xlane.xlu0 %1779
    %v1781 = vsub.f32 %v1759, %v1777
    %v1782 = vsub.f32 %v1772, %v1780
    %v1783 = vmul.f32 %v1781, 1.442695
    %v1784 = vpow.pop %v1783
    %v1785 = vmul.f32 %v1782, 1.442695
    %v1786 = vpow.pop %v1785
    %v1787 = vsel %vm626, %v1784, 0.0
    %1788 = vadd.xlane.f32.xlu0 %v1787
    %v1789 = vpop.xlane.xlu0 %1788
    %v1790 = vsel %vm626, %v1786, 0.0
    %1791 = vadd.xlane.f32.xlu0 %v1790
    %v1792 = vpop.xlane.xlu0 %1791
    %v1793 = vrcp.pop %v1789
    %v1794 = vrcp.pop %v1792
    %v1795 = vmul.f32 %v1784, %v1793
    %v1796 = vmul.f32 %v1786, %v1794
    %v1797 = vpack.c.bf16 %v1795, %v1795
    %v1798 = vpack.c.bf16 %v1796, %v1796
    %v1800 = vsel %vm626, %v1797, 0
    %v1803 = vsel %vm654, %v1747, 0
    %1805 = vmatpush.bf16.msra.mxu0 0
    %1806 = vmatpush.bf16.msra.mxu0 0
    %1807 = vmatpush.bf16.msra.mxu0 0
    %1808 = vmatpush.bf16.msra.mxu0 0
    %1809 = vmatpush.bf16.msra.mxu0 0
    %1810 = vmatpush.bf16.msra.mxu0 0
    %1811 = vmatpush.bf16.msra.mxu0 0
    %1812 = vmatpush.bf16.msra.mxu0 %v1803
    %1813 = vmatmul.bf16.gmra.mxu0 %v1800
    %v1814 = vpop.f32.mrf.mxu0
    %v1815 = vadd.f32 0.0, %v1814
    %v1816 = vpop.f32.mrf.mxu0
    %1817 = vdwg.mxu0
    %v1819 = vsel %vm626, %v1798, 0
    %v1822 = vsel %vm654, %v1748, 0
    %1824 = vmatpush.bf16.msra.mxu0 0
    %1825 = vmatpush.bf16.msra.mxu0 0
    %1826 = vmatpush.bf16.msra.mxu0 0
    %1827 = vmatpush.bf16.msra.mxu0 0
    %1828 = vmatpush.bf16.msra.mxu0 0
    %1829 = vmatpush.bf16.msra.mxu0 0
    %1830 = vmatpush.bf16.msra.mxu0 0
    %1831 = vmatpush.bf16.msra.mxu0 %v1822
    %1832 = vmatmul.bf16.gmra.mxu0 %v1819
    %v1833 = vpop.f32.mrf.mxu0
    %v1834 = vadd.f32 0.0, %v1833
    %v1835 = vpop.f32.mrf.mxu0
    %1836 = vdwg.mxu0
    %v1837 = vpack.c.bf16 %v1815, %v1815
    %v1838 = vpack.c.bf16 %v1834, %v1834
    %v1841 = vunpack.c.l.b16 %v1731
    %v1842 = vunpack.c.l.b16 %v1732
    %v1843 = vpack.c.b16 %v1842, %v1841
    %v1847 = vunpack.c.l.b16 %v1837
    %v1848 = vunpack.c.l.b16 %v1838
    %v1849 = vpack.c.b16 %v1848, %v1847
    %s1851 = scalar_lea.vmem [#allocation10], 128
    %v1852 = vld [vmem:[%s1851] sm:$0xf]
    %v1853 = vld [vmem:[%s1851 + $0x4] sm:$0xf]
    %v1854 = vld [vmem:[%s1851 + $0x8] sm:$0xf]
    %v1855 = vld [vmem:[%s1851 + $0xc] sm:$0xf]
    %v1856 = vld [vmem:[%s1851 + $0x10] sm:$0xf]
    %v1857 = vld [vmem:[%s1851 + $0x14] sm:$0xf]
    %v1858 = vld [vmem:[%s1851 + $0x18] sm:$0xf]
    %v1859 = vld [vmem:[%s1851 + $0x1c] sm:$0xf]
    %v1860 = vld [vmem:[%s1851 + $0x20] sm:$0xf]
    %v1861 = vld [vmem:[%s1851 + $0x24] sm:$0xf]
    %v1862 = vld [vmem:[%s1851 + $0x28] sm:$0xf]
    %v1863 = vld [vmem:[%s1851 + $0x2c] sm:$0xf]
    %v1864 = vld [vmem:[%s1851 + $0x30] sm:$0xf]
    %v1865 = vld [vmem:[%s1851 + $0x34] sm:$0xf]
    %v1866 = vld [vmem:[%s1851 + $0x38] sm:$0xf]
    %v1867 = vld [vmem:[%s1851 + $0x3c] sm:$0xf]
    %v1868 = vld [vmem:[%s1851 + $0x40] sm:$0xf]
    %v1869 = vld [vmem:[%s1851 + $0x44] sm:$0xf]
    %v1870 = vld [vmem:[%s1851 + $0x48] sm:$0xf]
    %v1871 = vld [vmem:[%s1851 + $0x4c] sm:$0xf]
    %v1872 = vld [vmem:[%s1851 + $0x50] sm:$0xf]
    %v1873 = vld [vmem:[%s1851 + $0x54] sm:$0xf]
    %v1874 = vld [vmem:[%s1851 + $0x58] sm:$0xf]
    %v1875 = vld [vmem:[%s1851 + $0x5c] sm:$0xf]
    %v1876 = vld [vmem:[%s1851 + $0x60] sm:$0xf]
    %v1877 = vld [vmem:[%s1851 + $0x64] sm:$0xf]
    %v1878 = vld [vmem:[%s1851 + $0x68] sm:$0xf]
    %v1879 = vld [vmem:[%s1851 + $0x6c] sm:$0xf]
    %v1880 = vld [vmem:[%s1851 + $0x70] sm:$0xf]
    %v1881 = vld [vmem:[%s1851 + $0x74] sm:$0xf]
    %v1882 = vld [vmem:[%s1851 + $0x78] sm:$0xf]
    %v1883 = vld [vmem:[%s1851 + $0x7c] sm:$0xf]
    %s1884 = scalar_lea.vmem [#allocation11], 1
    %v1885 = vld [vmem:[%s1884] sm:$0x1]
    %v1887 = vperm.slane %v1885, 0
    %v1921 = vunpack.c.l.b16 %v1852
    %v1922 = vunpack.c.l.b16 %v1853
    %v1923 = vunpack.c.l.b16 %v1854
    %v1924 = vunpack.c.l.b16 %v1855
    %v1925 = vunpack.c.l.b16 %v1856
    %v1926 = vunpack.c.l.b16 %v1857
    %v1927 = vunpack.c.l.b16 %v1858
    %v1928 = vunpack.c.l.b16 %v1859
    %v1929 = vunpack.c.l.b16 %v1860
    %v1930 = vunpack.c.l.b16 %v1861
    %v1931 = vunpack.c.l.b16 %v1862
    %v1932 = vunpack.c.l.b16 %v1863
    %v1933 = vunpack.c.l.b16 %v1864
    %v1934 = vunpack.c.l.b16 %v1865
    %v1935 = vunpack.c.l.b16 %v1866
    %v1936 = vunpack.c.l.b16 %v1867
    %v1937 = vunpack.c.l.b16 %v1868
    %v1938 = vunpack.c.l.b16 %v1869
    %v1939 = vunpack.c.l.b16 %v1870
    %v1940 = vunpack.c.l.b16 %v1871
    %v1941 = vunpack.c.l.b16 %v1872
    %v1942 = vunpack.c.l.b16 %v1873
    %v1943 = vunpack.c.l.b16 %v1874
    %v1944 = vunpack.c.l.b16 %v1875
    %v1945 = vunpack.c.l.b16 %v1876
    %v1946 = vunpack.c.l.b16 %v1877
    %v1947 = vunpack.c.l.b16 %v1878
    %v1948 = vunpack.c.l.b16 %v1879
    %v1949 = vunpack.c.l.b16 %v1880
    %v1950 = vunpack.c.l.b16 %v1881
    %v1951 = vunpack.c.l.b16 %v1882
    %v1952 = vunpack.c.l.b16 %v1883
    %v1953 = vpack.c.b16 %v1922, %v1921
    %v1954 = vpack.c.b16 %v1924, %v1923
    %v1955 = vpack.c.b16 %v1926, %v1925
    %v1956 = vpack.c.b16 %v1928, %v1927
    %v1957 = vpack.c.b16 %v1930, %v1929
    %v1958 = vpack.c.b16 %v1932, %v1931
    %v1959 = vpack.c.b16 %v1934, %v1933
    %v1960 = vpack.c.b16 %v1936, %v1935
    %v1961 = vpack.c.b16 %v1938, %v1937
    %v1962 = vpack.c.b16 %v1940, %v1939
    %v1963 = vpack.c.b16 %v1942, %v1941
    %v1964 = vpack.c.b16 %v1944, %v1943
    %v1965 = vpack.c.b16 %v1946, %v1945
    %v1966 = vpack.c.b16 %v1948, %v1947
    %v1967 = vpack.c.b16 %v1950, %v1949
    %v1968 = vpack.c.b16 %v1952, %v1951
    %1985 = vmatpush.bf16.msra.mxu0 %v1960
    %1986 = vmatpush.bf16.msra.mxu0 %v1959
    %1987 = vmatpush.bf16.msra.mxu0 %v1958
    %1988 = vmatpush.bf16.msra.mxu0 %v1957
    %1989 = vmatpush.bf16.msra.mxu0 %v1956
    %1990 = vmatpush.bf16.msra.mxu0 %v1955
    %1991 = vmatpush.bf16.msra.mxu0 %v1954
    %1992 = vmatpush.bf16.msra.mxu0 %v1953
    %1993 = vmatmul.bf16.gmra.mxu0 %v1843
    %v1994 = vpop.f32.mrf.mxu0
    %v1995 = vadd.f32 %v1887, %v1994
    %v1996 = vpop.f32.mrf.mxu0
    %v1997 = vadd.f32 %v1887, %v1996
    %1998 = vdwg.mxu0
    %1999 = vmatpush.bf16.msra.mxu0 %v1968
    %2000 = vmatpush.bf16.msra.mxu0 %v1967
    %2001 = vmatpush.bf16.msra.mxu0 %v1966
    %2002 = vmatpush.bf16.msra.mxu0 %v1965
    %2003 = vmatpush.bf16.msra.mxu0 %v1964
    %2004 = vmatpush.bf16.msra.mxu0 %v1963
    %2005 = vmatpush.bf16.msra.mxu0 %v1962
    %2006 = vmatpush.bf16.msra.mxu0 %v1961
    %2007 = vmatmul.bf16.gmra.mxu0 %v1849
    %v2008 = vpop.f32.mrf.mxu0
    %v2009 = vadd.f32 %v1995, %v2008
    %v2010 = vpop.f32.mrf.mxu0
    %v2011 = vadd.f32 %v1997, %v2010
    %2012 = vdwg.mxu0
    %v2013 = vadd.f32 %v1244, %v2009
    %v2014 = vadd.f32 %v1245, %v2011
    %2015 = vadd.xlane.f32.xlu0 %v2013
    %v2016 = vpop.xlane.xlu0 %2015
    %2017 = vadd.xlane.f32.xlu0 %v2014
    %v2018 = vpop.xlane.xlu0 %2017
    %v2019 = vmul.f32 %v2016, 0.03125
    %v2020 = vmul.f32 %v2018, 0.03125
    %v2021 = vmul.f32 %v2013, %v2013
    %v2022 = vmul.f32 %v2014, %v2014
    %2023 = vadd.xlane.f32.xlu0 %v2021
    %v2024 = vpop.xlane.xlu0 %2023
    %2025 = vadd.xlane.f32.xlu0 %v2022
    %v2026 = vpop.xlane.xlu0 %2025
    %v2027 = vmul.f32 %v2024, 0.03125
    %v2028 = vmul.f32 %v2026, 0.03125
    %v2029 = vmul.f32 %v2019, %v2019
    %v2030 = vmul.f32 %v2020, %v2020
    %v2031 = vsub.f32 %v2027, %v2029
    %v2032 = vsub.f32 %v2028, %v2030
    %v2033 = vmax.f32 %v2031, 0.0
    %v2034 = vmax.f32 %v2032, 0.0
    %v2035 = vsub.f32 %v2013, %v2019
    %v2036 = vsub.f32 %v2014, %v2020
    %v2037 = vadd.f32 %v2033, 1e-05
    %v2038 = vadd.f32 %v2034, 1e-05
    %v2039 = vrsqrt.pop %v2037
    %v2040 = vmul.f32 %v2039, %v2037
    %v2041 = vmul.f32 %v2040, %v2039
    %v2042 = vmul.f32 0.5, %v2041
    %v2043 = vsub.f32 1.5, %v2042
    %v2044 = vmul.f32 %v2039, %v2043
    %vm2045 = vweird.f32 %v2037
    %vm2046 = vweird.f32 %v2039
    %vm2047 = vmor %vm2045, %vm2046
    %v2048 = vsel %vm2047, %v2039, %v2044
    %v2049 = vrsqrt.pop %v2038
    %v2050 = vmul.f32 %v2049, %v2038
    %v2051 = vmul.f32 %v2050, %v2049
    %v2052 = vmul.f32 0.5, %v2051
    %v2053 = vsub.f32 1.5, %v2052
    %v2054 = vmul.f32 %v2049, %v2053
    %vm2055 = vweird.f32 %v2038
    %vm2056 = vweird.f32 %v2049
    %vm2057 = vmor %vm2055, %vm2056
    %v2058 = vsel %vm2057, %v2049, %v2054
    %v2059 = vmul.f32 %v2035, %v2048
    %v2060 = vmul.f32 %v2036, %v2058
    %v2061 = vperm.slane %v1247, 0
    %v2062 = vmul.f32 %v2059, %v2061
    %v2063 = vmul.f32 %v2060, %v2061
    %v2064 = vperm.slane %v1247, 1
    %v2065 = vadd.f32 %v2062, %v2064
    %v2066 = vadd.f32 %v2063, %v2064
    %v2067 = vpack.c.bf16 %v2066, %v2065
    %s2068 = scalar_lea.vmem [#allocation13], 64
    %v2069 = vld [vmem:[%s2068] sm:$0xf]
    %v2070 = vld [vmem:[%s2068 + $0x4] sm:$0xf]
    %v2071 = vld [vmem:[%s2068 + $0x8] sm:$0xf]
    %v2072 = vld [vmem:[%s2068 + $0xc] sm:$0xf]
    %v2073 = vld [vmem:[%s2068 + $0x10] sm:$0xf]
    %v2074 = vld [vmem:[%s2068 + $0x14] sm:$0xf]
    %v2075 = vld [vmem:[%s2068 + $0x18] sm:$0xf]
    %v2076 = vld [vmem:[%s2068 + $0x1c] sm:$0xf]
    %v2077 = vld [vmem:[%s2068 + $0x20] sm:$0xf]
    %v2078 = vld [vmem:[%s2068 + $0x24] sm:$0xf]
    %v2079 = vld [vmem:[%s2068 + $0x28] sm:$0xf]
    %v2080 = vld [vmem:[%s2068 + $0x2c] sm:$0xf]
    %v2081 = vld [vmem:[%s2068 + $0x30] sm:$0xf]
    %v2082 = vld [vmem:[%s2068 + $0x34] sm:$0xf]
    %v2083 = vld [vmem:[%s2068 + $0x38] sm:$0xf]
    %v2084 = vld [vmem:[%s2068 + $0x3c] sm:$0xf]
    %s2085 = scalar_lea.vmem [#allocation14], 1
    %v2086 = vld [vmem:[%s2085] sm:$0x1]
    %v2088 = vperm.slane %v2086, 0
    %v2106 = vunpack.c.l.b16 %v2069
    %v2107 = vunpack.c.l.b16 %v2070
    %v2108 = vunpack.c.l.b16 %v2071
    %v2109 = vunpack.c.l.b16 %v2072
    %v2110 = vunpack.c.l.b16 %v2073
    %v2111 = vunpack.c.l.b16 %v2074
    %v2112 = vunpack.c.l.b16 %v2075
    %v2113 = vunpack.c.l.b16 %v2076
    %v2114 = vunpack.c.l.b16 %v2077
    %v2115 = vunpack.c.l.b16 %v2078
    %v2116 = vunpack.c.l.b16 %v2079
    %v2117 = vunpack.c.l.b16 %v2080
    %v2118 = vunpack.c.l.b16 %v2081
    %v2119 = vunpack.c.l.b16 %v2082
    %v2120 = vunpack.c.l.b16 %v2083
    %v2121 = vunpack.c.l.b16 %v2084
    %v2122 = vpack.c.b16 %v2107, %v2106
    %v2123 = vpack.c.b16 %v2109, %v2108
    %v2124 = vpack.c.b16 %v2111, %v2110
    %v2125 = vpack.c.b16 %v2113, %v2112
    %v2126 = vpack.c.b16 %v2115, %v2114
    %v2127 = vpack.c.b16 %v2117, %v2116
    %v2128 = vpack.c.b16 %v2119, %v2118
    %v2129 = vpack.c.b16 %v2121, %v2120
    %2138 = vmatpush.bf16.msra.mxu0 %v2129
    %2139 = vmatpush.bf16.msra.mxu0 %v2128
    %2140 = vmatpush.bf16.msra.mxu0 %v2127
    %2141 = vmatpush.bf16.msra.mxu0 %v2126
    %2142 = vmatpush.bf16.msra.mxu0 %v2125
    %2143 = vmatpush.bf16.msra.mxu0 %v2124
    %2144 = vmatpush.bf16.msra.mxu0 %v2123
    %2145 = vmatpush.bf16.msra.mxu0 %v2122
    %2146 = vmatmul.bf16.gmra.mxu0 %v2067
    %v2147 = vpop.f32.mrf.mxu0
    %v2148 = vadd.f32 %v2088, %v2147
    %v2149 = vpop.f32.mrf.mxu0
    %v2150 = vadd.f32 %v2088, %v2149
    %2151 = vdwg.mxu0
    %v2152 = vmax.f32 %v2148, 0.0
    %v2153 = vmax.f32 %v2150, 0.0
    %v2154 = vpack.c.bf16 %v2153, %v2152
    %s2155 = scalar_lea.vmem [#allocation16], 64
    %v2156 = vld [vmem:[%s2155] sm:$0xf]
    %v2157 = vld [vmem:[%s2155 + $0x4] sm:$0xf]
    %v2158 = vld [vmem:[%s2155 + $0x8] sm:$0xf]
    %v2159 = vld [vmem:[%s2155 + $0xc] sm:$0xf]
    %v2160 = vld [vmem:[%s2155 + $0x10] sm:$0xf]
    %v2161 = vld [vmem:[%s2155 + $0x14] sm:$0xf]
    %v2162 = vld [vmem:[%s2155 + $0x18] sm:$0xf]
    %v2163 = vld [vmem:[%s2155 + $0x1c] sm:$0xf]
    %v2164 = vld [vmem:[%s2155 + $0x20] sm:$0xf]
    %v2165 = vld [vmem:[%s2155 + $0x24] sm:$0xf]
    %v2166 = vld [vmem:[%s2155 + $0x28] sm:$0xf]
    %v2167 = vld [vmem:[%s2155 + $0x2c] sm:$0xf]
    %v2168 = vld [vmem:[%s2155 + $0x30] sm:$0xf]
    %v2169 = vld [vmem:[%s2155 + $0x34] sm:$0xf]
    %v2170 = vld [vmem:[%s2155 + $0x38] sm:$0xf]
    %v2171 = vld [vmem:[%s2155 + $0x3c] sm:$0xf]
    %s2172 = scalar_lea.vmem [#allocation17], 1
    %v2173 = vld [vmem:[%s2172] sm:$0x1]
    %v2175 = vperm.slane %v2173, 0
    %v2193 = vunpack.c.l.b16 %v2156
    %v2194 = vunpack.c.l.b16 %v2157
    %v2195 = vunpack.c.l.b16 %v2158
    %v2196 = vunpack.c.l.b16 %v2159
    %v2197 = vunpack.c.l.b16 %v2160
    %v2198 = vunpack.c.l.b16 %v2161
    %v2199 = vunpack.c.l.b16 %v2162
    %v2200 = vunpack.c.l.b16 %v2163
    %v2201 = vunpack.c.l.b16 %v2164
    %v2202 = vunpack.c.l.b16 %v2165
    %v2203 = vunpack.c.l.b16 %v2166
    %v2204 = vunpack.c.l.b16 %v2167
    %v2205 = vunpack.c.l.b16 %v2168
    %v2206 = vunpack.c.l.b16 %v2169
    %v2207 = vunpack.c.l.b16 %v2170
    %v2208 = vunpack.c.l.b16 %v2171
    %v2209 = vpack.c.b16 %v2194, %v2193
    %v2210 = vpack.c.b16 %v2196, %v2195
    %v2211 = vpack.c.b16 %v2198, %v2197
    %v2212 = vpack.c.b16 %v2200, %v2199
    %v2213 = vpack.c.b16 %v2202, %v2201
    %v2214 = vpack.c.b16 %v2204, %v2203
    %v2215 = vpack.c.b16 %v2206, %v2205
    %v2216 = vpack.c.b16 %v2208, %v2207
    %2225 = vmatpush.bf16.msra.mxu0 %v2216
    %2226 = vmatpush.bf16.msra.mxu0 %v2215
    %2227 = vmatpush.bf16.msra.mxu0 %v2214
    %2228 = vmatpush.bf16.msra.mxu0 %v2213
    %2229 = vmatpush.bf16.msra.mxu0 %v2212
    %2230 = vmatpush.bf16.msra.mxu0 %v2211
    %2231 = vmatpush.bf16.msra.mxu0 %v2210
    %2232 = vmatpush.bf16.msra.mxu0 %v2209
    %2233 = vmatmul.bf16.gmra.mxu0 %v2154
    %v2234 = vpop.f32.mrf.mxu0
    %v2235 = vadd.f32 %v2175, %v2234
    %v2236 = vpop.f32.mrf.mxu0
    %v2237 = vadd.f32 %v2175, %v2236
    %2238 = vdwg.mxu0
    %v2239 = vadd.f32 %v2065, %v2235
    %v2240 = vadd.f32 %v2066, %v2237
    %2241 = vadd.xlane.f32.xlu0 %v2239
    %v2242 = vpop.xlane.xlu0 %2241
    %2243 = vadd.xlane.f32.xlu0 %v2240
    %v2244 = vpop.xlane.xlu0 %2243
    %v2245 = vmul.f32 %v2242, 0.03125
    %v2246 = vmul.f32 %v2244, 0.03125
    %v2247 = vmul.f32 %v2239, %v2239
    %v2248 = vmul.f32 %v2240, %v2240
    %2249 = vadd.xlane.f32.xlu0 %v2247
    %v2250 = vpop.xlane.xlu0 %2249
    %2251 = vadd.xlane.f32.xlu0 %v2248
    %v2252 = vpop.xlane.xlu0 %2251
    %v2253 = vmul.f32 %v2250, 0.03125
    %v2254 = vmul.f32 %v2252, 0.03125
    %v2255 = vmul.f32 %v2245, %v2245
    %v2256 = vmul.f32 %v2246, %v2246
    %v2257 = vsub.f32 %v2253, %v2255
    %v2258 = vsub.f32 %v2254, %v2256
    %v2259 = vmax.f32 %v2257, 0.0
    %v2260 = vmax.f32 %v2258, 0.0
    %v2261 = vsub.f32 %v2239, %v2245
    %v2262 = vsub.f32 %v2240, %v2246
    %v2263 = vadd.f32 %v2259, 1e-05
    %v2264 = vadd.f32 %v2260, 1e-05
    %v2265 = vrsqrt.pop %v2263
    %v2266 = vmul.f32 %v2265, %v2263
    %v2267 = vmul.f32 %v2266, %v2265
    %v2268 = vmul.f32 0.5, %v2267
    %v2269 = vsub.f32 1.5, %v2268
    %v2270 = vmul.f32 %v2265, %v2269
    %vm2271 = vweird.f32 %v2263
    %vm2272 = vweird.f32 %v2265
    %vm2273 = vmor %vm2271, %vm2272
    %v2274 = vsel %vm2273, %v2265, %v2270
    %v2275 = vrsqrt.pop %v2264
    %v2276 = vmul.f32 %v2275, %v2264
    %v2277 = vmul.f32 %v2276, %v2275
    %v2278 = vmul.f32 0.5, %v2277
    %v2279 = vsub.f32 1.5, %v2278
    %v2280 = vmul.f32 %v2275, %v2279
    %vm2281 = vweird.f32 %v2264
    %vm2282 = vweird.f32 %v2275
    %vm2283 = vmor %vm2281, %vm2282
    %v2284 = vsel %vm2283, %v2275, %v2280
    %v2285 = vmul.f32 %v2261, %v2274
    %v2286 = vmul.f32 %v2262, %v2284
    %v2287 = vperm.slane %v1247, 2
    %v2288 = vmul.f32 %v2285, %v2287
    %v2289 = vmul.f32 %v2286, %v2287
    %v2290 = vperm.slane %v1247, 3
    %v2291 = vadd.f32 %v2288, %v2290
    %v2292 = vadd.f32 %v2289, %v2290
    %2293 = vst [vmem:[#allocation19] sm:$0xff] %v2291
    %2294 = vst [vmem:[#allocation19 + $0x8] sm:$0xff] %v2292
    // Predicated region
    $region86: #{tpu_custom_call.1} parent=1 // pred_check
      _
    $region87: #{tpu_custom_call.1} parent=1 // pred_check_branch
      %2296 = sbr.rel (0) target = $region89
    $region88: #{tpu_custom_call.1} parent=1 // pred_region
      %2298 = vsyncadd [#allocation4], 0
      %s2299 = sshll.u32 [#allocation19], 4
      %s2300 = int_to_ptr.vmem [resolvable:$true] %s2299
      %s2301 = sshll.u32 %s11, 4
      %s2302 = int_to_ptr.hbm [resolvable:$true] %s2301
      %2307 = dma.vmem_to_hbm [thread:$0]  %s2300, 256, %s2302, [#allocation4], 128, 128, 8
    $region89: #{tpu_custom_call.1} parent=1 // pred_fallthru
      _
    // Predicated region
    $region90: #{tpu_custom_call.1} parent=1 // pred_check
      _
    $region91: #{tpu_custom_call.1} parent=1 // pred_check_branch
      %2309 = sbr.rel (0) target = $region93
    $region92: #{tpu_custom_call.1} parent=1 // pred_region
      %2311 = dma.done [#allocation4], 256
    $region93: #{tpu_custom_call.1} parent=1 // pred_fallthru
      _
    %2312 = vsyncpa [#allocation3], 1
    %2313 = vsyncpa [#allocation6], 1
    %2314 = vsyncpa [#allocation9], 1
    %2315 = vsyncpa [#allocation12], 1
    %2316 = vsyncpa [#allocation15], 1
    %2317 = vsyncpa [#allocation18], 1
    %2318 = vsyncpa [#allocation4], 1

// kernel: tpu_custom_call.1
$region0: #{tpu_custom_call.1}
  #allocation0 [shape = 'u32[]', space=smem, size = 0x4, offset = 0x4, fixed_abs, tag = 'smem constant byte address 0x4 - core index']
  #allocation1 [shape = 'u32[72,128]{1,0:T(1,128)}', space=vmem, size = 0x9000, scoped, tag = 'internal scratch']
  %s0 = inlined_call_operand.hbm [shape: f32[2,8,128], index: 0, kind: input, shape index: {}]
  %s1 = inlined_call_operand.hbm [shape: f32[2,1,8], index: 1, kind: input, shape index: {}]
  %s2 = inlined_call_operand.hbm [shape: bf16[2,128,768], index: 2, kind: input, shape index: {}]
  %s3 = inlined_call_operand.hbm [shape: f32[2,1,768], index: 3, kind: input, shape index: {}]
  %s4 = inlined_call_operand.hbm [shape: bf16[2,256,128], index: 4, kind: input, shape index: {}]
  %s5 = inlined_call_operand.hbm [shape: f32[2,1,128], index: 5, kind: input, shape index: {}]
  %s6 = inlined_call_operand.hbm [shape: bf16[2,128,128], index: 6, kind: input, shape index: {}]
  %s7 = inlined_call_operand.hbm [shape: f32[2,1,128], index: 7, kind: input, shape index: {}]
  %s8 = inlined_call_operand.hbm [shape: bf16[2,128,128], index: 8, kind: input, shape index: {}]
  %s9 = inlined_call_operand.hbm [shape: f32[2,1,128], index: 9, kind: input, shape index: {}]
  %s10 = inlined_call_operand.vmem [shape: f32[2,4,128], index: 10, kind: input, shape index: {}]
  %s11 = inlined_call_operand.hbm [shape: f32[2,8,128], index: 11, kind: output, shape index: {}]
  %s12 = sld [smem:[#allocation0]]
  $region94: #{tpu_custom_call.1} parent=0
    _
  %s14 = ssub.s32 1, %s12
  %s15 = scalar_select 0, %s14, %s12
  $region1: #{tpu_custom_call.1} parent=0
    #allocation2 [shape = 'u8[8192]{0}', space=vmem, size = 0x2000, scoped, tag = 'input window, operand 0, single buffered']
    #allocation3 [shape = 's32[1]{0}', space=sflag, size = 0x4, scoped, tag = 'scoped memory for tpu_custom_call.1']
    #allocation4 [shape = 's32[1]{0}', space=sflag, size = 0x4, scoped, tag = 'scoped memory for tpu_custom_call.1']
    #allocation5 [shape = 'u8[1024]{0}', space=vmem, size = 0x400, scoped, tag = 'input window, operand 1, single buffered']
    #allocation6 [shape = 's32[1]{0}', space=sflag, size = 0x4, scoped, tag = 'scoped memory for tpu_custom_call.1']
    #allocation7 [shape = 'u8[393216]{0}', space=vmem, size = 0x60000, scoped, tag = 'input window, operand 2, single buffered']
    #allocation8 [shape = 'u8[6144]{0}', space=vmem, size = 0x1800, scoped, tag = 'input window, operand 3, single buffered']
    #allocation9 [shape = 's32[1]{0}', space=sflag, size = 0x4, scoped, tag = 'scoped memory for tpu_custom_call.1']
    #allocation10 [shape = 'u8[131072]{0}', space=vmem, size = 0x20000, scoped, tag = 'input window, operand 4, single buffered']
    #allocation11 [shape = 'u8[1024]{0}', space=vmem, size = 0x400, scoped, tag = 'input window, operand 5, single buffered']
    #allocation12 [shape = 's32[1]{0}', space=sflag, size = 0x4, scoped, tag = 'scoped memory for tpu_custom_call.1']
    #allocation13 [shape = 'u8[65536]{0}', space=vmem, size = 0x10000, scoped, tag = 'input window, operand 6, single buffered']
    #allocation14 [shape = 'u8[1024]{0}', space=vmem, size = 0x400, scoped, tag = 'input window, operand 7, single buffered']
    #allocation15 [shape = 's32[1]{0}', space=sflag, size = 0x4, scoped, tag = 'scoped memory for tpu_custom_call.1']
    #allocation16 [shape = 'u8[65536]{0}', space=vmem, size = 0x10000, scoped, tag = 'input window, operand 8, single buffered']
    #allocation17 [shape = 'u8[1024]{0}', space=vmem, size = 0x400, scoped, tag = 'input window, operand 9, single buffered']
    #allocation18 [shape = 's32[1]{0}', space=sflag, size = 0x4, scoped, tag = 'scoped memory for tpu_custom_call.1']
    #allocation19 [shape = 'u8[8192]{0}', space=vmem, size = 0x2000, scoped, tag = 'output window, operand 0, single buffered']
    %16 = vsyncpa [#allocation3], 0
    %17 = vsyncpa [#allocation6], 0
    %18 = vsyncpa [#allocation9], 0
    %19 = vsyncpa [#allocation12], 0
    %20 = vsyncpa [#allocation15], 0
    %21 = vsyncpa [#allocation18], 0
    %22 = vsyncpa [#allocation4], 0
    // Predicated region
    $region2: #{tpu_custom_call.1} parent=1 // pred_check
      _
    $region3: #{tpu_custom_call.1} parent=1 // pred_check_branch
      %24 = sbr.rel (0) target = $region5
    $region4: #{tpu_custom_call.1} parent=1 // pred_region
      %26 = vsyncadd [#allocation3], 0
      %s27 = sshll.u32 %s0, 4
      %s28 = int_to_ptr.hbm [resolvable:$true] %s27
      %s29 = sshll.u32 [#allocation2], 4
      %s30 = int_to_ptr.vmem [resolvable:$true] %s29
      %35 = dma.hbm_to_vmem [thread:$0]  %s28, 256, %s30, [#allocation3], 128, 128, 8
    $region5: #{tpu_custom_call.1} parent=1 // pred_fallthru
      _
    // Predicated region
    $region6: #{tpu_custom_call.1} parent=1 // pred_check
      _
    $region7: #{tpu_custom_call.1} parent=1 // pred_check_branch
      %37 = sbr.rel (0) target = $region9
    $region8: #{tpu_custom_call.1} parent=1 // pred_region
      %39 = vsyncadd [#allocation6], 0
      %s40 = sshll.u32 %s1, 4
      %s41 = int_to_ptr.hbm [resolvable:$true] %s40
      %s42 = sshll.u32 [#allocation5], 4
      %s43 = int_to_ptr.vmem [resolvable:$true] %s42
      %48 = dma.hbm_to_vmem [thread:$0]  %s41, 32, %s43, [#allocation6], 16, 16, 1
    $region9: #{tpu_custom_call.1} parent=1 // pred_fallthru
      _
    // Predicated region
    $region10: #{tpu_custom_call.1} parent=1 // pred_check
      _
    $region11: #{tpu_custom_call.1} parent=1 // pred_check_branch
      %50 = sbr.rel (0) target = $region13
    $region12: #{tpu_custom_call.1} parent=1 // pred_region
      %52 = vsyncadd [#allocation6], 0
      %s53 = sshll.u32 %s2, 4
      %s54 = int_to_ptr.hbm [resolvable:$true] %s53
      %s55 = sshll.u32 [#allocation7], 4
      %s56 = int_to_ptr.vmem [resolvable:$true] %s55
      %61 = dma.hbm_to_vmem [thread:$0]  %s54, 12288, %s56, [#allocation6], 384, 384, 24
    $region13: #{tpu_custom_call.1} parent=1 // pred_fallthru
      _
    // Predicated region
    $region14: #{tpu_custom_call.1} parent=1 // pred_check
      _
    $region15: #{tpu_custom_call.1} parent=1 // pred_check_branch
      %63 = sbr.rel (0) target = $region17
    $region16: #{tpu_custom_call.1} parent=1 // pred_region
      %65 = vsyncadd [#allocation9], 0
      %s66 = sshll.u32 %s3, 4
      %s67 = int_to_ptr.hbm [resolvable:$true] %s66
      %s68 = sshll.u32 [#allocation8], 4
      %s69 = int_to_ptr.vmem [resolvable:$true] %s68
      %74 = dma.hbm_to_vmem [thread:$0]  %s67, 192, %s69, [#allocation9], 96, 96, 6
    $region17: #{tpu_custom_call.1} parent=1 // pred_fallthru
      _
    // Predicated region
    $region18: #{tpu_custom_call.1} parent=1 // pred_check
      _
    $region19: #{tpu_custom_call.1} parent=1 // pred_check_branch
      %76 = sbr.rel (0) target = $region21
    $region20: #{tpu_custom_call.1} parent=1 // pred_region
      %78 = vsyncadd [#allocation9], 0
      %s79 = sshll.u32 %s4, 4
      %s80 = int_to_ptr.hbm [resolvable:$true] %s79
      %s81 = sshll.u32 [#allocation10], 4
      %s82 = int_to_ptr.vmem [resolvable:$true] %s81
      %87 = dma.hbm_to_vmem [thread:$0]  %s80, 4096, %s82, [#allocation9], 64, 64, 4
    $region21: #{tpu_custom_call.1} parent=1 // pred_fallthru
      _
    // Predicated region
    $region22: #{tpu_custom_call.1} parent=1 // pred_check
      _
    $region23: #{tpu_custom_call.1} parent=1 // pred_check_branch
      %89 = sbr.rel (0) target = $region25
    $region24: #{tpu_custom_call.1} parent=1 // pred_region
      %91 = vsyncadd [#allocation12], 0
      %s92 = sshll.u32 %s5, 4
      %s93 = int_to_ptr.hbm [resolvable:$true] %s92
      %s94 = sshll.u32 [#allocation11], 4
      %s95 = int_to_ptr.vmem [resolvable:$true] %s94
      %100 = dma.hbm_to_vmem [thread:$0]  %s93, 32, %s95, [#allocation12], 16, 16, 1
    $region25: #{tpu_custom_call.1} parent=1 // pred_fallthru
      _
    // Predicated region
    $region26: #{tpu_custom_call.1} parent=1 // pred_check
      _
    $region27: #{tpu_custom_call.1} parent=1 // pred_check_branch
      %102 = sbr.rel (0) target = $region29
    $region28: #{tpu_custom_call.1} parent=1 // pred_region
      %104 = vsyncadd [#allocation12], 0
      %s105 = sshll.u32 %s6, 4
      %s106 = int_to_ptr.hbm [resolvable:$true] %s105
      %s107 = sshll.u32 [#allocation13], 4
      %s108 = int_to_ptr.vmem [resolvable:$true] %s107
      %113 = dma.hbm_to_vmem [thread:$0]  %s106, 2048, %s108, [#allocation12], 64, 64, 4
    $region29: #{tpu_custom_call.1} parent=1 // pred_fallthru
      _
    // Predicated region
    $region30: #{tpu_custom_call.1} parent=1 // pred_check
      _
    $region31: #{tpu_custom_call.1} parent=1 // pred_check_branch
      %115 = sbr.rel (0) target = $region33
    $region32: #{tpu_custom_call.1} parent=1 // pred_region
      %117 = vsyncadd [#allocation15], 0
      %s118 = sshll.u32 %s7, 4
      %s119 = int_to_ptr.hbm [resolvable:$true] %s118
      %s120 = sshll.u32 [#allocation14], 4
      %s121 = int_to_ptr.vmem [resolvable:$true] %s120
      %126 = dma.hbm_to_vmem [thread:$0]  %s119, 32, %s121, [#allocation15], 16, 16, 1
    $region33: #{tpu_custom_call.1} parent=1 // pred_fallthru
      _
    // Predicated region
    $region34: #{tpu_custom_call.1} parent=1 // pred_check
      _
    $region35: #{tpu_custom_call.1} parent=1 // pred_check_branch
      %128 = sbr.rel (0) target = $region37
    $region36: #{tpu_custom_call.1} parent=1 // pred_region
      %130 = vsyncadd [#allocation15], 0
      %s131 = sshll.u32 %s8, 4
      %s132 = int_to_ptr.hbm [resolvable:$true] %s131
      %s133 = sshll.u32 [#allocation16], 4
      %s134 = int_to_ptr.vmem [resolvable:$true] %s133
      %139 = dma.hbm_to_vmem [thread:$0]  %s132, 2048, %s134, [#allocation15], 64, 64, 4
    $region37: #{tpu_custom_call.1} parent=1 // pred_fallthru
      _
    // Predicated region
    $region38: #{tpu_custom_call.1} parent=1 // pred_check
      _
    $region39: #{tpu_custom_call.1} parent=1 // pred_check_branch
      %141 = sbr.rel (0) target = $region41
    $region40: #{tpu_custom_call.1} parent=1 // pred_region
      %143 = vsyncadd [#allocation18], 0
      %s144 = sshll.u32 %s9, 4
      %s145 = int_to_ptr.hbm [resolvable:$true] %s144
      %s146 = sshll.u32 [#allocation17], 4
      %s147 = int_to_ptr.vmem [resolvable:$true] %s146
      %152 = dma.hbm_to_vmem [thread:$0]  %s145, 32, %s147, [#allocation18], 16, 16, 1
    $region41: #{tpu_custom_call.1} parent=1 // pred_fallthru
      _
    // Predicated region
    $region42: #{tpu_custom_call.1} parent=1 // pred_check
      _
    $region43: #{tpu_custom_call.1} parent=1 // pred_check_branch
      %154 = sbr.rel (0) target = $region45
    $region44: #{tpu_custom_call.1} parent=1 // pred_region
      _
    $region45: #{tpu_custom_call.1} parent=1 // pred_fallthru
      _
    // Predicated region
    $region46: #{tpu_custom_call.1} parent=1 // pred_check
      _
    $region47: #{tpu_custom_call.1} parent=1 // pred_check_branch
      %156 = sbr.rel (0) target = $region49
    $region48: #{tpu_custom_call.1} parent=1 // pred_region
      %158 = dma.done [#allocation3], 256
    $region49: #{tpu_custom_call.1} parent=1 // pred_fallthru
      _
    // Predicated region
    $region50: #{tpu_custom_call.1} parent=1 // pred_check
      _
    $region51: #{tpu_custom_call.1} parent=1 // pred_check_branch
      %160 = sbr.rel (0) target = $region53
    $region52: #{tpu_custom_call.1} parent=1 // pred_region
      %162 = dma.done [#allocation6], 32
    $region53: #{tpu_custom_call.1} parent=1 // pred_fallthru
      _
    // Predicated region
    $region54: #{tpu_custom_call.1} parent=1 // pred_check
      _
    $region55: #{tpu_custom_call.1} parent=1 // pred_check_branch
      %164 = sbr.rel (0) target = $region57
    $region56: #{tpu_custom_call.1} parent=1 // pred_region
      %166 = dma.done [#allocation6], 12288
    $region57: #{tpu_custom_call.1} parent=1 // pred_fallthru
      _
    // Predicated region
    $region58: #{tpu_custom_call.1} parent=1 // pred_check
      _
    $region59: #{tpu_custom_call.1} parent=1 // pred_check_branch
      %168 = sbr.rel (0) target = $region61
    $region60: #{tpu_custom_call.1} parent=1 // pred_region
      %170 = dma.done [#allocation9], 192
    $region61: #{tpu_custom_call.1} parent=1 // pred_fallthru
      _
    // Predicated region
    $region62: #{tpu_custom_call.1} parent=1 // pred_check
      _
    $region63: #{tpu_custom_call.1} parent=1 // pred_check_branch
      %172 = sbr.rel (0) target = $region65
    $region64: #{tpu_custom_call.1} parent=1 // pred_region
      %174 = dma.done [#allocation9], 4096
    $region65: #{tpu_custom_call.1} parent=1 // pred_fallthru
      _
    // Predicated region
    $region66: #{tpu_custom_call.1} parent=1 // pred_check
      _
    $region67: #{tpu_custom_call.1} parent=1 // pred_check_branch
      %176 = sbr.rel (0) target = $region69
    $region68: #{tpu_custom_call.1} parent=1 // pred_region
      %178 = dma.done [#allocation12], 32
    $region69: #{tpu_custom_call.1} parent=1 // pred_fallthru
      _
    // Predicated region
    $region70: #{tpu_custom_call.1} parent=1 // pred_check
      _
    $region71: #{tpu_custom_call.1} parent=1 // pred_check_branch
      %180 = sbr.rel (0) target = $region73
    $region72: #{tpu_custom_call.1} parent=1 // pred_region
      %182 = dma.done [#allocation12], 2048
    $region73: #{tpu_custom_call.1} parent=1 // pred_fallthru
      _
    // Predicated region
    $region74: #{tpu_custom_call.1} parent=1 // pred_check
      _
    $region75: #{tpu_custom_call.1} parent=1 // pred_check_branch
      %184 = sbr.rel (0) target = $region77
    $region76: #{tpu_custom_call.1} parent=1 // pred_region
      %186 = dma.done [#allocation15], 32
    $region77: #{tpu_custom_call.1} parent=1 // pred_fallthru
      _
    // Predicated region
    $region78: #{tpu_custom_call.1} parent=1 // pred_check
      _
    $region79: #{tpu_custom_call.1} parent=1 // pred_check_branch
      %188 = sbr.rel (0) target = $region81
    $region80: #{tpu_custom_call.1} parent=1 // pred_region
      %190 = dma.done [#allocation15], 2048
    $region81: #{tpu_custom_call.1} parent=1 // pred_fallthru
      _
    // Predicated region
    $region82: #{tpu_custom_call.1} parent=1 // pred_check
      _
    $region83: #{tpu_custom_call.1} parent=1 // pred_check_branch
      %192 = sbr.rel (0) target = $region85
    $region84: #{tpu_custom_call.1} parent=1 // pred_region
      %194 = dma.done [#allocation18], 32
    $region85: #{tpu_custom_call.1} parent=1 // pred_fallthru
      _
    %v196 = vld [vmem:[#allocation2] sm:$0xff]
    %v197 = vld [vmem:[#allocation2 + $0x8] sm:$0xff]
    %v198 = vld [vmem:[#allocation5] sm:$0x1]
    %v199 = vld [vmem:[#allocation5 + $0x1] sm:$0x1]
    %v202 = vperm.slane %v198, 0
    %v203 = vperm.slane %v199, 0
    %v206 = vld [vmem:[%s10] sm:$0xf]
    %v207 = vpack.c.bf16 %v197, %v196
    %v208 = vld [vmem:[#allocation7] sm:$0xff]
    %v209 = vld [vmem:[#allocation7 + $0x8] sm:$0xff]
    %v210 = vld [vmem:[#allocation7 + $0x10] sm:$0xff]
    %v211 = vld [vmem:[#allocation7 + $0x18] sm:$0xff]
    %v212 = vld [vmem:[#allocation7 + $0x20] sm:$0xff]
    %v213 = vld [vmem:[#allocation7 + $0x28] sm:$0xff]
    %v214 = vld [vmem:[#allocation7 + $0x30] sm:$0xff]
    %v215 = vld [vmem:[#allocation7 + $0x38] sm:$0xff]
    %v216 = vld [vmem:[#allocation7 + $0x40] sm:$0xff]
    %v217 = vld [vmem:[#allocation7 + $0x48] sm:$0xff]
    %v218 = vld [vmem:[#allocation7 + $0x50] sm:$0xff]
    %v219 = vld [vmem:[#allocation7 + $0x58] sm:$0xff]
    %v220 = vld [vmem:[#allocation7 + $0x60] sm:$0xff]
    %v221 = vld [vmem:[#allocation7 + $0x68] sm:$0xff]
    %v222 = vld [vmem:[#allocation7 + $0x70] sm:$0xff]
    %v223 = vld [vmem:[#allocation7 + $0x78] sm:$0xff]
    %v224 = vld [vmem:[#allocation7 + $0x80] sm:$0xff]
    %v225 = vld [vmem:[#allocation7 + $0x88] sm:$0xff]
    %v226 = vld [vmem:[#allocation7 + $0x90] sm:$0xff]
    %v227 = vld [vmem:[#allocation7 + $0x98] sm:$0xff]
    %v228 = vld [vmem:[#allocation7 + $0xa0] sm:$0xff]
    %v229 = vld [vmem:[#allocation7 + $0xa8] sm:$0xff]
    %v230 = vld [vmem:[#allocation7 + $0xb0] sm:$0xff]
    %v231 = vld [vmem:[#allocation7 + $0xb8] sm:$0xff]
    %v232 = vld [vmem:[#allocation7 + $0xc0] sm:$0xff]
    %v233 = vld [vmem:[#allocation7 + $0xc8] sm:$0xff]
    %v234 = vld [vmem:[#allocation7 + $0xd0] sm:$0xff]
    %v235 = vld [vmem:[#allocation7 + $0xd8] sm:$0xff]
    %v236 = vld [vmem:[#allocation7 + $0xe0] sm:$0xff]
    %v237 = vld [vmem:[#allocation7 + $0xe8] sm:$0xff]
    %v238 = vld [vmem:[#allocation7 + $0xf0] sm:$0xff]
    %v239 = vld [vmem:[#allocation7 + $0xf8] sm:$0xff]
    %v240 = vld [vmem:[#allocation7 + $0x100] sm:$0xff]
    %v241 = vld [vmem:[#allocation7 + $0x108] sm:$0xff]
    %v242 = vld [vmem:[#allocation7 + $0x110] sm:$0xff]
    %v243 = vld [vmem:[#allocation7 + $0x118] sm:$0xff]
    %v244 = vld [vmem:[#allocation7 + $0x120] sm:$0xff]
    %v245 = vld [vmem:[#allocation7 + $0x128] sm:$0xff]
    %v246 = vld [vmem:[#allocation7 + $0x130] sm:$0xff]
    %v247 = vld [vmem:[#allocation7 + $0x138] sm:$0xff]
    %v248 = vld [vmem:[#allocation7 + $0x140] sm:$0xff]
    %v249 = vld [vmem:[#allocation7 + $0x148] sm:$0xff]
    %v250 = vld [vmem:[#allocation7 + $0x150] sm:$0xff]
    %v251 = vld [vmem:[#allocation7 + $0x158] sm:$0xff]
    %v252 = vld [vmem:[#allocation7 + $0x160] sm:$0xff]
    %v253 = vld [vmem:[#allocation7 + $0x168] sm:$0xff]
    %v254 = vld [vmem:[#allocation7 + $0x170] sm:$0xff]
    %v255 = vld [vmem:[#allocation7 + $0x178] sm:$0xff]
    %v256 = vld [vmem:[#allocation8] sm:$0x3f]
    %v258 = vperm.slane %v256, 0
    %v259 = vperm.slane %v256, 1
    %v260 = vperm.slane %v256, 2
    %v261 = vperm.slane %v256, 3
    %v262 = vperm.slane %v256, 4
    %v263 = vperm.slane %v256, 5
    %v318 = vunpack.c.l.b16 %v208
    %v319 = vunpack.c.h.b16 %v208
    %v320 = vunpack.c.l.b16 %v209
    %v321 = vunpack.c.h.b16 %v209
    %v322 = vunpack.c.l.b16 %v210
    %v323 = vunpack.c.h.b16 %v210
    %v324 = vunpack.c.l.b16 %v211
    %v325 = vunpack.c.h.b16 %v211
    %v326 = vunpack.c.l.b16 %v212
    %v327 = vunpack.c.h.b16 %v212
    %v328 = vunpack.c.l.b16 %v213
    %v329 = vunpack.c.h.b16 %v213
    %v330 = vunpack.c.l.b16 %v214
    %v331 = vunpack.c.h.b16 %v214
    %v332 = vunpack.c.l.b16 %v215
    %v333 = vunpack.c.h.b16 %v215
    %v334 = vunpack.c.l.b16 %v216
    %v335 = vunpack.c.h.b16 %v216
    %v336 = vunpack.c.l.b16 %v217
    %v337 = vunpack.c.h.b16 %v217
    %v338 = vunpack.c.l.b16 %v218
    %v339 = vunpack.c.h.b16 %v218
    %v340 = vunpack.c.l.b16 %v219
    %v341 = vunpack.c.h.b16 %v219
    %v342 = vunpack.c.l.b16 %v220
    %v343 = vunpack.c.h.b16 %v220
    %v344 = vunpack.c.l.b16 %v221
    %v345 = vunpack.c.h.b16 %v221
    %v346 = vunpack.c.l.b16 %v222
    %v347 = vunpack.c.h.b16 %v222
    %v348 = vunpack.c.l.b16 %v223
    %v349 = vunpack.c.h.b16 %v223
    %v350 = vunpack.c.l.b16 %v224
    %v351 = vunpack.c.h.b16 %v224
    %v352 = vunpack.c.l.b16 %v225
    %v353 = vunpack.c.h.b16 %v225
    %v354 = vunpack.c.l.b16 %v226
    %v355 = vunpack.c.h.b16 %v226
    %v356 = vunpack.c.l.b16 %v227
    %v357 = vunpack.c.h.b16 %v227
    %v358 = vunpack.c.l.b16 %v228
    %v359 = vunpack.c.h.b16 %v228
    %v360 = vunpack.c.l.b16 %v229
    %v361 = vunpack.c.h.b16 %v229
    %v362 = vunpack.c.l.b16 %v230
    %v363 = vunpack.c.h.b16 %v230
    %v364 = vunpack.c.l.b16 %v231
    %v365 = vunpack.c.h.b16 %v231
    %v366 = vunpack.c.l.b16 %v232
    %v367 = vunpack.c.h.b16 %v232
    %v368 = vunpack.c.l.b16 %v233
    %v369 = vunpack.c.h.b16 %v233
    %v370 = vunpack.c.l.b16 %v234
    %v371 = vunpack.c.h.b16 %v234
    %v372 = vunpack.c.l.b16 %v235
    %v373 = vunpack.c.h.b16 %v235
    %v374 = vunpack.c.l.b16 %v236
    %v375 = vunpack.c.h.b16 %v236
    %v376 = vunpack.c.l.b16 %v237
    %v377 = vunpack.c.h.b16 %v237
    %v378 = vunpack.c.l.b16 %v238
    %v379 = vunpack.c.h.b16 %v238
    %v380 = vunpack.c.l.b16 %v239
    %v381 = vunpack.c.h.b16 %v239
    %v382 = vunpack.c.l.b16 %v240
    %v383 = vunpack.c.h.b16 %v240
    %v384 = vunpack.c.l.b16 %v241
    %v385 = vunpack.c.h.b16 %v241
    %v386 = vunpack.c.l.b16 %v242
    %v387 = vunpack.c.h.b16 %v242
    %v388 = vunpack.c.l.b16 %v243
    %v389 = vunpack.c.h.b16 %v243
    %v390 = vunpack.c.l.b16 %v244
    %v391 = vunpack.c.h.b16 %v244
    %v392 = vunpack.c.l.b16 %v245
    %v393 = vunpack.c.h.b16 %v245
    %v394 = vunpack.c.l.b16 %v246
    %v395 = vunpack.c.h.b16 %v246
    %v396 = vunpack.c.l.b16 %v247
    %v397 = vunpack.c.h.b16 %v247
    %v398 = vunpack.c.l.b16 %v248
    %v399 = vunpack.c.h.b16 %v248
    %v400 = vunpack.c.l.b16 %v249
    %v401 = vunpack.c.h.b16 %v249
    %v402 = vunpack.c.l.b16 %v250
    %v403 = vunpack.c.h.b16 %v250
    %v404 = vunpack.c.l.b16 %v251
    %v405 = vunpack.c.h.b16 %v251
    %v406 = vunpack.c.l.b16 %v252
    %v407 = vunpack.c.h.b16 %v252
    %v408 = vunpack.c.l.b16 %v253
    %v409 = vunpack.c.h.b16 %v253
    %v410 = vunpack.c.l.b16 %v254
    %v411 = vunpack.c.h.b16 %v254
    %v412 = vunpack.c.l.b16 %v255
    %v413 = vunpack.c.h.b16 %v255
    %v414 = vpack.c.b16 %v324, %v318
    %v415 = vpack.c.b16 %v325, %v319
    %v416 = vpack.c.b16 %v326, %v320
    %v417 = vpack.c.b16 %v327, %v321
    %v418 = vpack.c.b16 %v328, %v322
    %v419 = vpack.c.b16 %v329, %v323
    %v420 = vpack.c.b16 %v336, %v330
    %v421 = vpack.c.b16 %v337, %v331
    %v422 = vpack.c.b16 %v338, %v332
    %v423 = vpack.c.b16 %v339, %v333
    %v424 = vpack.c.b16 %v340, %v334
    %v425 = vpack.c.b16 %v341, %v335
    %v426 = vpack.c.b16 %v348, %v342
    %v427 = vpack.c.b16 %v349, %v343
    %v428 = vpack.c.b16 %v350, %v344
    %v429 = vpack.c.b16 %v351, %v345
    %v430 = vpack.c.b16 %v352, %v346
    %v431 = vpack.c.b16 %v353, %v347
    %v432 = vpack.c.b16 %v360, %v354
    %v433 = vpack.c.b16 %v361, %v355
    %v434 = vpack.c.b16 %v362, %v356
    %v435 = vpack.c.b16 %v363, %v357
    %v436 = vpack.c.b16 %v364, %v358
    %v437 = vpack.c.b16 %v365, %v359
    %v438 = vpack.c.b16 %v372, %v366
    %v439 = vpack.c.b16 %v373, %v367
    %v440 = vpack.c.b16 %v374, %v368
    %v441 = vpack.c.b16 %v375, %v369
    %v442 = vpack.c.b16 %v376, %v370
    %v443 = vpack.c.b16 %v377, %v371
    %v444 = vpack.c.b16 %v384, %v378
    %v445 = vpack.c.b16 %v385, %v379
    %v446 = vpack.c.b16 %v386, %v380
    %v447 = vpack.c.b16 %v387, %v381
    %v448 = vpack.c.b16 %v388, %v382
    %v449 = vpack.c.b16 %v389, %v383
    %v450 = vpack.c.b16 %v396, %v390
    %v451 = vpack.c.b16 %v397, %v391
    %v452 = vpack.c.b16 %v398, %v392
    %v453 = vpack.c.b16 %v399, %v393
    %v454 = vpack.c.b16 %v400, %v394
    %v455 = vpack.c.b16 %v401, %v395
    %v456 = vpack.c.b16 %v408, %v402
    %v457 = vpack.c.b16 %v409, %v403
    %v458 = vpack.c.b16 %v410, %v404
    %v459 = vpack.c.b16 %v411, %v405
    %v460 = vpack.c.b16 %v412, %v406
    %v461 = vpack.c.b16 %v413, %v407
    %510 = vmatpush.bf16.msra.mxu0 %v456
    %511 = vmatpush.bf16.msra.mxu0 %v450
    %512 = vmatpush.bf16.msra.mxu0 %v444
    %513 = vmatpush.bf16.msra.mxu0 %v438
    %514 = vmatpush.bf16.msra.mxu0 %v432
    %515 = vmatpush.bf16.msra.mxu0 %v426
    %516 = vmatpush.bf16.msra.mxu0 %v420
    %517 = vmatpush.bf16.msra.mxu0 %v414
    %518 = vmatmul.bf16.gmra.mxu0 %v207
    %v519 = vpop.f32.mrf.mxu0
    %v520 = vadd.f32 %v258, %v519
    %v521 = vpop.f32.mrf.mxu0
    %v522 = vadd.f32 %v258, %v521
    %523 = vdwg.mxu0
    %524 = vmatpush.bf16.msra.mxu0 %v457
    %525 = vmatpush.bf16.msra.mxu0 %v451
    %526 = vmatpush.bf16.msra.mxu0 %v445
    %527 = vmatpush.bf16.msra.mxu0 %v439
    %528 = vmatpush.bf16.msra.mxu0 %v433
    %529 = vmatpush.bf16.msra.mxu0 %v427
    %530 = vmatpush.bf16.msra.mxu0 %v421
    %531 = vmatpush.bf16.msra.mxu0 %v415
    %532 = vmatmul.bf16.gmra.mxu0 %v207
    %v533 = vpop.f32.mrf.mxu0
    %v534 = vadd.f32 %v259, %v533
    %v535 = vpop.f32.mrf.mxu0
    %v536 = vadd.f32 %v259, %v535
    %537 = vdwg.mxu0
    %538 = vmatpush.bf16.msra.mxu0 %v458
    %539 = vmatpush.bf16.msra.mxu0 %v452
    %540 = vmatpush.bf16.msra.mxu0 %v446
    %541 = vmatpush.bf16.msra.mxu0 %v440
    %542 = vmatpush.bf16.msra.mxu0 %v434
    %543 = vmatpush.bf16.msra.mxu0 %v428
    %544 = vmatpush.bf16.msra.mxu0 %v422
    %545 = vmatpush.bf16.msra.mxu0 %v416
    %546 = vmatmul.bf16.gmra.mxu0 %v207
    %v547 = vpop.f32.mrf.mxu0
    %v548 = vadd.f32 %v260, %v547
    %v549 = vpop.f32.mrf.mxu0
    %v550 = vadd.f32 %v260, %v549
    %551 = vdwg.mxu0
    %552 = vmatpush.bf16.msra.mxu0 %v459
    %553 = vmatpush.bf16.msra.mxu0 %v453
    %554 = vmatpush.bf16.msra.mxu0 %v447
    %555 = vmatpush.bf16.msra.mxu0 %v441
    %556 = vmatpush.bf16.msra.mxu0 %v435
    %557 = vmatpush.bf16.msra.mxu0 %v429
    %558 = vmatpush.bf16.msra.mxu0 %v423
    %559 = vmatpush.bf16.msra.mxu0 %v417
    %560 = vmatmul.bf16.gmra.mxu0 %v207
    %v561 = vpop.f32.mrf.mxu0
    %v562 = vadd.f32 %v261, %v561
    %v563 = vpop.f32.mrf.mxu0
    %v564 = vadd.f32 %v261, %v563
    %565 = vdwg.mxu0
    %566 = vmatpush.bf16.msra.mxu0 %v460
    %567 = vmatpush.bf16.msra.mxu0 %v454
    %568 = vmatpush.bf16.msra.mxu0 %v448
    %569 = vmatpush.bf16.msra.mxu0 %v442
    %570 = vmatpush.bf16.msra.mxu0 %v436
    %571 = vmatpush.bf16.msra.mxu0 %v430
    %572 = vmatpush.bf16.msra.mxu0 %v424
    %573 = vmatpush.bf16.msra.mxu0 %v418
    %574 = vmatmul.bf16.gmra.mxu0 %v207
    %v575 = vpop.f32.mrf.mxu0
    %v576 = vadd.f32 %v262, %v575
    %v577 = vpop.f32.mrf.mxu0
    %v578 = vadd.f32 %v262, %v577
    %579 = vdwg.mxu0
    %580 = vmatpush.bf16.msra.mxu0 %v461
    %581 = vmatpush.bf16.msra.mxu0 %v455
    %582 = vmatpush.bf16.msra.mxu0 %v449
    %583 = vmatpush.bf16.msra.mxu0 %v443
    %584 = vmatpush.bf16.msra.mxu0 %v437
    %585 = vmatpush.bf16.msra.mxu0 %v431
    %586 = vmatpush.bf16.msra.mxu0 %v425
    %587 = vmatpush.bf16.msra.mxu0 %v419
    %588 = vmatmul.bf16.gmra.mxu0 %v207
    %v589 = vpop.f32.mrf.mxu0
    %v590 = vadd.f32 %v263, %v589
    %v591 = vpop.f32.mrf.mxu0
    %v592 = vadd.f32 %v263, %v591
    %593 = vdwg.mxu0
    %v594 = vpack.c.bf16 %v534, %v520
    %v595 = vpack.c.bf16 %v562, %v548
    %v596 = vpack.c.bf16 %v590, %v576
    %v597 = vpack.c.bf16 %v536, %v522
    %v598 = vpack.c.bf16 %v564, %v550
    %v599 = vpack.c.bf16 %v592, %v578
    %600 = vmatpush.bf16.xpose.msra.mxu0 0
    %601 = vmatpush.bf16.xpose.msra.mxu0 0
    %602 = vmatpush.bf16.xpose.msra.mxu0 0
    %603 = vmatpush.bf16.xpose.msra.mxu0 0
    %604 = vmatpush.bf16.xpose.msra.mxu0 0
    %605 = vmatpush.bf16.xpose.msra.mxu0 0
    %606 = vmatpush.bf16.xpose.msra.mxu0 0
    %607 = vmatpush.bf16.xpose.msra.mxu0 %v595
    %608 = vmatmul.bf16.gmra.mxu0 %v594
    %v609 = vpop.f32.mrf.mxu0
    %v610 = vadd.f32 %v202, %v609
    %v611 = vpop.f32.mrf.mxu0
    %612 = vdwg.mxu0
    %613 = vmatpush.bf16.xpose.msra.mxu0 0
    %614 = vmatpush.bf16.xpose.msra.mxu0 0
    %615 = vmatpush.bf16.xpose.msra.mxu0 0
    %616 = vmatpush.bf16.xpose.msra.mxu0 0
    %617 = vmatpush.bf16.xpose.msra.mxu0 0
    %618 = vmatpush.bf16.xpose.msra.mxu0 0
    %619 = vmatpush.bf16.xpose.msra.mxu0 0
    %620 = vmatpush.bf16.xpose.msra.mxu0 %v598
    %621 = vmatmul.bf16.gmra.mxu0 %v597
    %v622 = vpop.f32.mrf.mxu0
    %v623 = vadd.f32 %v203, %v622
    %v624 = vpop.f32.mrf.mxu0
    %625 = vdwg.mxu0
    %vm626 = vcmask 64512
    %v627 = vsel %vm626, %v610, -inf
    %628 = vmax.xlane.f32.xlu0 %v627
    %v629 = vpop.xlane.xlu0 %628
    %v630 = vsel %vm626, %v623, -inf
    %631 = vmax.xlane.f32.xlu0 %v630
    %v632 = vpop.xlane.xlu0 %631
    %v633 = vsub.f32 %v610, %v629
    %v634 = vsub.f32 %v623, %v632
    %v635 = vmul.f32 %v633, 1.442695
    %v636 = vpow.pop %v635
    %v637 = vmul.f32 %v634, 1.442695
    %v638 = vpow.pop %v637
    %v639 = vsel %vm626, %v636, 0.0
    %640 = vadd.xlane.f32.xlu0 %v639
    %v641 = vpop.xlane.xlu0 %640
    %v642 = vsel %vm626, %v638, 0.0
    %643 = vadd.xlane.f32.xlu0 %v642
    %v644 = vpop.xlane.xlu0 %643
    %v645 = vrcp.pop %v641
    %v646 = vrcp.pop %v644
    %v647 = vmul.f32 %v636, %v645
    %v648 = vmul.f32 %v638, %v646
    %v649 = vpack.c.bf16 %v647, %v647
    %v650 = vpack.c.bf16 %v648, %v648
    %v652 = vsel %vm626, %v649, 0
    %vm654 = vcmask 1043456
    %v656 = vsel %vm654, %v596, 0
    %658 = vmatpush.bf16.msra.mxu0 0
    %659 = vmatpush.bf16.msra.mxu0 0
    %660 = vmatpush.bf16.msra.mxu0 0
    %661 = vmatpush.bf16.msra.mxu0 0
    %662 = vmatpush.bf16.msra.mxu0 0
    %663 = vmatpush.bf16.msra.mxu0 0
    %664 = vmatpush.bf16.msra.mxu0 0
    %665 = vmatpush.bf16.msra.mxu0 %v656
    %666 = vmatmul.bf16.gmra.mxu0 %v652
    %v667 = vpop.f32.mrf.mxu0
    %v668 = vadd.f32 0.0, %v667
    %v669 = vpop.f32.mrf.mxu0
    %670 = vdwg.mxu0
    %v672 = vsel %vm626, %v650, 0
    %v675 = vsel %vm654, %v599, 0
    %677 = vmatpush.bf16.msra.mxu0 0
    %678 = vmatpush.bf16.msra.mxu0 0
    %679 = vmatpush.bf16.msra.mxu0 0
    %680 = vmatpush.bf16.msra.mxu0 0
    %681 = vmatpush.bf16.msra.mxu0 0
    %682 = vmatpush.bf16.msra.mxu0 0
    %683 = vmatpush.bf16.msra.mxu0 0
    %684 = vmatpush.bf16.msra.mxu0 %v675
    %685 = vmatmul.bf16.gmra.mxu0 %v672
    %v686 = vpop.f32.mrf.mxu0
    %v687 = vadd.f32 0.0, %v686
    %v688 = vpop.f32.mrf.mxu0
    %689 = vdwg.mxu0
    %v690 = vpack.c.bf16 %v668, %v668
    %v691 = vpack.c.bf16 %v687, %v687
    %v694 = vrot.slane %v594, 4
    %v695 = vrot.slane %v597, 4
    %v700 = vrot.slane %v595, 4
    %v701 = vrot.slane %v598, 4
    %v706 = vrot.slane %v596, 4
    %v707 = vrot.slane %v599, 4
    %708 = vmatpush.bf16.xpose.msra.mxu0 0
    %709 = vmatpush.bf16.xpose.msra.mxu0 0
    %710 = vmatpush.bf16.xpose.msra.mxu0 0
    %711 = vmatpush.bf16.xpose.msra.mxu0 0
    %712 = vmatpush.bf16.xpose.msra.mxu0 0
    %713 = vmatpush.bf16.xpose.msra.mxu0 0
    %714 = vmatpush.bf16.xpose.msra.mxu0 0
    %715 = vmatpush.bf16.xpose.msra.mxu0 %v700
    %716 = vmatmul.bf16.gmra.mxu0 %v694
    %v717 = vpop.f32.mrf.mxu0
    %v718 = vadd.f32 %v202, %v717
    %v719 = vpop.f32.mrf.mxu0
    %720 = vdwg.mxu0
    %721 = vmatpush.bf16.xpose.msra.mxu0 0
    %722 = vmatpush.bf16.xpose.msra.mxu0 0
    %723 = vmatpush.bf16.xpose.msra.mxu0 0
    %724 = vmatpush.bf16.xpose.msra.mxu0 0
    %725 = vmatpush.bf16.xpose.msra.mxu0 0
    %726 = vmatpush.bf16.xpose.msra.mxu0 0
    %727 = vmatpush.bf16.xpose.msra.mxu0 0
    %728 = vmatpush.bf16.xpose.msra.mxu0 %v701
    %729 = vmatmul.bf16.gmra.mxu0 %v695
    %v730 = vpop.f32.mrf.mxu0
    %v731 = vadd.f32 %v203, %v730
    %v732 = vpop.f32.mrf.mxu0
    %733 = vdwg.mxu0
    %v734 = vsel %vm626, %v718, -inf
    %735 = vmax.xlane.f32.xlu0 %v734
    %v736 = vpop.xlane.xlu0 %735
    %v737 = vsel %vm626, %v731, -inf
    %738 = vmax.xlane.f32.xlu0 %v737
    %v739 = vpop.xlane.xlu0 %738
    %v740 = vsub.f32 %v718, %v736
    %v741 = vsub.f32 %v731, %v739
    %v742 = vmul.f32 %v740, 1.442695
    %v743 = vpow.pop %v742
    %v744 = vmul.f32 %v741, 1.442695
    %v745 = vpow.pop %v744
    %v746 = vsel %vm626, %v743, 0.0
    %747 = vadd.xlane.f32.xlu0 %v746
    %v748 = vpop.xlane.xlu0 %747
    %v749 = vsel %vm626, %v745, 0.0
    %750 = vadd.xlane.f32.xlu0 %v749
    %v751 = vpop.xlane.xlu0 %750
    %v752 = vrcp.pop %v748
    %v753 = vrcp.pop %v751
    %v754 = vmul.f32 %v743, %v752
    %v755 = vmul.f32 %v745, %v753
    %v756 = vpack.c.bf16 %v754, %v754
    %v757 = vpack.c.bf16 %v755, %v755
    %v759 = vsel %vm626, %v756, 0
    %v762 = vsel %vm654, %v706, 0
    %764 = vmatpush.bf16.msra.mxu0 0
    %765 = vmatpush.bf16.msra.mxu0 0
    %766 = vmatpush.bf16.msra.mxu0 0
    %767 = vmatpush.bf16.msra.mxu0 0
    %768 = vmatpush.bf16.msra.mxu0 0
    %769 = vmatpush.bf16.msra.mxu0 0
    %770 = vmatpush.bf16.msra.mxu0 0
    %771 = vmatpush.bf16.msra.mxu0 %v762
    %772 = vmatmul.bf16.gmra.mxu0 %v759
    %v773 = vpop.f32.mrf.mxu0
    %v774 = vadd.f32 0.0, %v773
    %v775 = vpop.f32.mrf.mxu0
    %776 = vdwg.mxu0
    %v778 = vsel %vm626, %v757, 0
    %v781 = vsel %vm654, %v707, 0
    %783 = vmatpush.bf16.msra.mxu0 0
    %784 = vmatpush.bf16.msra.mxu0 0
    %785 = vmatpush.bf16.msra.mxu0 0
    %786 = vmatpush.bf16.msra.mxu0 0
    %787 = vmatpush.bf16.msra.mxu0 0
    %788 = vmatpush.bf16.msra.mxu0 0
    %789 = vmatpush.bf16.msra.mxu0 0
    %790 = vmatpush.bf16.msra.mxu0 %v781
    %791 = vmatmul.bf16.gmra.mxu0 %v778
    %v792 = vpop.f32.mrf.mxu0
    %v793 = vadd.f32 0.0, %v792
    %v794 = vpop.f32.mrf.mxu0
    %795 = vdwg.mxu0
    %v796 = vpack.c.bf16 %v774, %v774
    %v797 = vpack.c.bf16 %v793, %v793
    %v800 = vunpack.c.l.b16 %v690
    %v801 = vunpack.c.l.b16 %v691
    %v802 = vpack.c.b16 %v801, %v800
    %v806 = vunpack.c.l.b16 %v796
    %v807 = vunpack.c.l.b16 %v797
    %v808 = vpack.c.b16 %v807, %v806
    %v810 = vld [vmem:[#allocation10] sm:$0xf]
    %v811 = vld [vmem:[#allocation10 + $0x4] sm:$0xf]
    %v812 = vld [vmem:[#allocation10 + $0x8] sm:$0xf]
    %v813 = vld [vmem:[#allocation10 + $0xc] sm:$0xf]
    %v814 = vld [vmem:[#allocation10 + $0x10] sm:$0xf]
    %v815 = vld [vmem:[#allocation10 + $0x14] sm:$0xf]
    %v816 = vld [vmem:[#allocation10 + $0x18] sm:$0xf]
    %v817 = vld [vmem:[#allocation10 + $0x1c] sm:$0xf]
    %v818 = vld [vmem:[#allocation10 + $0x20] sm:$0xf]
    %v819 = vld [vmem:[#allocation10 + $0x24] sm:$0xf]
    %v820 = vld [vmem:[#allocation10 + $0x28] sm:$0xf]
    %v821 = vld [vmem:[#allocation10 + $0x2c] sm:$0xf]
    %v822 = vld [vmem:[#allocation10 + $0x30] sm:$0xf]
    %v823 = vld [vmem:[#allocation10 + $0x34] sm:$0xf]
    %v824 = vld [vmem:[#allocation10 + $0x38] sm:$0xf]
    %v825 = vld [vmem:[#allocation10 + $0x3c] sm:$0xf]
    %v826 = vld [vmem:[#allocation10 + $0x40] sm:$0xf]
    %v827 = vld [vmem:[#allocation10 + $0x44] sm:$0xf]
    %v828 = vld [vmem:[#allocation10 + $0x48] sm:$0xf]
    %v829 = vld [vmem:[#allocation10 + $0x4c] sm:$0xf]
    %v830 = vld [vmem:[#allocation10 + $0x50] sm:$0xf]
    %v831 = vld [vmem:[#allocation10 + $0x54] sm:$0xf]
    %v832 = vld [vmem:[#allocation10 + $0x58] sm:$0xf]
    %v833 = vld [vmem:[#allocation10 + $0x5c] sm:$0xf]
    %v834 = vld [vmem:[#allocation10 + $0x60] sm:$0xf]
    %v835 = vld [vmem:[#allocation10 + $0x64] sm:$0xf]
    %v836 = vld [vmem:[#allocation10 + $0x68] sm:$0xf]
    %v837 = vld [vmem:[#allocation10 + $0x6c] sm:$0xf]
    %v838 = vld [vmem:[#allocation10 + $0x70] sm:$0xf]
    %v839 = vld [vmem:[#allocation10 + $0x74] sm:$0xf]
    %v840 = vld [vmem:[#allocation10 + $0x78] sm:$0xf]
    %v841 = vld [vmem:[#allocation10 + $0x7c] sm:$0xf]
    %v842 = vld [vmem:[#allocation11] sm:$0x1]
    %v844 = vperm.slane %v842, 0
    %v878 = vunpack.c.l.b16 %v810
    %v879 = vunpack.c.l.b16 %v811
    %v880 = vunpack.c.l.b16 %v812
    %v881 = vunpack.c.l.b16 %v813
    %v882 = vunpack.c.l.b16 %v814
    %v883 = vunpack.c.l.b16 %v815
    %v884 = vunpack.c.l.b16 %v816
    %v885 = vunpack.c.l.b16 %v817
    %v886 = vunpack.c.l.b16 %v818
    %v887 = vunpack.c.l.b16 %v819
    %v888 = vunpack.c.l.b16 %v820
    %v889 = vunpack.c.l.b16 %v821
    %v890 = vunpack.c.l.b16 %v822
    %v891 = vunpack.c.l.b16 %v823
    %v892 = vunpack.c.l.b16 %v824
    %v893 = vunpack.c.l.b16 %v825
    %v894 = vunpack.c.l.b16 %v826
    %v895 = vunpack.c.l.b16 %v827
    %v896 = vunpack.c.l.b16 %v828
    %v897 = vunpack.c.l.b16 %v829
    %v898 = vunpack.c.l.b16 %v830
    %v899 = vunpack.c.l.b16 %v831
    %v900 = vunpack.c.l.b16 %v832
    %v901 = vunpack.c.l.b16 %v833
    %v902 = vunpack.c.l.b16 %v834
    %v903 = vunpack.c.l.b16 %v835
    %v904 = vunpack.c.l.b16 %v836
    %v905 = vunpack.c.l.b16 %v837
    %v906 = vunpack.c.l.b16 %v838
    %v907 = vunpack.c.l.b16 %v839
    %v908 = vunpack.c.l.b16 %v840
    %v909 = vunpack.c.l.b16 %v841
    %v910 = vpack.c.b16 %v879, %v878
    %v911 = vpack.c.b16 %v881, %v880
    %v912 = vpack.c.b16 %v883, %v882
    %v913 = vpack.c.b16 %v885, %v884
    %v914 = vpack.c.b16 %v887, %v886
    %v915 = vpack.c.b16 %v889, %v888
    %v916 = vpack.c.b16 %v891, %v890
    %v917 = vpack.c.b16 %v893, %v892
    %v918 = vpack.c.b16 %v895, %v894
    %v919 = vpack.c.b16 %v897, %v896
    %v920 = vpack.c.b16 %v899, %v898
    %v921 = vpack.c.b16 %v901, %v900
    %v922 = vpack.c.b16 %v903, %v902
    %v923 = vpack.c.b16 %v905, %v904
    %v924 = vpack.c.b16 %v907, %v906
    %v925 = vpack.c.b16 %v909, %v908
    %942 = vmatpush.bf16.msra.mxu0 %v917
    %943 = vmatpush.bf16.msra.mxu0 %v916
    %944 = vmatpush.bf16.msra.mxu0 %v915
    %945 = vmatpush.bf16.msra.mxu0 %v914
    %946 = vmatpush.bf16.msra.mxu0 %v913
    %947 = vmatpush.bf16.msra.mxu0 %v912
    %948 = vmatpush.bf16.msra.mxu0 %v911
    %949 = vmatpush.bf16.msra.mxu0 %v910
    %950 = vmatmul.bf16.gmra.mxu0 %v802
    %v951 = vpop.f32.mrf.mxu0
    %v952 = vadd.f32 %v844, %v951
    %v953 = vpop.f32.mrf.mxu0
    %v954 = vadd.f32 %v844, %v953
    %955 = vdwg.mxu0
    %956 = vmatpush.bf16.msra.mxu0 %v925
    %957 = vmatpush.bf16.msra.mxu0 %v924
    %958 = vmatpush.bf16.msra.mxu0 %v923
    %959 = vmatpush.bf16.msra.mxu0 %v922
    %960 = vmatpush.bf16.msra.mxu0 %v921
    %961 = vmatpush.bf16.msra.mxu0 %v920
    %962 = vmatpush.bf16.msra.mxu0 %v919
    %963 = vmatpush.bf16.msra.mxu0 %v918
    %964 = vmatmul.bf16.gmra.mxu0 %v808
    %v965 = vpop.f32.mrf.mxu0
    %v966 = vadd.f32 %v952, %v965
    %v967 = vpop.f32.mrf.mxu0
    %v968 = vadd.f32 %v954, %v967
    %969 = vdwg.mxu0
    %v970 = vadd.f32 %v196, %v966
    %v971 = vadd.f32 %v197, %v968
    %972 = vadd.xlane.f32.xlu0 %v970
    %v973 = vpop.xlane.xlu0 %972
    %974 = vadd.xlane.f32.xlu0 %v971
    %v975 = vpop.xlane.xlu0 %974
    %v976 = vmul.f32 %v973, 0.03125
    %v977 = vmul.f32 %v975, 0.03125
    %v978 = vmul.f32 %v970, %v970
    %v979 = vmul.f32 %v971, %v971
    %980 = vadd.xlane.f32.xlu0 %v978
    %v981 = vpop.xlane.xlu0 %980
    %982 = vadd.xlane.f32.xlu0 %v979
    %v983 = vpop.xlane.xlu0 %982
    %v984 = vmul.f32 %v981, 0.03125
    %v985 = vmul.f32 %v983, 0.03125
    %v986 = vmul.f32 %v976, %v976
    %v987 = vmul.f32 %v977, %v977
    %v988 = vsub.f32 %v984, %v986
    %v989 = vsub.f32 %v985, %v987
    %v990 = vmax.f32 %v988, 0.0
    %v991 = vmax.f32 %v989, 0.0
    %v992 = vsub.f32 %v970, %v976
    %v993 = vsub.f32 %v971, %v977
    %v994 = vadd.f32 %v990, 1e-05
    %v995 = vadd.f32 %v991, 1e-05
    %v996 = vrsqrt.pop %v994
    %v997 = vmul.f32 %v996, %v994
    %v998 = vmul.f32 %v997, %v996
    %v999 = vmul.f32 0.5, %v998
    %v1000 = vsub.f32 1.5, %v999
    %v1001 = vmul.f32 %v996, %v1000
    %vm1002 = vweird.f32 %v994
    %vm1003 = vweird.f32 %v996
    %vm1004 = vmor %vm1002, %vm1003
    %v1005 = vsel %vm1004, %v996, %v1001
    %v1006 = vrsqrt.pop %v995
    %v1007 = vmul.f32 %v1006, %v995
    %v1008 = vmul.f32 %v1007, %v1006
    %v1009 = vmul.f32 0.5, %v1008
    %v1010 = vsub.f32 1.5, %v1009
    %v1011 = vmul.f32 %v1006, %v1010
    %vm1012 = vweird.f32 %v995
    %vm1013 = vweird.f32 %v1006
    %vm1014 = vmor %vm1012, %vm1013
    %v1015 = vsel %vm1014, %v1006, %v1011
    %v1016 = vmul.f32 %v992, %v1005
    %v1017 = vmul.f32 %v993, %v1015
    %v1018 = vperm.slane %v206, 0
    %v1019 = vmul.f32 %v1016, %v1018
    %v1020 = vmul.f32 %v1017, %v1018
    %v1021 = vperm.slane %v206, 1
    %v1022 = vadd.f32 %v1019, %v1021
    %v1023 = vadd.f32 %v1020, %v1021
    %v1024 = vpack.c.bf16 %v1023, %v1022
    %v1025 = vld [vmem:[#allocation13] sm:$0xf]
    %v1026 = vld [vmem:[#allocation13 + $0x4] sm:$0xf]
    %v1027 = vld [vmem:[#allocation13 + $0x8] sm:$0xf]
    %v1028 = vld [vmem:[#allocation13 + $0xc] sm:$0xf]
    %v1029 = vld [vmem:[#allocation13 + $0x10] sm:$0xf]
    %v1030 = vld [vmem:[#allocation13 + $0x14] sm:$0xf]
    %v1031 = vld [vmem:[#allocation13 + $0x18] sm:$0xf]
    %v1032 = vld [vmem:[#allocation13 + $0x1c] sm:$0xf]
    %v1033 = vld [vmem:[#allocation13 + $0x20] sm:$0xf]
    %v1034 = vld [vmem:[#allocation13 + $0x24] sm:$0xf]
    %v1035 = vld [vmem:[#allocation13 + $0x28] sm:$0xf]
    %v1036 = vld [vmem:[#allocation13 + $0x2c] sm:$0xf]
    %v1037 = vld [vmem:[#allocation13 + $0x30] sm:$0xf]
    %v1038 = vld [vmem:[#allocation13 + $0x34] sm:$0xf]
    %v1039 = vld [vmem:[#allocation13 + $0x38] sm:$0xf]
    %v1040 = vld [vmem:[#allocation13 + $0x3c] sm:$0xf]
    %v1041 = vld [vmem:[#allocation14] sm:$0x1]
    %v1043 = vperm.slane %v1041, 0
    %v1061 = vunpack.c.l.b16 %v1025
    %v1062 = vunpack.c.l.b16 %v1026
    %v1063 = vunpack.c.l.b16 %v1027
    %v1064 = vunpack.c.l.b16 %v1028
    %v1065 = vunpack.c.l.b16 %v1029
    %v1066 = vunpack.c.l.b16 %v1030
    %v1067 = vunpack.c.l.b16 %v1031
    %v1068 = vunpack.c.l.b16 %v1032
    %v1069 = vunpack.c.l.b16 %v1033
    %v1070 = vunpack.c.l.b16 %v1034
    %v1071 = vunpack.c.l.b16 %v1035
    %v1072 = vunpack.c.l.b16 %v1036
    %v1073 = vunpack.c.l.b16 %v1037
    %v1074 = vunpack.c.l.b16 %v1038
    %v1075 = vunpack.c.l.b16 %v1039
    %v1076 = vunpack.c.l.b16 %v1040
    %v1077 = vpack.c.b16 %v1062, %v1061
    %v1078 = vpack.c.b16 %v1064, %v1063
    %v1079 = vpack.c.b16 %v1066, %v1065
    %v1080 = vpack.c.b16 %v1068, %v1067
    %v1081 = vpack.c.b16 %v1070, %v1069
    %v1082 = vpack.c.b16 %v1072, %v1071
    %v1083 = vpack.c.b16 %v1074, %v1073
    %v1084 = vpack.c.b16 %v1076, %v1075
    %1093 = vmatpush.bf16.msra.mxu0 %v1084
    %1094 = vmatpush.bf16.msra.mxu0 %v1083
    %1095 = vmatpush.bf16.msra.mxu0 %v1082
    %1096 = vmatpush.bf16.msra.mxu0 %v1081
    %1097 = vmatpush.bf16.msra.mxu0 %v1080
    %1098 = vmatpush.bf16.msra.mxu0 %v1079
    %1099 = vmatpush.bf16.msra.mxu0 %v1078
    %1100 = vmatpush.bf16.msra.mxu0 %v1077
    %1101 = vmatmul.bf16.gmra.mxu0 %v1024
    %v1102 = vpop.f32.mrf.mxu0
    %v1103 = vadd.f32 %v1043, %v1102
    %v1104 = vpop.f32.mrf.mxu0
    %v1105 = vadd.f32 %v1043, %v1104
    %1106 = vdwg.mxu0
    %v1107 = vmax.f32 %v1103, 0.0
    %v1108 = vmax.f32 %v1105, 0.0
    %v1109 = vpack.c.bf16 %v1108, %v1107
    %v1110 = vld [vmem:[#allocation16] sm:$0xf]
    %v1111 = vld [vmem:[#allocation16 + $0x4] sm:$0xf]
    %v1112 = vld [vmem:[#allocation16 + $0x8] sm:$0xf]
    %v1113 = vld [vmem:[#allocation16 + $0xc] sm:$0xf]
    %v1114 = vld [vmem:[#allocation16 + $0x10] sm:$0xf]
    %v1115 = vld [vmem:[#allocation16 + $0x14] sm:$0xf]
    %v1116 = vld [vmem:[#allocation16 + $0x18] sm:$0xf]
    %v1117 = vld [vmem:[#allocation16 + $0x1c] sm:$0xf]
    %v1118 = vld [vmem:[#allocation16 + $0x20] sm:$0xf]
    %v1119 = vld [vmem:[#allocation16 + $0x24] sm:$0xf]
    %v1120 = vld [vmem:[#allocation16 + $0x28] sm:$0xf]
    %v1121 = vld [vmem:[#allocation16 + $0x2c] sm:$0xf]
    %v1122 = vld [vmem:[#allocation16 + $0x30] sm:$0xf]
    %v1123 = vld [vmem:[#allocation16 + $0x34] sm:$0xf]
    %v1124 = vld [vmem:[#allocation16 + $0x38] sm:$0xf]
    %v1125 = vld [vmem:[#allocation16 + $0x3c] sm:$0xf]
    %v1126 = vld [vmem:[#allocation17] sm:$0x1]
    %v1128 = vperm.slane %v1126, 0
    %v1146 = vunpack.c.l.b16 %v1110
    %v1147 = vunpack.c.l.b16 %v1111
    %v1148 = vunpack.c.l.b16 %v1112
    %v1149 = vunpack.c.l.b16 %v1113
    %v1150 = vunpack.c.l.b16 %v1114
    %v1151 = vunpack.c.l.b16 %v1115
    %v1152 = vunpack.c.l.b16 %v1116
    %v1153 = vunpack.c.l.b16 %v1117
    %v1154 = vunpack.c.l.b16 %v1118
    %v1155 = vunpack.c.l.b16 %v1119
    %v1156 = vunpack.c.l.b16 %v1120
    %v1157 = vunpack.c.l.b16 %v1121
    %v1158 = vunpack.c.l.b16 %v1122
    %v1159 = vunpack.c.l.b16 %v1123
    %v1160 = vunpack.c.l.b16 %v1124
    %v1161 = vunpack.c.l.b16 %v1125
    %v1162 = vpack.c.b16 %v1147, %v1146
    %v1163 = vpack.c.b16 %v1149, %v1148
    %v1164 = vpack.c.b16 %v1151, %v1150
    %v1165 = vpack.c.b16 %v1153, %v1152
    %v1166 = vpack.c.b16 %v1155, %v1154
    %v1167 = vpack.c.b16 %v1157, %v1156
    %v1168 = vpack.c.b16 %v1159, %v1158
    %v1169 = vpack.c.b16 %v1161, %v1160
    %1178 = vmatpush.bf16.msra.mxu0 %v1169
    %1179 = vmatpush.bf16.msra.mxu0 %v1168
    %1180 = vmatpush.bf16.msra.mxu0 %v1167
    %1181 = vmatpush.bf16.msra.mxu0 %v1166
    %1182 = vmatpush.bf16.msra.mxu0 %v1165
    %1183 = vmatpush.bf16.msra.mxu0 %v1164
    %1184 = vmatpush.bf16.msra.mxu0 %v1163
    %1185 = vmatpush.bf16.msra.mxu0 %v1162
    %1186 = vmatmul.bf16.gmra.mxu0 %v1109
    %v1187 = vpop.f32.mrf.mxu0
    %v1188 = vadd.f32 %v1128, %v1187
    %v1189 = vpop.f32.mrf.mxu0
    %v1190 = vadd.f32 %v1128, %v1189
    %1191 = vdwg.mxu0
    %v1192 = vadd.f32 %v1022, %v1188
    %v1193 = vadd.f32 %v1023, %v1190
    %1194 = vadd.xlane.f32.xlu0 %v1192
    %v1195 = vpop.xlane.xlu0 %1194
    %1196 = vadd.xlane.f32.xlu0 %v1193
    %v1197 = vpop.xlane.xlu0 %1196
    %v1198 = vmul.f32 %v1195, 0.03125
    %v1199 = vmul.f32 %v1197, 0.03125
    %v1200 = vmul.f32 %v1192, %v1192
    %v1201 = vmul.f32 %v1193, %v1193
    %1202 = vadd.xlane.f32.xlu0 %v1200
    %v1203 = vpop.xlane.xlu0 %1202
    %1204 = vadd.xlane.f32.xlu0 %v1201
    %v1205 = vpop.xlane.xlu0 %1204
    %v1206 = vmul.f32 %v1203, 0.03125
    %v1207 = vmul.f32 %v1205, 0.03125
    %v1208 = vmul.f32 %v1198, %v1198
    %v1209 = vmul.f32 %v1199, %v1199
    %v1210 = vsub.f32 %v1206, %v1208
    %v1211 = vsub.f32 %v1207, %v1209
    %v1212 = vmax.f32 %v1210, 0.0
    %v1213 = vmax.f32 %v1211, 0.0
    %v1214 = vsub.f32 %v1192, %v1198
    %v1215 = vsub.f32 %v1193, %v1199
    %v1216 = vadd.f32 %v1212, 1e-05
    %v1217 = vadd.f32 %v1213, 1e-05
    %v1218 = vrsqrt.pop %v1216
    %v1219 = vmul.f32 %v1218, %v1216
    %v1220 = vmul.f32 %v1219, %v1218
    %v1221 = vmul.f32 0.5, %v1220
    %v1222 = vsub.f32 1.5, %v1221
    %v1223 = vmul.f32 %v1218, %v1222
    %vm1224 = vweird.f32 %v1216
    %vm1225 = vweird.f32 %v1218
    %vm1226 = vmor %vm1224, %vm1225
    %v1227 = vsel %vm1226, %v1218, %v1223
    %v1228 = vrsqrt.pop %v1217
    %v1229 = vmul.f32 %v1228, %v1217
    %v1230 = vmul.f32 %v1229, %v1228
    %v1231 = vmul.f32 0.5, %v1230
    %v1232 = vsub.f32 1.5, %v1231
    %v1233 = vmul.f32 %v1228, %v1232
    %vm1234 = vweird.f32 %v1217
    %vm1235 = vweird.f32 %v1228
    %vm1236 = vmor %vm1234, %vm1235
    %v1237 = vsel %vm1236, %v1228, %v1233
    %v1238 = vmul.f32 %v1214, %v1227
    %v1239 = vmul.f32 %v1215, %v1237
    %v1240 = vperm.slane %v206, 2
    %v1241 = vmul.f32 %v1238, %v1240
    %v1242 = vmul.f32 %v1239, %v1240
    %v1243 = vperm.slane %v206, 3
    %v1244 = vadd.f32 %v1241, %v1243
    %v1245 = vadd.f32 %v1242, %v1243
    %s1246 = scalar_lea.vmem %s10, 4
    %v1247 = vld [vmem:[%s1246] sm:$0xf]
    %v1248 = vpack.c.bf16 %v1245, %v1244
    %s1249 = scalar_lea.vmem [#allocation7], 384
    %v1250 = vld [vmem:[%s1249] sm:$0xff]
    %v1251 = vld [vmem:[%s1249 + $0x8] sm:$0xff]
    %v1252 = vld [vmem:[%s1249 + $0x10] sm:$0xff]
    %v1253 = vld [vmem:[%s1249 + $0x18] sm:$0xff]
    %v1254 = vld [vmem:[%s1249 + $0x20] sm:$0xff]
    %v1255 = vld [vmem:[%s1249 + $0x28] sm:$0xff]
    %v1256 = vld [vmem:[%s1249 + $0x30] sm:$0xff]
    %v1257 = vld [vmem:[%s1249 + $0x38] sm:$0xff]
    %v1258 = vld [vmem:[%s1249 + $0x40] sm:$0xff]
    %v1259 = vld [vmem:[%s1249 + $0x48] sm:$0xff]
    %v1260 = vld [vmem:[%s1249 + $0x50] sm:$0xff]
    %v1261 = vld [vmem:[%s1249 + $0x58] sm:$0xff]
    %v1262 = vld [vmem:[%s1249 + $0x60] sm:$0xff]
    %v1263 = vld [vmem:[%s1249 + $0x68] sm:$0xff]
    %v1264 = vld [vmem:[%s1249 + $0x70] sm:$0xff]
    %v1265 = vld [vmem:[%s1249 + $0x78] sm:$0xff]
    %v1266 = vld [vmem:[%s1249 + $0x80] sm:$0xff]
    %v1267 = vld [vmem:[%s1249 + $0x88] sm:$0xff]
    %v1268 = vld [vmem:[%s1249 + $0x90] sm:$0xff]
    %v1269 = vld [vmem:[%s1249 + $0x98] sm:$0xff]
    %v1270 = vld [vmem:[%s1249 + $0xa0] sm:$0xff]
    %v1271 = vld [vmem:[%s1249 + $0xa8] sm:$0xff]
    %v1272 = vld [vmem:[%s1249 + $0xb0] sm:$0xff]
    %v1273 = vld [vmem:[%s1249 + $0xb8] sm:$0xff]
    %v1274 = vld [vmem:[%s1249 + $0xc0] sm:$0xff]
    %v1275 = vld [vmem:[%s1249 + $0xc8] sm:$0xff]
    %v1276 = vld [vmem:[%s1249 + $0xd0] sm:$0xff]
    %v1277 = vld [vmem:[%s1249 + $0xd8] sm:$0xff]
    %v1278 = vld [vmem:[%s1249 + $0xe0] sm:$0xff]
    %v1279 = vld [vmem:[%s1249 + $0xe8] sm:$0xff]
    %v1280 = vld [vmem:[%s1249 + $0xf0] sm:$0xff]
    %v1281 = vld [vmem:[%s1249 + $0xf8] sm:$0xff]
    %v1282 = vld [vmem:[%s1249 + $0x100] sm:$0xff]
    %v1283 = vld [vmem:[%s1249 + $0x108] sm:$0xff]
    %v1284 = vld [vmem:[%s1249 + $0x110] sm:$0xff]
    %v1285 = vld [vmem:[%s1249 + $0x118] sm:$0xff]
    %v1286 = vld [vmem:[%s1249 + $0x120] sm:$0xff]
    %v1287 = vld [vmem:[%s1249 + $0x128] sm:$0xff]
    %v1288 = vld [vmem:[%s1249 + $0x130] sm:$0xff]
    %v1289 = vld [vmem:[%s1249 + $0x138] sm:$0xff]
    %v1290 = vld [vmem:[%s1249 + $0x140] sm:$0xff]
    %v1291 = vld [vmem:[%s1249 + $0x148] sm:$0xff]
    %v1292 = vld [vmem:[%s1249 + $0x150] sm:$0xff]
    %v1293 = vld [vmem:[%s1249 + $0x158] sm:$0xff]
    %v1294 = vld [vmem:[%s1249 + $0x160] sm:$0xff]
    %v1295 = vld [vmem:[%s1249 + $0x168] sm:$0xff]
    %v1296 = vld [vmem:[%s1249 + $0x170] sm:$0xff]
    %v1297 = vld [vmem:[%s1249 + $0x178] sm:$0xff]
    %s1298 = scalar_lea.vmem [#allocation8], 6
    %v1299 = vld [vmem:[%s1298] sm:$0x3f]
    %v1301 = vperm.slane %v1299, 0
    %v1302 = vperm.slane %v1299, 1
    %v1303 = vperm.slane %v1299, 2
    %v1304 = vperm.slane %v1299, 3
    %v1305 = vperm.slane %v1299, 4
    %v1306 = vperm.slane %v1299, 5
    %v1361 = vunpack.c.l.b16 %v1250
    %v1362 = vunpack.c.h.b16 %v1250
    %v1363 = vunpack.c.l.b16 %v1251
    %v1364 = vunpack.c.h.b16 %v1251
    %v1365 = vunpack.c.l.b16 %v1252
    %v1366 = vunpack.c.h.b16 %v1252
    %v1367 = vunpack.c.l.b16 %v1253
    %v1368 = vunpack.c.h.b16 %v1253
    %v1369 = vunpack.c.l.b16 %v1254
    %v1370 = vunpack.c.h.b16 %v1254
    %v1371 = vunpack.c.l.b16 %v1255
    %v1372 = vunpack.c.h.b16 %v1255
    %v1373 = vunpack.c.l.b16 %v1256
    %v1374 = vunpack.c.h.b16 %v1256
    %v1375 = vunpack.c.l.b16 %v1257
    %v1376 = vunpack.c.h.b16 %v1257
    %v1377 = vunpack.c.l.b16 %v1258
    %v1378 = vunpack.c.h.b16 %v1258
    %v1379 = vunpack.c.l.b16 %v1259
    %v1380 = vunpack.c.h.b16 %v1259
    %v1381 = vunpack.c.l.b16 %v1260
    %v1382 = vunpack.c.h.b16 %v1260
    %v1383 = vunpack.c.l.b16 %v1261
    %v1384 = vunpack.c.h.b16 %v1261
    %v1385 = vunpack.c.l.b16 %v1262
    %v1386 = vunpack.c.h.b16 %v1262
    %v1387 = vunpack.c.l.b16 %v1263
    %v1388 = vunpack.c.h.b16 %v1263
    %v1389 = vunpack.c.l.b16 %v1264
    %v1390 = vunpack.c.h.b16 %v1264
    %v1391 = vunpack.c.l.b16 %v1265
    %v1392 = vunpack.c.h.b16 %v1265
    %v1393 = vunpack.c.l.b16 %v1266
    %v1394 = vunpack.c.h.b16 %v1266
    %v1395 = vunpack.c.l.b16 %v1267
    %v1396 = vunpack.c.h.b16 %v1267
    %v1397 = vunpack.c.l.b16 %v1268
    %v1398 = vunpack.c.h.b16 %v1268
    %v1399 = vunpack.c.l.b16 %v1269
    %v1400 = vunpack.c.h.b16 %v1269
    %v1401 = vunpack.c.l.b16 %v1270
    %v1402 = vunpack.c.h.b16 %v1270
    %v1403 = vunpack.c.l.b16 %v1271
    %v1404 = vunpack.c.h.b16 %v1271
    %v1405 = vunpack.c.l.b16 %v1272
    %v1406 = vunpack.c.h.b16 %v1272
    %v1407 = vunpack.c.l.b16 %v1273
    %v1408 = vunpack.c.h.b16 %v1273
    %v1409 = vunpack.c.l.b16 %v1274
    %v1410 = vunpack.c.h.b16 %v1274
    %v1411 = vunpack.c.l.b16 %v1275
    %v1412 = vunpack.c.h.b16 %v1275
    %v1413 = vunpack.c.l.b16 %v1276
    %v1414 = vunpack.c.h.b16 %v1276
    %v1415 = vunpack.c.l.b16 %v1277
    %v1416 = vunpack.c.h.b16 %v1277
    %v1417 = vunpack.c.l.b16 %v1278
    %v1418 = vunpack.c.h.b16 %v1278
    %v1419 = vunpack.c.l.b16 %v1279
    %v1420 = vunpack.c.h.b16 %v1279
    %v1421 = vunpack.c.l.b16 %v1280
    %v1422 = vunpack.c.h.b16 %v1280
    %v1423 = vunpack.c.l.b16 %v1281
    %v1424 = vunpack.c.h.b16 %v1281
    %v1425 = vunpack.c.l.b16 %v1282
    %v1426 = vunpack.c.h.b16 %v1282
    %v1427 = vunpack.c.l.b16 %v1283
    %v1428 = vunpack.c.h.b16 %v1283
    %v1429 = vunpack.c.l.b16 %v1284
    %v1430 = vunpack.c.h.b16 %v1284
    %v1431 = vunpack.c.l.b16 %v1285
    %v1432 = vunpack.c.h.b16 %v1285
    %v1433 = vunpack.c.l.b16 %v1286
    %v1434 = vunpack.c.h.b16 %v1286
    %v1435 = vunpack.c.l.b16 %v1287
    %v1436 = vunpack.c.h.b16 %v1287
    %v1437 = vunpack.c.l.b16 %v1288
    %v1438 = vunpack.c.h.b16 %v1288
    %v1439 = vunpack.c.l.b16 %v1289
    %v1440 = vunpack.c.h.b16 %v1289
    %v1441 = vunpack.c.l.b16 %v1290
    %v1442 = vunpack.c.h.b16 %v1290
    %v1443 = vunpack.c.l.b16 %v1291
    %v1444 = vunpack.c.h.b16 %v1291
    %v1445 = vunpack.c.l.b16 %v1292
    %v1446 = vunpack.c.h.b16 %v1292
    %v1447 = vunpack.c.l.b16 %v1293
    %v1448 = vunpack.c.h.b16 %v1293
    %v1449 = vunpack.c.l.b16 %v1294
    %v1450 = vunpack.c.h.b16 %v1294
    %v1451 = vunpack.c.l.b16 %v1295
    %v1452 = vunpack.c.h.b16 %v1295
    %v1453 = vunpack.c.l.b16 %v1296
    %v1454 = vunpack.c.h.b16 %v1296
    %v1455 = vunpack.c.l.b16 %v1297
    %v1456 = vunpack.c.h.b16 %v1297
    %v1457 = vpack.c.b16 %v1367, %v1361
    %v1458 = vpack.c.b16 %v1368, %v1362
    %v1459 = vpack.c.b16 %v1369, %v1363
    %v1460 = vpack.c.b16 %v1370, %v1364
    %v1461 = vpack.c.b16 %v1371, %v1365
    %v1462 = vpack.c.b16 %v1372, %v1366
    %v1463 = vpack.c.b16 %v1379, %v1373
    %v1464 = vpack.c.b16 %v1380, %v1374
    %v1465 = vpack.c.b16 %v1381, %v1375
    %v1466 = vpack.c.b16 %v1382, %v1376
    %v1467 = vpack.c.b16 %v1383, %v1377
    %v1468 = vpack.c.b16 %v1384, %v1378
    %v1469 = vpack.c.b16 %v1391, %v1385
    %v1470 = vpack.c.b16 %v1392, %v1386
    %v1471 = vpack.c.b16 %v1393, %v1387
    %v1472 = vpack.c.b16 %v1394, %v1388
    %v1473 = vpack.c.b16 %v1395, %v1389
    %v1474 = vpack.c.b16 %v1396, %v1390
    %v1475 = vpack.c.b16 %v1403, %v1397
    %v1476 = vpack.c.b16 %v1404, %v1398
    %v1477 = vpack.c.b16 %v1405, %v1399
    %v1478 = vpack.c.b16 %v1406, %v1400
    %v1479 = vpack.c.b16 %v1407, %v1401
    %v1480 = vpack.c.b16 %v1408, %v1402
    %v1481 = vpack.c.b16 %v1415, %v1409
    %v1482 = vpack.c.b16 %v1416, %v1410
    %v1483 = vpack.c.b16 %v1417, %v1411
    %v1484 = vpack.c.b16 %v1418, %v1412
    %v1485 = vpack.c.b16 %v1419, %v1413
    %v1486 = vpack.c.b16 %v1420, %v1414
    %v1487 = vpack.c.b16 %v1427, %v1421
    %v1488 = vpack.c.b16 %v1428, %v1422
    %v1489 = vpack.c.b16 %v1429, %v1423
    %v1490 = vpack.c.b16 %v1430, %v1424
    %v1491 = vpack.c.b16 %v1431, %v1425
    %v1492 = vpack.c.b16 %v1432, %v1426
    %v1493 = vpack.c.b16 %v1439, %v1433
    %v1494 = vpack.c.b16 %v1440, %v1434
    %v1495 = vpack.c.b16 %v1441, %v1435
    %v1496 = vpack.c.b16 %v1442, %v1436
    %v1497 = vpack.c.b16 %v1443, %v1437
    %v1498 = vpack.c.b16 %v1444, %v1438
    %v1499 = vpack.c.b16 %v1451, %v1445
    %v1500 = vpack.c.b16 %v1452, %v1446
    %v1501 = vpack.c.b16 %v1453, %v1447
    %v1502 = vpack.c.b16 %v1454, %v1448
    %v1503 = vpack.c.b16 %v1455, %v1449
    %v1504 = vpack.c.b16 %v1456, %v1450
    %1553 = vmatpush.bf16.msra.mxu0 %v1499
    %1554 = vmatpush.bf16.msra.mxu0 %v1493
    %1555 = vmatpush.bf16.msra.mxu0 %v1487
    %1556 = vmatpush.bf16.msra.mxu0 %v1481
    %1557 = vmatpush.bf16.msra.mxu0 %v1475
    %1558 = vmatpush.bf16.msra.mxu0 %v1469
    %1559 = vmatpush.bf16.msra.mxu0 %v1463
    %1560 = vmatpush.bf16.msra.mxu0 %v1457
    %1561 = vmatmul.bf16.gmra.mxu0 %v1248
    %v1562 = vpop.f32.mrf.mxu0
    %v1563 = vadd.f32 %v1301, %v1562
    %v1564 = vpop.f32.mrf.mxu0
    %v1565 = vadd.f32 %v1301, %v1564
    %1566 = vdwg.mxu0
    %1567 = vmatpush.bf16.msra.mxu0 %v1500
    %1568 = vmatpush.bf16.msra.mxu0 %v1494
    %1569 = vmatpush.bf16.msra.mxu0 %v1488
    %1570 = vmatpush.bf16.msra.mxu0 %v1482
    %1571 = vmatpush.bf16.msra.mxu0 %v1476
    %1572 = vmatpush.bf16.msra.mxu0 %v1470
    %1573 = vmatpush.bf16.msra.mxu0 %v1464
    %1574 = vmatpush.bf16.msra.mxu0 %v1458
    %1575 = vmatmul.bf16.gmra.mxu0 %v1248
    %v1576 = vpop.f32.mrf.mxu0
    %v1577 = vadd.f32 %v1302, %v1576
    %v1578 = vpop.f32.mrf.mxu0
    %v1579 = vadd.f32 %v1302, %v1578
    %1580 = vdwg.mxu0
    %1581 = vmatpush.bf16.msra.mxu0 %v1501
    %1582 = vmatpush.bf16.msra.mxu0 %v1495
    %1583 = vmatpush.bf16.msra.mxu0 %v1489
    %1584 = vmatpush.bf16.msra.mxu0 %v1483
    %1585 = vmatpush.bf16.msra.mxu0 %v1477
    %1586 = vmatpush.bf16.msra.mxu0 %v1471
    %1587 = vmatpush.bf16.msra.mxu0 %v1465
    %1588 = vmatpush.bf16.msra.mxu0 %v1459
    %1589 = vmatmul.bf16.gmra.mxu0 %v1248
    %v1590 = vpop.f32.mrf.mxu0
    %v1591 = vadd.f32 %v1303, %v1590
    %v1592 = vpop.f32.mrf.mxu0
    %v1593 = vadd.f32 %v1303, %v1592
    %1594 = vdwg.mxu0
    %1595 = vmatpush.bf16.msra.mxu0 %v1502
    %1596 = vmatpush.bf16.msra.mxu0 %v1496
    %1597 = vmatpush.bf16.msra.mxu0 %v1490
    %1598 = vmatpush.bf16.msra.mxu0 %v1484
    %1599 = vmatpush.bf16.msra.mxu0 %v1478
    %1600 = vmatpush.bf16.msra.mxu0 %v1472
    %1601 = vmatpush.bf16.msra.mxu0 %v1466
    %1602 = vmatpush.bf16.msra.mxu0 %v1460
    %1603 = vmatmul.bf16.gmra.mxu0 %v1248
    %v1604 = vpop.f32.mrf.mxu0
    %v1605 = vadd.f32 %v1304, %v1604
    %v1606 = vpop.f32.mrf.mxu0
    %v1607 = vadd.f32 %v1304, %v1606
    %1608 = vdwg.mxu0
    %1609 = vmatpush.bf16.msra.mxu0 %v1503
    %1610 = vmatpush.bf16.msra.mxu0 %v1497
    %1611 = vmatpush.bf16.msra.mxu0 %v1491
    %1612 = vmatpush.bf16.msra.mxu0 %v1485
    %1613 = vmatpush.bf16.msra.mxu0 %v1479
    %1614 = vmatpush.bf16.msra.mxu0 %v1473
    %1615 = vmatpush.bf16.msra.mxu0 %v1467
    %1616 = vmatpush.bf16.msra.mxu0 %v1461
    %1617 = vmatmul.bf16.gmra.mxu0 %v1248
    %v1618 = vpop.f32.mrf.mxu0
    %v1619 = vadd.f32 %v1305, %v1618
    %v1620 = vpop.f32.mrf.mxu0
    %v1621 = vadd.f32 %v1305, %v1620
    %1622 = vdwg.mxu0
    %1623 = vmatpush.bf16.msra.mxu0 %v1504
    %1624 = vmatpush.bf16.msra.mxu0 %v1498
    %1625 = vmatpush.bf16.msra.mxu0 %v1492
    %1626 = vmatpush.bf16.msra.mxu0 %v1486
    %1627 = vmatpush.bf16.msra.mxu0 %v1480
    %1628 = vmatpush.bf16.msra.mxu0 %v1474
    %1629 = vmatpush.bf16.msra.mxu0 %v1468
    %1630 = vmatpush.bf16.msra.mxu0 %v1462
    %1631 = vmatmul.bf16.gmra.mxu0 %v1248
    %v1632 = vpop.f32.mrf.mxu0
    %v1633 = vadd.f32 %v1306, %v1632
    %v1634 = vpop.f32.mrf.mxu0
    %v1635 = vadd.f32 %v1306, %v1634
    %1636 = vdwg.mxu0
    %v1637 = vpack.c.bf16 %v1577, %v1563
    %v1638 = vpack.c.bf16 %v1605, %v1591
    %v1639 = vpack.c.bf16 %v1633, %v1619
    %v1640 = vpack.c.bf16 %v1579, %v1565
    %v1641 = vpack.c.bf16 %v1607, %v1593
    %v1642 = vpack.c.bf16 %v1635, %v1621
    %1643 = vmatpush.bf16.xpose.msra.mxu0 0
    %1644 = vmatpush.bf16.xpose.msra.mxu0 0
    %1645 = vmatpush.bf16.xpose.msra.mxu0 0
    %1646 = vmatpush.bf16.xpose.msra.mxu0 0
    %1647 = vmatpush.bf16.xpose.msra.mxu0 0
    %1648 = vmatpush.bf16.xpose.msra.mxu0 0
    %1649 = vmatpush.bf16.xpose.msra.mxu0 0
    %1650 = vmatpush.bf16.xpose.msra.mxu0 %v1638
    %1651 = vmatmul.bf16.gmra.mxu0 %v1637
    %v1652 = vpop.f32.mrf.mxu0
    %v1653 = vadd.f32 %v202, %v1652
    %v1654 = vpop.f32.mrf.mxu0
    %1655 = vdwg.mxu0
    %1656 = vmatpush.bf16.xpose.msra.mxu0 0
    %1657 = vmatpush.bf16.xpose.msra.mxu0 0
    %1658 = vmatpush.bf16.xpose.msra.mxu0 0
    %1659 = vmatpush.bf16.xpose.msra.mxu0 0
    %1660 = vmatpush.bf16.xpose.msra.mxu0 0
    %1661 = vmatpush.bf16.xpose.msra.mxu0 0
    %1662 = vmatpush.bf16.xpose.msra.mxu0 0
    %1663 = vmatpush.bf16.xpose.msra.mxu0 %v1641
    %1664 = vmatmul.bf16.gmra.mxu0 %v1640
    %v1665 = vpop.f32.mrf.mxu0
    %v1666 = vadd.f32 %v203, %v1665
    %v1667 = vpop.f32.mrf.mxu0
    %1668 = vdwg.mxu0
    %v1669 = vsel %vm626, %v1653, -inf
    %1670 = vmax.xlane.f32.xlu0 %v1669
    %v1671 = vpop.xlane.xlu0 %1670
    %v1672 = vsel %vm626, %v1666, -inf
    %1673 = vmax.xlane.f32.xlu0 %v1672
    %v1674 = vpop.xlane.xlu0 %1673
    %v1675 = vsub.f32 %v1653, %v1671
    %v1676 = vsub.f32 %v1666, %v1674
    %v1677 = vmul.f32 %v1675, 1.442695
    %v1678 = vpow.pop %v1677
    %v1679 = vmul.f32 %v1676, 1.442695
    %v1680 = vpow.pop %v1679
    %v1681 = vsel %vm626, %v1678, 0.0
    %1682 = vadd.xlane.f32.xlu0 %v1681
    %v1683 = vpop.xlane.xlu0 %1682
    %v1684 = vsel %vm626, %v1680, 0.0
    %1685 = vadd.xlane.f32.xlu0 %v1684
    %v1686 = vpop.xlane.xlu0 %1685
    %v1687 = vrcp.pop %v1683
    %v1688 = vrcp.pop %v1686
    %v1689 = vmul.f32 %v1678, %v1687
    %v1690 = vmul.f32 %v1680, %v1688
    %v1691 = vpack.c.bf16 %v1689, %v1689
    %v1692 = vpack.c.bf16 %v1690, %v1690
    %v1694 = vsel %vm626, %v1691, 0
    %v1697 = vsel %vm654, %v1639, 0
    %1699 = vmatpush.bf16.msra.mxu0 0
    %1700 = vmatpush.bf16.msra.mxu0 0
    %1701 = vmatpush.bf16.msra.mxu0 0
    %1702 = vmatpush.bf16.msra.mxu0 0
    %1703 = vmatpush.bf16.msra.mxu0 0
    %1704 = vmatpush.bf16.msra.mxu0 0
    %1705 = vmatpush.bf16.msra.mxu0 0
    %1706 = vmatpush.bf16.msra.mxu0 %v1697
    %1707 = vmatmul.bf16.gmra.mxu0 %v1694
    %v1708 = vpop.f32.mrf.mxu0
    %v1709 = vadd.f32 0.0, %v1708
    %v1710 = vpop.f32.mrf.mxu0
    %1711 = vdwg.mxu0
    %v1713 = vsel %vm626, %v1692, 0
    %v1716 = vsel %vm654, %v1642, 0
    %1718 = vmatpush.bf16.msra.mxu0 0
    %1719 = vmatpush.bf16.msra.mxu0 0
    %1720 = vmatpush.bf16.msra.mxu0 0
    %1721 = vmatpush.bf16.msra.mxu0 0
    %1722 = vmatpush.bf16.msra.mxu0 0
    %1723 = vmatpush.bf16.msra.mxu0 0
    %1724 = vmatpush.bf16.msra.mxu0 0
    %1725 = vmatpush.bf16.msra.mxu0 %v1716
    %1726 = vmatmul.bf16.gmra.mxu0 %v1713
    %v1727 = vpop.f32.mrf.mxu0
    %v1728 = vadd.f32 0.0, %v1727
    %v1729 = vpop.f32.mrf.mxu0
    %1730 = vdwg.mxu0
    %v1731 = vpack.c.bf16 %v1709, %v1709
    %v1732 = vpack.c.bf16 %v1728, %v1728
    %v1735 = vrot.slane %v1637, 4
    %v1736 = vrot.slane %v1640, 4
    %v1741 = vrot.slane %v1638, 4
    %v1742 = vrot.slane %v1641, 4
    %v1747 = vrot.slane %v1639, 4
    %v1748 = vrot.slane %v1642, 4
    %1749 = vmatpush.bf16.xpose.msra.mxu0 0
    %1750 = vmatpush.bf16.xpose.msra.mxu0 0
    %1751 = vmatpush.bf16.xpose.msra.mxu0 0
    %1752 = vmatpush.bf16.xpose.msra.mxu0 0
    %1753 = vmatpush.bf16.xpose.msra.mxu0 0
    %1754 = vmatpush.bf16.xpose.msra.mxu0 0
    %1755 = vmatpush.bf16.xpose.msra.mxu0 0
    %1756 = vmatpush.bf16.xpose.msra.mxu0 %v1741
    %1757 = vmatmul.bf16.gmra.mxu0 %v1735
    %v1758 = vpop.f32.mrf.mxu0
    %v1759 = vadd.f32 %v202, %v1758
    %v1760 = vpop.f32.mrf.mxu0
    %1761 = vdwg.mxu0
    %1762 = vmatpush.bf16.xpose.msra.mxu0 0
    %1763 = vmatpush.bf16.xpose.msra.mxu0 0
    %1764 = vmatpush.bf16.xpose.msra.mxu0 0
    %1765 = vmatpush.bf16.xpose.msra.mxu0 0
    %1766 = vmatpush.bf16.xpose.msra.mxu0 0
    %1767 = vmatpush.bf16.xpose.msra.mxu0 0
    %1768 = vmatpush.bf16.xpose.msra.mxu0 0
    %1769 = vmatpush.bf16.xpose.msra.mxu0 %v1742
    %1770 = vmatmul.bf16.gmra.mxu0 %v1736
    %v1771 = vpop.f32.mrf.mxu0
    %v1772 = vadd.f32 %v203, %v1771
    %v1773 = vpop.f32.mrf.mxu0
    %1774 = vdwg.mxu0
    %v1775 = vsel %vm626, %v1759, -inf
    %1776 = vmax.xlane.f32.xlu0 %v1775
    %v1777 = vpop.xlane.xlu0 %1776
    %v1778 = vsel %vm626, %v1772, -inf
    %1779 = vmax.xlane.f32.xlu0 %v1778
    %v1780 = vpop.xlane.xlu0 %1779
    %v1781 = vsub.f32 %v1759, %v1777
    %v1782 = vsub.f32 %v1772, %v1780
    %v1783 = vmul.f32 %v1781, 1.442695
    %v1784 = vpow.pop %v1783
    %v1785 = vmul.f32 %v1782, 1.442695
    %v1786 = vpow.pop %v1785
    %v1787 = vsel %vm626, %v1784, 0.0
    %1788 = vadd.xlane.f32.xlu0 %v1787
    %v1789 = vpop.xlane.xlu0 %1788
    %v1790 = vsel %vm626, %v1786, 0.0
    %1791 = vadd.xlane.f32.xlu0 %v1790
    %v1792 = vpop.xlane.xlu0 %1791
    %v1793 = vrcp.pop %v1789
    %v1794 = vrcp.pop %v1792
    %v1795 = vmul.f32 %v1784, %v1793
    %v1796 = vmul.f32 %v1786, %v1794
    %v1797 = vpack.c.bf16 %v1795, %v1795
    %v1798 = vpack.c.bf16 %v1796, %v1796
    %v1800 = vsel %vm626, %v1797, 0
    %v1803 = vsel %vm654, %v1747, 0
    %1805 = vmatpush.bf16.msra.mxu0 0
    %1806 = vmatpush.bf16.msra.mxu0 0
    %1807 = vmatpush.bf16.msra.mxu0 0
    %1808 = vmatpush.bf16.msra.mxu0 0
    %1809 = vmatpush.bf16.msra.mxu0 0
    %1810 = vmatpush.bf16.msra.mxu0 0
    %1811 = vmatpush.bf16.msra.mxu0 0
    %1812 = vmatpush.bf16.msra.mxu0 %v1803
    %1813 = vmatmul.bf16.gmra.mxu0 %v1800
    %v1814 = vpop.f32.mrf.mxu0
    %v1815 = vadd.f32 0.0, %v1814
    %v1816 = vpop.f32.mrf.mxu0
    %1817 = vdwg.mxu0
    %v1819 = vsel %vm626, %v1798, 0
    %v1822 = vsel %vm654, %v1748, 0
    %1824 = vmatpush.bf16.msra.mxu0 0
    %1825 = vmatpush.bf16.msra.mxu0 0
    %1826 = vmatpush.bf16.msra.mxu0 0
    %1827 = vmatpush.bf16.msra.mxu0 0
    %1828 = vmatpush.bf16.msra.mxu0 0
    %1829 = vmatpush.bf16.msra.mxu0 0
    %1830 = vmatpush.bf16.msra.mxu0 0
    %1831 = vmatpush.bf16.msra.mxu0 %v1822
    %1832 = vmatmul.bf16.gmra.mxu0 %v1819
    %v1833 = vpop.f32.mrf.mxu0
    %v1834 = vadd.f32 0.0, %v1833
    %v1835 = vpop.f32.mrf.mxu0
    %1836 = vdwg.mxu0
    %v1837 = vpack.c.bf16 %v1815, %v1815
    %v1838 = vpack.c.bf16 %v1834, %v1834
    %v1841 = vunpack.c.l.b16 %v1731
    %v1842 = vunpack.c.l.b16 %v1732
    %v1843 = vpack.c.b16 %v1842, %v1841
    %v1847 = vunpack.c.l.b16 %v1837
    %v1848 = vunpack.c.l.b16 %v1838
    %v1849 = vpack.c.b16 %v1848, %v1847
    %s1851 = scalar_lea.vmem [#allocation10], 128
    %v1852 = vld [vmem:[%s1851] sm:$0xf]
    %v1853 = vld [vmem:[%s1851 + $0x4] sm:$0xf]
    %v1854 = vld [vmem:[%s1851 + $0x8] sm:$0xf]
    %v1855 = vld [vmem:[%s1851 + $0xc] sm:$0xf]
    %v1856 = vld [vmem:[%s1851 + $0x10] sm:$0xf]
    %v1857 = vld [vmem:[%s1851 + $0x14] sm:$0xf]
    %v1858 = vld [vmem:[%s1851 + $0x18] sm:$0xf]
    %v1859 = vld [vmem:[%s1851 + $0x1c] sm:$0xf]
    %v1860 = vld [vmem:[%s1851 + $0x20] sm:$0xf]
    %v1861 = vld [vmem:[%s1851 + $0x24] sm:$0xf]
    %v1862 = vld [vmem:[%s1851 + $0x28] sm:$0xf]
    %v1863 = vld [vmem:[%s1851 + $0x2c] sm:$0xf]
    %v1864 = vld [vmem:[%s1851 + $0x30] sm:$0xf]
    %v1865 = vld [vmem:[%s1851 + $0x34] sm:$0xf]
    %v1866 = vld [vmem:[%s1851 + $0x38] sm:$0xf]
    %v1867 = vld [vmem:[%s1851 + $0x3c] sm:$0xf]
    %v1868 = vld [vmem:[%s1851 + $0x40] sm:$0xf]
    %v1869 = vld [vmem:[%s1851 + $0x44] sm:$0xf]
    %v1870 = vld [vmem:[%s1851 + $0x48] sm:$0xf]
    %v1871 = vld [vmem:[%s1851 + $0x4c] sm:$0xf]
    %v1872 = vld [vmem:[%s1851 + $0x50] sm:$0xf]
    %v1873 = vld [vmem:[%s1851 + $0x54] sm:$0xf]
    %v1874 = vld [vmem:[%s1851 + $0x58] sm:$0xf]
    %v1875 = vld [vmem:[%s1851 + $0x5c] sm:$0xf]
    %v1876 = vld [vmem:[%s1851 + $0x60] sm:$0xf]
    %v1877 = vld [vmem:[%s1851 + $0x64] sm:$0xf]
    %v1878 = vld [vmem:[%s1851 + $0x68] sm:$0xf]
    %v1879 = vld [vmem:[%s1851 + $0x6c] sm:$0xf]
    %v1880 = vld [vmem:[%s1851 + $0x70] sm:$0xf]
    %v1881 = vld [vmem:[%s1851 + $0x74] sm:$0xf]
    %v1882 = vld [vmem:[%s1851 + $0x78] sm:$0xf]
    %v1883 = vld [vmem:[%s1851 + $0x7c] sm:$0xf]
    %s1884 = scalar_lea.vmem [#allocation11], 1
    %v1885 = vld [vmem:[%s1884] sm:$0x1]
    %v1887 = vperm.slane %v1885, 0
    %v1921 = vunpack.c.l.b16 %v1852
    %v1922 = vunpack.c.l.b16 %v1853
    %v1923 = vunpack.c.l.b16 %v1854
    %v1924 = vunpack.c.l.b16 %v1855
    %v1925 = vunpack.c.l.b16 %v1856
    %v1926 = vunpack.c.l.b16 %v1857
    %v1927 = vunpack.c.l.b16 %v1858
    %v1928 = vunpack.c.l.b16 %v1859
    %v1929 = vunpack.c.l.b16 %v1860
    %v1930 = vunpack.c.l.b16 %v1861
    %v1931 = vunpack.c.l.b16 %v1862
    %v1932 = vunpack.c.l.b16 %v1863
    %v1933 = vunpack.c.l.b16 %v1864
    %v1934 = vunpack.c.l.b16 %v1865
    %v1935 = vunpack.c.l.b16 %v1866
    %v1936 = vunpack.c.l.b16 %v1867
    %v1937 = vunpack.c.l.b16 %v1868
    %v1938 = vunpack.c.l.b16 %v1869
    %v1939 = vunpack.c.l.b16 %v1870
    %v1940 = vunpack.c.l.b16 %v1871
    %v1941 = vunpack.c.l.b16 %v1872
    %v1942 = vunpack.c.l.b16 %v1873
    %v1943 = vunpack.c.l.b16 %v1874
    %v1944 = vunpack.c.l.b16 %v1875
    %v1945 = vunpack.c.l.b16 %v1876
    %v1946 = vunpack.c.l.b16 %v1877
    %v1947 = vunpack.c.l.b16 %v1878
    %v1948 = vunpack.c.l.b16 %v1879
    %v1949 = vunpack.c.l.b16 %v1880
    %v1950 = vunpack.c.l.b16 %v1881
    %v1951 = vunpack.c.l.b16 %v1882
    %v1952 = vunpack.c.l.b16 %v1883
    %v1953 = vpack.c.b16 %v1922, %v1921
    %v1954 = vpack.c.b16 %v1924, %v1923
    %v1955 = vpack.c.b16 %v1926, %v1925
    %v1956 = vpack.c.b16 %v1928, %v1927
    %v1957 = vpack.c.b16 %v1930, %v1929
    %v1958 = vpack.c.b16 %v1932, %v1931
    %v1959 = vpack.c.b16 %v1934, %v1933
    %v1960 = vpack.c.b16 %v1936, %v1935
    %v1961 = vpack.c.b16 %v1938, %v1937
    %v1962 = vpack.c.b16 %v1940, %v1939
    %v1963 = vpack.c.b16 %v1942, %v1941
    %v1964 = vpack.c.b16 %v1944, %v1943
    %v1965 = vpack.c.b16 %v1946, %v1945
    %v1966 = vpack.c.b16 %v1948, %v1947
    %v1967 = vpack.c.b16 %v1950, %v1949
    %v1968 = vpack.c.b16 %v1952, %v1951
    %1985 = vmatpush.bf16.msra.mxu0 %v1960
    %1986 = vmatpush.bf16.msra.mxu0 %v1959
    %1987 = vmatpush.bf16.msra.mxu0 %v1958
    %1988 = vmatpush.bf16.msra.mxu0 %v1957
    %1989 = vmatpush.bf16.msra.mxu0 %v1956
    %1990 = vmatpush.bf16.msra.mxu0 %v1955
    %1991 = vmatpush.bf16.msra.mxu0 %v1954
    %1992 = vmatpush.bf16.msra.mxu0 %v1953
    %1993 = vmatmul.bf16.gmra.mxu0 %v1843
    %v1994 = vpop.f32.mrf.mxu0
    %v1995 = vadd.f32 %v1887, %v1994
    %v1996 = vpop.f32.mrf.mxu0
    %v1997 = vadd.f32 %v1887, %v1996
    %1998 = vdwg.mxu0
    %1999 = vmatpush.bf16.msra.mxu0 %v1968
    %2000 = vmatpush.bf16.msra.mxu0 %v1967
    %2001 = vmatpush.bf16.msra.mxu0 %v1966
    %2002 = vmatpush.bf16.msra.mxu0 %v1965
    %2003 = vmatpush.bf16.msra.mxu0 %v1964
    %2004 = vmatpush.bf16.msra.mxu0 %v1963
    %2005 = vmatpush.bf16.msra.mxu0 %v1962
    %2006 = vmatpush.bf16.msra.mxu0 %v1961
    %2007 = vmatmul.bf16.gmra.mxu0 %v1849
    %v2008 = vpop.f32.mrf.mxu0
    %v2009 = vadd.f32 %v1995, %v2008
    %v2010 = vpop.f32.mrf.mxu0
    %v2011 = vadd.f32 %v1997, %v2010
    %2012 = vdwg.mxu0
    %v2013 = vadd.f32 %v1244, %v2009
    %v2014 = vadd.f32 %v1245, %v2011
    %2015 = vadd.xlane.f32.xlu0 %v2013
    %v2016 = vpop.xlane.xlu0 %2015
    %2017 = vadd.xlane.f32.xlu0 %v2014
    %v2018 = vpop.xlane.xlu0 %2017
    %v2019 = vmul.f32 %v2016, 0.03125
    %v2020 = vmul.f32 %v2018, 0.03125
    %v2021 = vmul.f32 %v2013, %v2013
    %v2022 = vmul.f32 %v2014, %v2014
    %2023 = vadd.xlane.f32.xlu0 %v2021
    %v2024 = vpop.xlane.xlu0 %2023
    %2025 = vadd.xlane.f32.xlu0 %v2022
    %v2026 = vpop.xlane.xlu0 %2025
    %v2027 = vmul.f32 %v2024, 0.03125
    %v2028 = vmul.f32 %v2026, 0.03125
    %v2029 = vmul.f32 %v2019, %v2019
    %v2030 = vmul.f32 %v2020, %v2020
    %v2031 = vsub.f32 %v2027, %v2029
    %v2032 = vsub.f32 %v2028, %v2030
    %v2033 = vmax.f32 %v2031, 0.0
    %v2034 = vmax.f32 %v2032, 0.0
    %v2035 = vsub.f32 %v2013, %v2019
    %v2036 = vsub.f32 %v2014, %v2020
    %v2037 = vadd.f32 %v2033, 1e-05
    %v2038 = vadd.f32 %v2034, 1e-05
    %v2039 = vrsqrt.pop %v2037
    %v2040 = vmul.f32 %v2039, %v2037
    %v2041 = vmul.f32 %v2040, %v2039
    %v2042 = vmul.f32 0.5, %v2041
    %v2043 = vsub.f32 1.5, %v2042
    %v2044 = vmul.f32 %v2039, %v2043
    %vm2045 = vweird.f32 %v2037
    %vm2046 = vweird.f32 %v2039
    %vm2047 = vmor %vm2045, %vm2046
    %v2048 = vsel %vm2047, %v2039, %v2044
    %v2049 = vrsqrt.pop %v2038
    %v2050 = vmul.f32 %v2049, %v2038
    %v2051 = vmul.f32 %v2050, %v2049
    %v2052 = vmul.f32 0.5, %v2051
    %v2053 = vsub.f32 1.5, %v2052
    %v2054 = vmul.f32 %v2049, %v2053
    %vm2055 = vweird.f32 %v2038
    %vm2056 = vweird.f32 %v2049
    %vm2057 = vmor %vm2055, %vm2056
    %v2058 = vsel %vm2057, %v2049, %v2054
    %v2059 = vmul.f32 %v2035, %v2048
    %v2060 = vmul.f32 %v2036, %v2058
    %v2061 = vperm.slane %v1247, 0
    %v2062 = vmul.f32 %v2059, %v2061
    %v2063 = vmul.f32 %v2060, %v2061
    %v2064 = vperm.slane %v1247, 1
    %v2065 = vadd.f32 %v2062, %v2064
    %v2066 = vadd.f32 %v2063, %v2064
    %v2067 = vpack.c.bf16 %v2066, %v2065
    %s2068 = scalar_lea.vmem [#allocation13], 64
    %v2069 = vld [vmem:[%s2068] sm:$0xf]
    %v2070 = vld [vmem:[%s2068 + $0x4] sm:$0xf]
    %v2071 = vld [vmem:[%s2068 + $0x8] sm:$0xf]
    %v2072 = vld [vmem:[%s2068 + $0xc] sm:$0xf]
    %v2073 = vld [vmem:[%s2068 + $0x10] sm:$0xf]
    %v2074 = vld [vmem:[%s2068 + $0x14] sm:$0xf]
    %v2075 = vld [vmem:[%s2068 + $0x18] sm:$0xf]
    %v2076 = vld [vmem:[%s2068 + $0x1c] sm:$0xf]
    %v2077 = vld [vmem:[%s2068 + $0x20] sm:$0xf]
    %v2078 = vld [vmem:[%s2068 + $0x24] sm:$0xf]
    %v2079 = vld [vmem:[%s2068 + $0x28] sm:$0xf]
    %v2080 = vld [vmem:[%s2068 + $0x2c] sm:$0xf]
    %v2081 = vld [vmem:[%s2068 + $0x30] sm:$0xf]
    %v2082 = vld [vmem:[%s2068 + $0x34] sm:$0xf]
    %v2083 = vld [vmem:[%s2068 + $0x38] sm:$0xf]
    %v2084 = vld [vmem:[%s2068 + $0x3c] sm:$0xf]
    %s2085 = scalar_lea.vmem [#allocation14], 1
    %v2086 = vld [vmem:[%s2085] sm:$0x1]
    %v2088 = vperm.slane %v2086, 0
    %v2106 = vunpack.c.l.b16 %v2069
    %v2107 = vunpack.c.l.b16 %v2070
    %v2108 = vunpack.c.l.b16 %v2071
    %v2109 = vunpack.c.l.b16 %v2072
    %v2110 = vunpack.c.l.b16 %v2073
    %v2111 = vunpack.c.l.b16 %v2074
    %v2112 = vunpack.c.l.b16 %v2075
    %v2113 = vunpack.c.l.b16 %v2076
    %v2114 = vunpack.c.l.b16 %v2077
    %v2115 = vunpack.c.l.b16 %v2078
    %v2116 = vunpack.c.l.b16 %v2079
    %v2117 = vunpack.c.l.b16 %v2080
    %v2118 = vunpack.c.l.b16 %v2081
    %v2119 = vunpack.c.l.b16 %v2082
    %v2120 = vunpack.c.l.b16 %v2083
    %v2121 = vunpack.c.l.b16 %v2084
    %v2122 = vpack.c.b16 %v2107, %v2106
    %v2123 = vpack.c.b16 %v2109, %v2108
    %v2124 = vpack.c.b16 %v2111, %v2110
    %v2125 = vpack.c.b16 %v2113, %v2112
    %v2126 = vpack.c.b16 %v2115, %v2114
    %v2127 = vpack.c.b16 %v2117, %v2116
    %v2128 = vpack.c.b16 %v2119, %v2118
    %v2129 = vpack.c.b16 %v2121, %v2120
    %2138 = vmatpush.bf16.msra.mxu0 %v2129
    %2139 = vmatpush.bf16.msra.mxu0 %v2128
    %2140 = vmatpush.bf16.msra.mxu0 %v2127
    %2141 = vmatpush.bf16.msra.mxu0 %v2126
    %2142 = vmatpush.bf16.msra.mxu0 %v2125
    %2143 = vmatpush.bf16.msra.mxu0 %v2124
    %2144 = vmatpush.bf16.msra.mxu0 %v2123
    %2145 = vmatpush.bf16.msra.mxu0 %v2122
    %2146 = vmatmul.bf16.gmra.mxu0 %v2067
    %v2147 = vpop.f32.mrf.mxu0
    %v2148 = vadd.f32 %v2088, %v2147
    %v2149 = vpop.f32.mrf.mxu0
    %v2150 = vadd.f32 %v2088, %v2149
    %2151 = vdwg.mxu0
    %v2152 = vmax.f32 %v2148, 0.0
    %v2153 = vmax.f32 %v2150, 0.0
    %v2154 = vpack.c.bf16 %v2153, %v2152
    %s2155 = scalar_lea.vmem [#allocation16], 64
    %v2156 = vld [vmem:[%s2155] sm:$0xf]
    %v2157 = vld [vmem:[%s2155 + $0x4] sm:$0xf]
    %v2158 = vld [vmem:[%s2155 + $0x8] sm:$0xf]
    %v2159 = vld [vmem:[%s2155 + $0xc] sm:$0xf]
    %v2160 = vld [vmem:[%s2155 + $0x10] sm:$0xf]
    %v2161 = vld [vmem:[%s2155 + $0x14] sm:$0xf]
    %v2162 = vld [vmem:[%s2155 + $0x18] sm:$0xf]
    %v2163 = vld [vmem:[%s2155 + $0x1c] sm:$0xf]
    %v2164 = vld [vmem:[%s2155 + $0x20] sm:$0xf]
    %v2165 = vld [vmem:[%s2155 + $0x24] sm:$0xf]
    %v2166 = vld [vmem:[%s2155 + $0x28] sm:$0xf]
    %v2167 = vld [vmem:[%s2155 + $0x2c] sm:$0xf]
    %v2168 = vld [vmem:[%s2155 + $0x30] sm:$0xf]
    %v2169 = vld [vmem:[%s2155 + $0x34] sm:$0xf]
    %v2170 = vld [vmem:[%s2155 + $0x38] sm:$0xf]
    %v2171 = vld [vmem:[%s2155 + $0x3c] sm:$0xf]
    %s2172 = scalar_lea.vmem [#allocation17], 1
    %v2173 = vld [vmem:[%s2172] sm:$0x1]
    %v2175 = vperm.slane %v2173, 0
    %v2193 = vunpack.c.l.b16 %v2156
    %v2194 = vunpack.c.l.b16 %v2157
    %v2195 = vunpack.c.l.b16 %v2158
    %v2196 = vunpack.c.l.b16 %v2159
    %v2197 = vunpack.c.l.b16 %v2160
    %v2198 = vunpack.c.l.b16 %v2161
    %v2199 = vunpack.c.l.b16 %v2162
    %v2200 = vunpack.c.l.b16 %v2163
    %v2201 = vunpack.c.l.b16 %v2164
    %v2202 = vunpack.c.l.b16 %v2165
    %v2203 = vunpack.c.l.b16 %v2166
    %v2204 = vunpack.c.l.b16 %v2167
    %v2205 = vunpack.c.l.b16 %v2168
    %v2206 = vunpack.c.l.b16 %v2169
    %v2207 = vunpack.c.l.b16 %v2170
    %v2208 = vunpack.c.l.b16 %v2171
    %v2209 = vpack.c.b16 %v2194, %v2193
    %v2210 = vpack.c.b16 %v2196, %v2195
    %v2211 = vpack.c.b16 %v2198, %v2197
    %v2212 = vpack.c.b16 %v2200, %v2199
    %v2213 = vpack.c.b16 %v2202, %v2201
    %v2214 = vpack.c.b16 %v2204, %v2203
    %v2215 = vpack.c.b16 %v2206, %v2205
    %v2216 = vpack.c.b16 %v2208, %v2207
    %2225 = vmatpush.bf16.msra.mxu0 %v2216
    %2226 = vmatpush.bf16.msra.mxu0 %v2215
    %2227 = vmatpush.bf16.msra.mxu0 %v2214
    %2228 = vmatpush.bf16.msra.mxu0 %v2213
    %2229 = vmatpush.bf16.msra.mxu0 %v2212
    %2230 = vmatpush.bf16.msra.mxu0 %v2211
    %2231 = vmatpush.bf16.msra.mxu0 %v2210
    %2232 = vmatpush.bf16.msra.mxu0 %v2209
    %2233 = vmatmul.bf16.gmra.mxu0 %v2154
    %v2234 = vpop.f32.mrf.mxu0
    %v2235 = vadd.f32 %v2175, %v2234
    %v2236 = vpop.f32.mrf.mxu0
    %v2237 = vadd.f32 %v2175, %v2236
    %2238 = vdwg.mxu0
    %v2239 = vadd.f32 %v2065, %v2235
    %v2240 = vadd.f32 %v2066, %v2237
    %2241 = vadd.xlane.f32.xlu0 %v2239
    %v2242 = vpop.xlane.xlu0 %2241
    %2243 = vadd.xlane.f32.xlu0 %v2240
    %v2244 = vpop.xlane.xlu0 %2243
    %v2245 = vmul.f32 %v2242, 0.03125
    %v2246 = vmul.f32 %v2244, 0.03125
    %v2247 = vmul.f32 %v2239, %v2239
    %v2248 = vmul.f32 %v2240, %v2240
    %2249 = vadd.xlane.f32.xlu0 %v2247
    %v2250 = vpop.xlane.xlu0 %2249
    %2251 = vadd.xlane.f32.xlu0 %v2248
    %v2252 = vpop.xlane.xlu0 %2251
    %v2253 = vmul.f32 %v2250, 0.03125
    %v2254 = vmul.f32 %v2252, 0.03125
    %v2255 = vmul.f32 %v2245, %v2245
    %v2256 = vmul.f32 %v2246, %v2246
    %v2257 = vsub.f32 %v2253, %v2255
    %v2258 = vsub.f32 %v2254, %v2256
    %v2259 = vmax.f32 %v2257, 0.0
    %v2260 = vmax.f32 %v2258, 0.0
    %v2261 = vsub.f32 %v2239, %v2245
    %v2262 = vsub.f32 %v2240, %v2246
    %v2263 = vadd.f32 %v2259, 1e-05
    %v2264 = vadd.f32 %v2260, 1e-05
    %v2265 = vrsqrt.pop %v2263
    %v2266 = vmul.f32 %v2265, %v2263
    %v2267 = vmul.f32 %v2266, %v2265
    %v2268 = vmul.f32 0.5, %v2267
    %v2269 = vsub.f32 1.5, %v2268
    %v2270 = vmul.f32 %v2265, %v2269
    %vm2271 = vweird.f32 %v2263
    %vm2272 = vweird.f32 %v2265
    %vm2273 = vmor %vm2271, %vm2272
    %v2274 = vsel %vm2273, %v2265, %v2270
    %v2275 = vrsqrt.pop %v2264
    %v2276 = vmul.f32 %v2275, %v2264
    %v2277 = vmul.f32 %v2276, %v2275
    %v2278 = vmul.f32 0.5, %v2277
    %v2279 = vsub.f32 1.5, %v2278
    %v2280 = vmul.f32 %v2275, %v2279
    %vm2281 = vweird.f32 %v2264
    %vm2282 = vweird.f32 %v2275
    %vm2283 = vmor %vm2281, %vm2282
    %v2284 = vsel %vm2283, %v2275, %v2280
    %v2285 = vmul.f32 %v2261, %v2274
    %v2286 = vmul.f32 %v2262, %v2284
    %v2287 = vperm.slane %v1247, 2
    %v2288 = vmul.f32 %v2285, %v2287
    %v2289 = vmul.f32 %v2286, %v2287
    %v2290 = vperm.slane %v1247, 3
    %v2291 = vadd.f32 %v2288, %v2290
    %v2292 = vadd.f32 %v2289, %v2290
    %2293 = vst [vmem:[#allocation19] sm:$0xff] %v2291
    %2294 = vst [vmem:[#allocation19 + $0x8] sm:$0xff] %v2292
    // Predicated region
    $region86: #{tpu_custom_call.1} parent=1 // pred_check
      _
    $region87: #{tpu_custom_call.1} parent=1 // pred_check_branch
      %2296 = sbr.rel (0) target = $region89
    $region88: #{tpu_custom_call.1} parent=1 // pred_region
      %2298 = vsyncadd [#allocation4], 0
      %s2299 = sshll.u32 [#allocation19], 4
      %s2300 = int_to_ptr.vmem [resolvable:$true] %s2299
      %s2301 = sshll.u32 %s11, 4
      %s2302 = int_to_ptr.hbm [resolvable:$true] %s2301
      %2307 = dma.vmem_to_hbm [thread:$0]  %s2300, 256, %s2302, [#allocation4], 128, 128, 8
    $region89: #{tpu_custom_call.1} parent=1 // pred_fallthru
      _
    // Predicated region
    $region90: #{tpu_custom_call.1} parent=1 // pred_check
      _
    $region91: #{tpu_custom_call.1} parent=1 // pred_check_branch
      %2309 = sbr.rel (0) target = $region93
    $region92: #{tpu_custom_call.1} parent=1 // pred_region
      %2311 = dma.done [#allocation4], 256
    $region93: #{tpu_custom_call.1} parent=1 // pred_fallthru
      _
    %2312 = vsyncpa [#allocation3], 1
    %2313 = vsyncpa [#allocation6], 1
    %2314 = vsyncpa [#allocation9], 1
    %2315 = vsyncpa [#allocation12], 1
    %2316 = vsyncpa [#allocation15], 1
    %2317 = vsyncpa [#allocation18], 1
    %2318 = vsyncpa [#allocation4], 1

</llo_original>
